<compile_context>
chip_gen: v5e
topology: v5e:2x2
jax: 0.10.0
libtpu: 0.0.40
codegen_flags: <defaults>
</compile_context>

<pallas_src>
import numpy as np
import jax
import jax.numpy as jnp
from jax.experimental import pallas as pl
from jax.experimental.pallas import tpu as pltpu


def _leaky_relu(x):
    # nn.LeakyReLU default negative_slope = 0.01
    return jnp.where(x >= 0, x, 0.01 * x)


def _gru_cell(gi, gh, h):
    """PyTorch nn.GRU cell math; gi = x@Wih^T + bih, gh = h@Whh^T + bhh (gate order r,z,n)."""
    H = h.shape[-1]
    r = jax.nn.sigmoid(gi[:, :H] + gh[:, :H])
    z = jax.nn.sigmoid(gi[:, H:2 * H] + gh[:, H:2 * H])
    n = jnp.tanh(gi[:, 2 * H:3 * H] + r * gh[:, 2 * H:3 * H])
    return (1.0 - z) * n + z * h


def dec2_kernel(emb_ref, pk_ref, eo_ref, h1i_ref, h2i_ref,
                wq_ref, v_ref,
                w1ih_ref, w1hh_ref, b1ih_ref, b1hh_ref,
                w2ih_ref, w2hh_ref, b2ih_ref, b2hh_ref,
                wpre_ref, bpre_ref, wout_ref, bout_ref,
                out_ref, preout_ref, alpha_ref, h1f_ref, h2f_ref):
    f32 = jnp.float32
    Tm1 = out_ref.shape[0]

    # Hoist all parameter / constant loads out of the unrolled time loop.
    pk = pk_ref[...]          # (S, H)
    eo = eo_ref[...]          # (S, C)
    wq = wq_ref[...]          # (H, H)
    v = v_ref[...]            # (1, H)
    w1ih = w1ih_ref[...]; w1hh = w1hh_ref[...]
    b1i = b1ih_ref[...];  b1h = b1hh_ref[...]
    w2ih = w2ih_ref[...]; w2hh = w2hh_ref[...]
    b2i = b2ih_ref[...];  b2h = b2hh_ref[...]
    wpre = wpre_ref[...]; bpre = bpre_ref[...]
    wout = wout_ref[...]; bout = bout_ref[...]

    h1 = h1i_ref[...]         # (1, H), loop-carried
    h2 = h2i_ref[...]         # (1, H), loop-carried

    for t in range(Tm1):      # fully unrolled; Tm1 is a small static trip count
        emb = emb_ref[pl.ds(t, 1), :]                                  # (1, E)

        # ---- additive attention, row form (S on the lane axis) -------------
        q = jnp.dot(h1, wq, preferred_element_type=f32)                # (1, H)
        feat = jnp.tanh(q + pk)                                        # (S, H)
        scores = jnp.dot(v, feat.T, preferred_element_type=f32)        # (1, S)
        m = jnp.max(scores, axis=-1, keepdims=True)
        e = jnp.exp(scores - m)
        denom = jnp.sum(e, axis=-1, keepdims=True)
        alphas = e * pl.reciprocal(denom, approx=True)                 # (1, S)
        context = jnp.dot(alphas, eo, preferred_element_type=f32)      # (1, C)

        # ---- gru (layer 1): fused concat matmul -----------------------------
        x1 = jnp.concatenate([emb, context], axis=-1)                  # (1, E+C)
        gi1 = jnp.dot(x1, w1ih, preferred_element_type=f32) + b1i
        gh1 = jnp.dot(h1, w1hh, preferred_element_type=f32) + b1h
        h1 = _gru_cell(gi1, gh1, h1)
        out1 = _leaky_relu(h1)            # dropout == identity

        # ---- gru2 (layer 2) --------------------------------------------------
        gi2 = jnp.dot(out1, w2ih, preferred_element_type=f32) + b2i
        gh2 = jnp.dot(h2, w2hh, preferred_element_type=f32) + b2h
        h2 = _gru_cell(gi2, gh2, h2)
        out2 = _leaky_relu(h2)

        # ---- pre_output = leaky_relu(Linear(cat([output, context]))) --------
        xp = jnp.concatenate([out2, context], axis=-1)                 # (1, H+C)
        pre = _leaky_relu(jnp.dot(xp, wpre, preferred_element_type=f32) + bpre)

        # ---- outlayer(output) ------------------------------------------------
        out = jnp.dot(out2, wout, preferred_element_type=f32) + bout   # (1, E)

        # Per-step results go into the resident output VMEM blocks; the HBM
        # writeback happens once when the (single) grid step finishes.
        out_ref[pl.ds(t, 1), :] = out
        preout_ref[pl.ds(t, 1), :] = pre
        alpha_ref[pl.ds(t, 1), :] = alphas

    h1f_ref[...] = h1
    h2f_ref[...] = h2


def dec2_forward(emb_seq, proj_keys, enc_out, h1_0, h2_0, params):
    Tm1, _, E = emb_seq.shape
    S, H = proj_keys.shape
    dt = jnp.float32

    emb2d = emb_seq.reshape(Tm1, E)   # lane-dense (T-1, E) slab, resident in VMEM
    inputs = (emb2d, proj_keys, enc_out, h1_0, h2_0) + tuple(params)

    def full(shape):
        nd = len(shape)
        return pl.BlockSpec(shape, lambda i: (0,) * nd)

    in_specs = [full(x.shape) for x in inputs]

    out_shape = (
        jax.ShapeDtypeStruct((Tm1, E), dt),   # outputs
        jax.ShapeDtypeStruct((Tm1, H), dt),   # pre_outputs
        jax.ShapeDtypeStruct((Tm1, S), dt),   # alphas (row form, S on lanes)
        jax.ShapeDtypeStruct((1, H), dt),     # final h (gru)
        jax.ShapeDtypeStruct((1, H), dt),     # final h (gru2)
    )
    out_specs = [full(s.shape) for s in out_shape]

    grid_spec = pltpu.PrefetchScalarGridSpec(
        num_scalar_prefetch=0,
        grid=(1,),                      # single invocation; time loop is in-body
        in_specs=in_specs,
        out_specs=out_specs,
    )
    outs, pres, alps, h1f, h2f = pl.pallas_call(
        dec2_kernel,
        out_shape=out_shape,
        grid_spec=grid_spec,
        compiler_params=pltpu.CompilerParams(
            dimension_semantics=("arbitrary",)),
    )(*inputs)

    # Free layout plumbing back to the PyTorch-equivalent shapes.
    return (outs.reshape(Tm1, 1, E),
            pres.reshape(Tm1, 1, H),
            alps[:, :, None],           # (T-1, S, 1)
            h1f, h2f)


def dec2_reference(emb_seq, proj_keys, enc_out, h1, h2, params):
    (Wq, v, W1_ih, W1_hh, b1_ih, b1_hh, W2_ih, W2_hh,
     b2_ih, b2_hh, W_pre, b_pre, W_out, b_out) = params

    def gru(x, h, Wih, Whh, bih, bhh):
        gi = x @ Wih + bih
        gh = h @ Whh + bhh
        return _gru_cell(gi, gh, h)

    outs, pres, alps = [], [], []
    for t in range(emb_seq.shape[0]):
        emb = emb_seq[t]
        feat = jnp.tanh(h1 @ Wq + proj_keys)
        scores = jnp.sum(feat * v, axis=-1, keepdims=True)
        alphas = jax.nn.softmax(scores, axis=0)
        context = jnp.sum(alphas * enc_out, axis=0, keepdims=True)
        h1 = gru(jnp.concatenate([emb, context], axis=-1), h1, W1_ih, W1_hh, b1_ih, b1_hh)
        out1 = _leaky_relu(h1)
        h2 = gru(out1, h2, W2_ih, W2_hh, b2_ih, b2_hh)
        out2 = _leaky_relu(h2)
        pre = _leaky_relu(jnp.concatenate([out2, context], axis=-1) @ W_pre + b_pre)
        out = out2 @ W_out + b_out
        outs.append(out[None]); pres.append(pre[None]); alps.append(alphas[None])
    return (jnp.concatenate(outs, 0), jnp.concatenate(pres, 0),
            jnp.concatenate(alps, 0), h1, h2)


if __name__ == "__main__":
    H, C, E = 32, 64, 16      # hidden_size, context_size, embed_size
    vocab, S, T = 12, 8, 8    # vocab, source length, target length (T-1 decode steps)
    sc = 0.1

    keys = jax.random.split(jax.random.PRNGKey(0), 20)
    embeds = jax.random.normal(keys[0], (vocab, E), jnp.float32)
    tokens = jax.random.randint(keys[1], (T,), 0, vocab)
    proj_keys = jax.random.normal(keys[2], (S, H), jnp.float32) * sc
    enc_out = jax.random.normal(keys[3], (S, C), jnp.float32) * sc
    h1_0 = jax.random.normal(keys[4], (1, H), jnp.float32) * sc
    h2_0 = jax.random.normal(keys[5], (1, H), jnp.float32) * sc

    Wq = jax.random.normal(keys[6], (H, H), jnp.float32) * sc
    v = jax.random.normal(keys[7], (1, H), jnp.float32) * sc
    W1_ih = jax.random.normal(keys[8], (E + C, 3 * H), jnp.float32) * sc
    W1_hh = jax.random.normal(keys[9], (H, 3 * H), jnp.float32) * sc
    b1_ih = jax.random.normal(keys[10], (1, 3 * H), jnp.float32) * sc
    b1_hh = jax.random.normal(keys[11], (1, 3 * H), jnp.float32) * sc
    W2_ih = jax.random.normal(keys[12], (H, 3 * H), jnp.float32) * sc
    W2_hh = jax.random.normal(keys[13], (H, 3 * H), jnp.float32) * sc
    b2_ih = jax.random.normal(keys[14], (1, 3 * H), jnp.float32) * sc
    b2_hh = jax.random.normal(keys[15], (1, 3 * H), jnp.float32) * sc
    W_pre = jax.random.normal(keys[16], (H + C, H), jnp.float32) * sc
    b_pre = jax.random.normal(keys[17], (1, H), jnp.float32) * sc
    W_out = jax.random.normal(keys[18], (H, E), jnp.float32) * sc
    b_out = jax.random.normal(keys[19], (1, E), jnp.float32) * sc
    params = (Wq, v, W1_ih, W1_hh, b1_ih, b1_hh, W2_ih, W2_hh,
              b2_ih, b2_hh, W_pre, b_pre, W_out, b_out)

    # teacher-forcing (tf=1.0) decoder inputs: gold tokens[:-1], embedded (glue in plain JAX)
    emb_seq = embeds[tokens[:-1]].reshape(T - 1, 1, E)

    outs, pres, alps, h1f, h2f = jax.block_until_ready(
        dec2_forward(emb_seq, proj_keys, enc_out, h1_0, h2_0, params))

    r_outs, r_pres, r_alps, r_h1, r_h2 = dec2_reference(
        emb_seq, proj_keys, enc_out, h1_0, h2_0, params)

    # Slightly loosened tolerance: pl.reciprocal(approx=True) in the softmax
    # denominator is an approximate EUP op (~2^-12 relative).
    np.testing.assert_allclose(np.asarray(outs), np.asarray(r_outs), rtol=2e-3, atol=2e-3)
    np.testing.assert_allclose(np.asarray(pres), np.asarray(r_pres), rtol=2e-3, atol=2e-3)
    np.testing.assert_allclose(np.asarray(alps), np.asarray(r_alps), rtol=2e-3, atol=2e-3)
    np.testing.assert_allclose(np.asarray(h1f), np.asarray(r_h1), rtol=2e-3, atol=2e-3)
    np.testing.assert_allclose(np.asarray(h2f), np.asarray(r_h2), rtol=2e-3, atol=2e-3)
    print("KERNEL_OK")
</pallas_src>

<mosaic_0001>
module attributes {stable_mosaic.version = 11 : i64} {
  func.func @dec2_kernel(%arg0: i32, %arg1: memref<7x16xf32, #tpu.memory_space<vmem>>, %arg2: memref<8x32xf32, #tpu.memory_space<vmem>>, %arg3: memref<8x64xf32, #tpu.memory_space<vmem>>, %arg4: memref<1x32xf32, #tpu.memory_space<vmem>>, %arg5: memref<1x32xf32, #tpu.memory_space<vmem>>, %arg6: memref<32x32xf32, #tpu.memory_space<vmem>>, %arg7: memref<1x32xf32, #tpu.memory_space<vmem>>, %arg8: memref<80x96xf32, #tpu.memory_space<vmem>>, %arg9: memref<32x96xf32, #tpu.memory_space<vmem>>, %arg10: memref<1x96xf32, #tpu.memory_space<vmem>>, %arg11: memref<1x96xf32, #tpu.memory_space<vmem>>, %arg12: memref<32x96xf32, #tpu.memory_space<vmem>>, %arg13: memref<32x96xf32, #tpu.memory_space<vmem>>, %arg14: memref<1x96xf32, #tpu.memory_space<vmem>>, %arg15: memref<1x96xf32, #tpu.memory_space<vmem>>, %arg16: memref<96x32xf32, #tpu.memory_space<vmem>>, %arg17: memref<1x32xf32, #tpu.memory_space<vmem>>, %arg18: memref<32x16xf32, #tpu.memory_space<vmem>>, %arg19: memref<1x16xf32, #tpu.memory_space<vmem>>, %arg20: memref<7x16xf32, #tpu.memory_space<vmem>>, %arg21: memref<7x32xf32, #tpu.memory_space<vmem>>, %arg22: memref<7x8xf32, #tpu.memory_space<vmem>>, %arg23: memref<1x32xf32, #tpu.memory_space<vmem>>, %arg24: memref<1x32xf32, #tpu.memory_space<vmem>>) attributes {dimension_semantics = [#tpu.dimension_semantics<arbitrary>], iteration_bounds = array<i64: 1>, scalar_prefetch = 0 : i64, scratch_operands = 0 : i64, tpu.core_type = #tpu.core_type<tc>, window_params = [{pipeline_mode = #tpu.pipeline_mode<synchronous>, transform_indices = @transform_0, window_bounds = array<i64: 7, 16>}, {pipeline_mode = #tpu.pipeline_mode<synchronous>, transform_indices = @transform_1, window_bounds = array<i64: 8, 32>}, {pipeline_mode = #tpu.pipeline_mode<synchronous>, transform_indices = @transform_2, window_bounds = array<i64: 8, 64>}, {pipeline_mode = #tpu.pipeline_mode<synchronous>, transform_indices = @transform_3, window_bounds = array<i64: 1, 32>}, {pipeline_mode = #tpu.pipeline_mode<synchronous>, transform_indices = @transform_4, window_bounds = array<i64: 1, 32>}, {pipeline_mode = #tpu.pipeline_mode<synchronous>, transform_indices = @transform_5, window_bounds = array<i64: 32, 32>}, {pipeline_mode = #tpu.pipeline_mode<synchronous>, transform_indices = @transform_6, window_bounds = array<i64: 1, 32>}, {pipeline_mode = #tpu.pipeline_mode<synchronous>, transform_indices = @transform_7, window_bounds = array<i64: 80, 96>}, {pipeline_mode = #tpu.pipeline_mode<synchronous>, transform_indices = @transform_8, window_bounds = array<i64: 32, 96>}, {pipeline_mode = #tpu.pipeline_mode<synchronous>, transform_indices = @transform_9, window_bounds = array<i64: 1, 96>}, {pipeline_mode = #tpu.pipeline_mode<synchronous>, transform_indices = @transform_10, window_bounds = array<i64: 1, 96>}, {pipeline_mode = #tpu.pipeline_mode<synchronous>, transform_indices = @transform_11, window_bounds = array<i64: 32, 96>}, {pipeline_mode = #tpu.pipeline_mode<synchronous>, transform_indices = @transform_12, window_bounds = array<i64: 32, 96>}, {pipeline_mode = #tpu.pipeline_mode<synchronous>, transform_indices = @transform_13, window_bounds = array<i64: 1, 96>}, {pipeline_mode = #tpu.pipeline_mode<synchronous>, transform_indices = @transform_14, window_bounds = array<i64: 1, 96>}, {pipeline_mode = #tpu.pipeline_mode<synchronous>, transform_indices = @transform_15, window_bounds = array<i64: 96, 32>}, {pipeline_mode = #tpu.pipeline_mode<synchronous>, transform_indices = @transform_16, window_bounds = array<i64: 1, 32>}, {pipeline_mode = #tpu.pipeline_mode<synchronous>, transform_indices = @transform_17, window_bounds = array<i64: 32, 16>}, {pipeline_mode = #tpu.pipeline_mode<synchronous>, transform_indices = @transform_18, window_bounds = array<i64: 1, 16>}, {pipeline_mode = #tpu.pipeline_mode<synchronous>, transform_indices = @transform_19, window_bounds = array<i64: 7, 16>}, {pipeline_mode = #tpu.pipeline_mode<synchronous>, transform_indices = @transform_20, window_bounds = array<i64: 7, 32>}, {pipeline_mode = #tpu.pipeline_mode<synchronous>, transform_indices = @transform_21, window_bounds = array<i64: 7, 8>}, {pipeline_mode = #tpu.pipeline_mode<synchronous>, transform_indices = @transform_22, window_bounds = array<i64: 1, 32>}, {pipeline_mode = #tpu.pipeline_mode<synchronous>, transform_indices = @transform_23, window_bounds = array<i64: 1, 32>}]} {
    %c0 = arith.constant 0 : index
    %c0_0 = arith.constant 0 : index
    %0 = vector.load %arg2[%c0, %c0_0] : memref<8x32xf32, #tpu.memory_space<vmem>>, vector<8x32xf32>
    %c0_1 = arith.constant 0 : index
    %c0_2 = arith.constant 0 : index
    %1 = vector.load %arg3[%c0_1, %c0_2] : memref<8x64xf32, #tpu.memory_space<vmem>>, vector<8x64xf32>
    %c0_3 = arith.constant 0 : index
    %c0_4 = arith.constant 0 : index
    %2 = vector.load %arg6[%c0_3, %c0_4] : memref<32x32xf32, #tpu.memory_space<vmem>>, vector<32x32xf32>
    %c0_5 = arith.constant 0 : index
    %c0_6 = arith.constant 0 : index
    %3 = vector.load %arg7[%c0_5, %c0_6] : memref<1x32xf32, #tpu.memory_space<vmem>>, vector<1x32xf32>
    %c0_7 = arith.constant 0 : index
    %c0_8 = arith.constant 0 : index
    %4 = vector.load %arg8[%c0_7, %c0_8] : memref<80x96xf32, #tpu.memory_space<vmem>>, vector<80x96xf32>
    %c0_9 = arith.constant 0 : index
    %c0_10 = arith.constant 0 : index
    %5 = vector.load %arg9[%c0_9, %c0_10] : memref<32x96xf32, #tpu.memory_space<vmem>>, vector<32x96xf32>
    %c0_11 = arith.constant 0 : index
    %c0_12 = arith.constant 0 : index
    %6 = vector.load %arg10[%c0_11, %c0_12] : memref<1x96xf32, #tpu.memory_space<vmem>>, vector<1x96xf32>
    %c0_13 = arith.constant 0 : index
    %c0_14 = arith.constant 0 : index
    %7 = vector.load %arg11[%c0_13, %c0_14] : memref<1x96xf32, #tpu.memory_space<vmem>>, vector<1x96xf32>
    %c0_15 = arith.constant 0 : index
    %c0_16 = arith.constant 0 : index
    %8 = vector.load %arg12[%c0_15, %c0_16] : memref<32x96xf32, #tpu.memory_space<vmem>>, vector<32x96xf32>
    %c0_17 = arith.constant 0 : index
    %c0_18 = arith.constant 0 : index
    %9 = vector.load %arg13[%c0_17, %c0_18] : memref<32x96xf32, #tpu.memory_space<vmem>>, vector<32x96xf32>
    %c0_19 = arith.constant 0 : index
    %c0_20 = arith.constant 0 : index
    %10 = vector.load %arg14[%c0_19, %c0_20] : memref<1x96xf32, #tpu.memory_space<vmem>>, vector<1x96xf32>
    %c0_21 = arith.constant 0 : index
    %c0_22 = arith.constant 0 : index
    %11 = vector.load %arg15[%c0_21, %c0_22] : memref<1x96xf32, #tpu.memory_space<vmem>>, vector<1x96xf32>
    %c0_23 = arith.constant 0 : index
    %c0_24 = arith.constant 0 : index
    %12 = vector.load %arg16[%c0_23, %c0_24] : memref<96x32xf32, #tpu.memory_space<vmem>>, vector<96x32xf32>
    %c0_25 = arith.constant 0 : index
    %c0_26 = arith.constant 0 : index
    %13 = vector.load %arg17[%c0_25, %c0_26] : memref<1x32xf32, #tpu.memory_space<vmem>>, vector<1x32xf32>
    %c0_27 = arith.constant 0 : index
    %c0_28 = arith.constant 0 : index
    %14 = vector.load %arg18[%c0_27, %c0_28] : memref<32x16xf32, #tpu.memory_space<vmem>>, vector<32x16xf32>
    %c0_29 = arith.constant 0 : index
    %c0_30 = arith.constant 0 : index
    %15 = vector.load %arg19[%c0_29, %c0_30] : memref<1x16xf32, #tpu.memory_space<vmem>>, vector<1x16xf32>
    %c0_31 = arith.constant 0 : index
    %c0_32 = arith.constant 0 : index
    %16 = vector.load %arg4[%c0_31, %c0_32] : memref<1x32xf32, #tpu.memory_space<vmem>>, vector<1x32xf32>
    %c0_33 = arith.constant 0 : index
    %c0_34 = arith.constant 0 : index
    %17 = vector.load %arg5[%c0_33, %c0_34] : memref<1x32xf32, #tpu.memory_space<vmem>>, vector<1x32xf32>
    %c0_35 = arith.constant 0 : index
    %c0_36 = arith.constant 0 : index
    %18 = vector.load %arg1[%c0_35, %c0_36] : memref<7x16xf32, #tpu.memory_space<vmem>>, vector<1x16xf32>
    %cst = arith.constant dense<0.000000e+00> : vector<1x32xf32>
    %19 = tpu.matmul %16, %2, %cst {dimension_numbers = #tpu.dot_dimension_numbers<[1], [0], [0], [1], [0, 0, 1, 1], [], []>} : vector<1x32xf32>, vector<32x32xf32>, vector<1x32xf32> -> vector<1x32xf32>
    %20 = vector.broadcast %19 : vector<1x32xf32> to vector<8x32xf32>
    %21 = arith.addf %20, %0 : vector<8x32xf32>
    %22 = math.tanh %21 : vector<8x32xf32>
    %23 = tpu.transpose %22, [1, 0] : vector<8x32xf32> -> vector<32x8xf32>
    %cst_37 = arith.constant dense<0.000000e+00> : vector<1x8xf32>
    %24 = tpu.matmul %3, %23, %cst_37 {dimension_numbers = #tpu.dot_dimension_numbers<[1], [0], [0], [1], [0, 0, 1, 1], [], []>} : vector<1x32xf32>, vector<32x8xf32>, vector<1x8xf32> -> vector<1x8xf32>
    %cst_38 = arith.constant dense<0xFF800000> : vector<1xf32>
    %25 = vector.multi_reduction <maximumf>, %24, %cst_38 [1] : vector<1x8xf32> to vector<1xf32>
    %26 = vector.shape_cast %25 : vector<1xf32> to vector<1x1xf32>
    %27 = vector.broadcast %26 : vector<1x1xf32> to vector<1x8xf32>
    %28 = arith.subf %24, %27 : vector<1x8xf32>
    %29 = math.exp %28 : vector<1x8xf32>
    %cst_39 = arith.constant dense<0.000000e+00> : vector<1xf32>
    %30 = vector.multi_reduction <add>, %29, %cst_39 [1] : vector<1x8xf32> to vector<1xf32>
    %31 = vector.shape_cast %30 : vector<1xf32> to vector<1x1xf32>
    %32 = tpu.reciprocal %31 {approx = true} : vector<1x1xf32> -> vector<1x1xf32>
    %33 = vector.broadcast %32 : vector<1x1xf32> to vector<1x8xf32>
    %34 = arith.mulf %29, %33 : vector<1x8xf32>
    %cst_40 = arith.constant dense<0.000000e+00> : vector<1x64xf32>
    %35 = tpu.matmul %34, %1, %cst_40 {dimension_numbers = #tpu.dot_dimension_numbers<[1], [0], [0], [1], [0, 0, 1, 1], [], []>} : vector<1x8xf32>, vector<8x64xf32>, vector<1x64xf32> -> vector<1x64xf32>
    %36 = tpu.concatenate %18, %35 in 1 : vector<1x16xf32>, vector<1x64xf32> -> vector<1x80xf32>
    %cst_41 = arith.constant dense<0.000000e+00> : vector<1x96xf32>
    %37 = tpu.matmul %36, %4, %cst_41 {dimension_numbers = #tpu.dot_dimension_numbers<[1], [0], [0], [1], [0, 0, 1, 1], [], []>} : vector<1x80xf32>, vector<80x96xf32>, vector<1x96xf32> -> vector<1x96xf32>
    %38 = arith.addf %37, %6 : vector<1x96xf32>
    %cst_42 = arith.constant dense<0.000000e+00> : vector<1x96xf32>
    %39 = tpu.matmul %16, %5, %cst_42 {dimension_numbers = #tpu.dot_dimension_numbers<[1], [0], [0], [1], [0, 0, 1, 1], [], []>} : vector<1x32xf32>, vector<32x96xf32>, vector<1x96xf32> -> vector<1x96xf32>
    %40 = arith.addf %39, %7 : vector<1x96xf32>
    %41 = vector.extract_strided_slice %38 {offsets = [0, 0], sizes = [1, 32], strides = [1, 1]} : vector<1x96xf32> to vector<1x32xf32>
    %42 = vector.extract_strided_slice %40 {offsets = [0, 0], sizes = [1, 32], strides = [1, 1]} : vector<1x96xf32> to vector<1x32xf32>
    %43 = arith.addf %41, %42 : vector<1x32xf32>
    %44 = arith.negf %43 : vector<1x32xf32>
    %45 = math.exp %44 : vector<1x32xf32>
    %cst_43 = arith.constant 1.000000e+00 : f32
    %46 = vector.broadcast %cst_43 : f32 to vector<1x32xf32>
    %47 = arith.addf %46, %45 : vector<1x32xf32>
    %48 = arith.divf %46, %47 : vector<1x32xf32>
    %49 = vector.extract_strided_slice %38 {offsets = [0, 32], sizes = [1, 32], strides = [1, 1]} : vector<1x96xf32> to vector<1x32xf32>
    %50 = vector.extract_strided_slice %40 {offsets = [0, 32], sizes = [1, 32], strides = [1, 1]} : vector<1x96xf32> to vector<1x32xf32>
    %51 = arith.addf %49, %50 : vector<1x32xf32>
    %52 = arith.negf %51 : vector<1x32xf32>
    %53 = math.exp %52 : vector<1x32xf32>
    %cst_44 = arith.constant 1.000000e+00 : f32
    %54 = vector.broadcast %cst_44 : f32 to vector<1x32xf32>
    %55 = arith.addf %54, %53 : vector<1x32xf32>
    %56 = arith.divf %54, %55 : vector<1x32xf32>
    %57 = vector.extract_strided_slice %38 {offsets = [0, 64], sizes = [1, 32], strides = [1, 1]} : vector<1x96xf32> to vector<1x32xf32>
    %58 = vector.extract_strided_slice %40 {offsets = [0, 64], sizes = [1, 32], strides = [1, 1]} : vector<1x96xf32> to vector<1x32xf32>
    %59 = arith.mulf %48, %58 : vector<1x32xf32>
    %60 = arith.addf %57, %59 : vector<1x32xf32>
    %61 = math.tanh %60 : vector<1x32xf32>
    %cst_45 = arith.constant 1.000000e+00 : f32
    %62 = vector.broadcast %cst_45 : f32 to vector<1x32xf32>
    %63 = arith.subf %62, %56 : vector<1x32xf32>
    %64 = arith.mulf %63, %61 : vector<1x32xf32>
    %65 = arith.mulf %56, %16 : vector<1x32xf32>
    %66 = arith.addf %64, %65 : vector<1x32xf32>
    %cst_46 = arith.constant 0.000000e+00 : f32
    %67 = vector.broadcast %cst_46 : f32 to vector<1x32xf32>
    %68 = arith.cmpf oge, %66, %67 : vector<1x32xf32>
    %cst_47 = arith.constant 0.00999999977 : f32
    %69 = vector.broadcast %cst_47 : f32 to vector<1x32xf32>
    %70 = arith.mulf %69, %66 : vector<1x32xf32>
    %71 = arith.select %68, %66, %70 : vector<1x32xi1>, vector<1x32xf32>
    %cst_48 = arith.constant dense<0.000000e+00> : vector<1x96xf32>
    %72 = tpu.matmul %71, %8, %cst_48 {dimension_numbers = #tpu.dot_dimension_numbers<[1], [0], [0], [1], [0, 0, 1, 1], [], []>} : vector<1x32xf32>, vector<32x96xf32>, vector<1x96xf32> -> vector<1x96xf32>
    %73 = arith.addf %72, %10 : vector<1x96xf32>
    %cst_49 = arith.constant dense<0.000000e+00> : vector<1x96xf32>
    %74 = tpu.matmul %17, %9, %cst_49 {dimension_numbers = #tpu.dot_dimension_numbers<[1], [0], [0], [1], [0, 0, 1, 1], [], []>} : vector<1x32xf32>, vector<32x96xf32>, vector<1x96xf32> -> vector<1x96xf32>
    %75 = arith.addf %74, %11 : vector<1x96xf32>
    %76 = vector.extract_strided_slice %73 {offsets = [0, 0], sizes = [1, 32], strides = [1, 1]} : vector<1x96xf32> to vector<1x32xf32>
    %77 = vector.extract_strided_slice %75 {offsets = [0, 0], sizes = [1, 32], strides = [1, 1]} : vector<1x96xf32> to vector<1x32xf32>
    %78 = arith.addf %76, %77 : vector<1x32xf32>
    %79 = arith.negf %78 : vector<1x32xf32>
    %80 = math.exp %79 : vector<1x32xf32>
    %cst_50 = arith.constant 1.000000e+00 : f32
    %81 = vector.broadcast %cst_50 : f32 to vector<1x32xf32>
    %82 = arith.addf %81, %80 : vector<1x32xf32>
    %83 = arith.divf %81, %82 : vector<1x32xf32>
    %84 = vector.extract_strided_slice %73 {offsets = [0, 32], sizes = [1, 32], strides = [1, 1]} : vector<1x96xf32> to vector<1x32xf32>
    %85 = vector.extract_strided_slice %75 {offsets = [0, 32], sizes = [1, 32], strides = [1, 1]} : vector<1x96xf32> to vector<1x32xf32>
    %86 = arith.addf %84, %85 : vector<1x32xf32>
    %87 = arith.negf %86 : vector<1x32xf32>
    %88 = math.exp %87 : vector<1x32xf32>
    %cst_51 = arith.constant 1.000000e+00 : f32
    %89 = vector.broadcast %cst_51 : f32 to vector<1x32xf32>
    %90 = arith.addf %89, %88 : vector<1x32xf32>
    %91 = arith.divf %89, %90 : vector<1x32xf32>
    %92 = vector.extract_strided_slice %73 {offsets = [0, 64], sizes = [1, 32], strides = [1, 1]} : vector<1x96xf32> to vector<1x32xf32>
    %93 = vector.extract_strided_slice %75 {offsets = [0, 64], sizes = [1, 32], strides = [1, 1]} : vector<1x96xf32> to vector<1x32xf32>
    %94 = arith.mulf %83, %93 : vector<1x32xf32>
    %95 = arith.addf %92, %94 : vector<1x32xf32>
    %96 = math.tanh %95 : vector<1x32xf32>
    %cst_52 = arith.constant 1.000000e+00 : f32
    %97 = vector.broadcast %cst_52 : f32 to vector<1x32xf32>
    %98 = arith.subf %97, %91 : vector<1x32xf32>
    %99 = arith.mulf %98, %96 : vector<1x32xf32>
    %100 = arith.mulf %91, %17 : vector<1x32xf32>
    %101 = arith.addf %99, %100 : vector<1x32xf32>
    %cst_53 = arith.constant 0.000000e+00 : f32
    %102 = vector.broadcast %cst_53 : f32 to vector<1x32xf32>
    %103 = arith.cmpf oge, %101, %102 : vector<1x32xf32>
    %cst_54 = arith.constant 0.00999999977 : f32
    %104 = vector.broadcast %cst_54 : f32 to vector<1x32xf32>
    %105 = arith.mulf %104, %101 : vector<1x32xf32>
    %106 = arith.select %103, %101, %105 : vector<1x32xi1>, vector<1x32xf32>
    %107 = tpu.concatenate %106, %35 in 1 : vector<1x32xf32>, vector<1x64xf32> -> vector<1x96xf32>
    %cst_55 = arith.constant dense<0.000000e+00> : vector<1x32xf32>
    %108 = tpu.matmul %107, %12, %cst_55 {dimension_numbers = #tpu.dot_dimension_numbers<[1], [0], [0], [1], [0, 0, 1, 1], [], []>} : vector<1x96xf32>, vector<96x32xf32>, vector<1x32xf32> -> vector<1x32xf32>
    %109 = arith.addf %108, %13 : vector<1x32xf32>
    %cst_56 = arith.constant 0.000000e+00 : f32
    %110 = vector.broadcast %cst_56 : f32 to vector<1x32xf32>
    %111 = arith.cmpf oge, %109, %110 : vector<1x32xf32>
    %cst_57 = arith.constant 0.00999999977 : f32
    %112 = vector.broadcast %cst_57 : f32 to vector<1x32xf32>
    %113 = arith.mulf %112, %109 : vector<1x32xf32>
    %114 = arith.select %111, %109, %113 : vector<1x32xi1>, vector<1x32xf32>
    %cst_58 = arith.constant dense<0.000000e+00> : vector<1x16xf32>
    %115 = tpu.matmul %106, %14, %cst_58 {dimension_numbers = #tpu.dot_dimension_numbers<[1], [0], [0], [1], [0, 0, 1, 1], [], []>} : vector<1x32xf32>, vector<32x16xf32>, vector<1x16xf32> -> vector<1x16xf32>
    %116 = arith.addf %115, %15 : vector<1x16xf32>
    %c0_59 = arith.constant 0 : index
    %c0_60 = arith.constant 0 : index
    %117 = vector.load %arg20[%c0_59, %c0_60] : memref<7x16xf32, #tpu.memory_space<vmem>>, vector<1x16xf32>
    tpu.vector_store %arg20[%c0_59, %c0_60], %116 {strides = array<i32>} : memref<7x16xf32, #tpu.memory_space<vmem>>, vector<1x16xf32>,
    %c0_61 = arith.constant 0 : index
    %c0_62 = arith.constant 0 : index
    %118 = vector.load %arg21[%c0_61, %c0_62] : memref<7x32xf32, #tpu.memory_space<vmem>>, vector<1x32xf32>
    tpu.vector_store %arg21[%c0_61, %c0_62], %114 {strides = array<i32>} : memref<7x32xf32, #tpu.memory_space<vmem>>, vector<1x32xf32>,
    %c0_63 = arith.constant 0 : index
    %c0_64 = arith.constant 0 : index
    %119 = vector.load %arg22[%c0_63, %c0_64] : memref<7x8xf32, #tpu.memory_space<vmem>>, vector<1x8xf32>
    tpu.vector_store %arg22[%c0_63, %c0_64], %34 {strides = array<i32>} : memref<7x8xf32, #tpu.memory_space<vmem>>, vector<1x8xf32>,
    %c1 = arith.constant 1 : index
    %c0_65 = arith.constant 0 : index
    %120 = vector.load %arg1[%c1, %c0_65] : memref<7x16xf32, #tpu.memory_space<vmem>>, vector<1x16xf32>
    %cst_66 = arith.constant dense<0.000000e+00> : vector<1x32xf32>
    %121 = tpu.matmul %66, %2, %cst_66 {dimension_numbers = #tpu.dot_dimension_numbers<[1], [0], [0], [1], [0, 0, 1, 1], [], []>} : vector<1x32xf32>, vector<32x32xf32>, vector<1x32xf32> -> vector<1x32xf32>
    %122 = vector.broadcast %121 : vector<1x32xf32> to vector<8x32xf32>
    %123 = arith.addf %122, %0 : vector<8x32xf32>
    %124 = math.tanh %123 : vector<8x32xf32>
    %125 = tpu.transpose %124, [1, 0] : vector<8x32xf32> -> vector<32x8xf32>
    %cst_67 = arith.constant dense<0.000000e+00> : vector<1x8xf32>
    %126 = tpu.matmul %3, %125, %cst_67 {dimension_numbers = #tpu.dot_dimension_numbers<[1], [0], [0], [1], [0, 0, 1, 1], [], []>} : vector<1x32xf32>, vector<32x8xf32>, vector<1x8xf32> -> vector<1x8xf32>
    %cst_68 = arith.constant dense<0xFF800000> : vector<1xf32>
    %127 = vector.multi_reduction <maximumf>, %126, %cst_68 [1] : vector<1x8xf32> to vector<1xf32>
    %128 = vector.shape_cast %127 : vector<1xf32> to vector<1x1xf32>
    %129 = vector.broadcast %128 : vector<1x1xf32> to vector<1x8xf32>
    %130 = arith.subf %126, %129 : vector<1x8xf32>
    %131 = math.exp %130 : vector<1x8xf32>
    %cst_69 = arith.constant dense<0.000000e+00> : vector<1xf32>
    %132 = vector.multi_reduction <add>, %131, %cst_69 [1] : vector<1x8xf32> to vector<1xf32>
    %133 = vector.shape_cast %132 : vector<1xf32> to vector<1x1xf32>
    %134 = tpu.reciprocal %133 {approx = true} : vector<1x1xf32> -> vector<1x1xf32>
    %135 = vector.broadcast %134 : vector<1x1xf32> to vector<1x8xf32>
    %136 = arith.mulf %131, %135 : vector<1x8xf32>
    %cst_70 = arith.constant dense<0.000000e+00> : vector<1x64xf32>
    %137 = tpu.matmul %136, %1, %cst_70 {dimension_numbers = #tpu.dot_dimension_numbers<[1], [0], [0], [1], [0, 0, 1, 1], [], []>} : vector<1x8xf32>, vector<8x64xf32>, vector<1x64xf32> -> vector<1x64xf32>
    %138 = tpu.concatenate %120, %137 in 1 : vector<1x16xf32>, vector<1x64xf32> -> vector<1x80xf32>
    %cst_71 = arith.constant dense<0.000000e+00> : vector<1x96xf32>
    %139 = tpu.matmul %138, %4, %cst_71 {dimension_numbers = #tpu.dot_dimension_numbers<[1], [0], [0], [1], [0, 0, 1, 1], [], []>} : vector<1x80xf32>, vector<80x96xf32>, vector<1x96xf32> -> vector<1x96xf32>
    %140 = arith.addf %139, %6 : vector<1x96xf32>
    %cst_72 = arith.constant dense<0.000000e+00> : vector<1x96xf32>
    %141 = tpu.matmul %66, %5, %cst_72 {dimension_numbers = #tpu.dot_dimension_numbers<[1], [0], [0], [1], [0, 0, 1, 1], [], []>} : vector<1x32xf32>, vector<32x96xf32>, vector<1x96xf32> -> vector<1x96xf32>
    %142 = arith.addf %141, %7 : vector<1x96xf32>
    %143 = vector.extract_strided_slice %140 {offsets = [0, 0], sizes = [1, 32], strides = [1, 1]} : vector<1x96xf32> to vector<1x32xf32>
    %144 = vector.extract_strided_slice %142 {offsets = [0, 0], sizes = [1, 32], strides = [1, 1]} : vector<1x96xf32> to vector<1x32xf32>
    %145 = arith.addf %143, %144 : vector<1x32xf32>
    %146 = arith.negf %145 : vector<1x32xf32>
    %147 = math.exp %146 : vector<1x32xf32>
    %cst_73 = arith.constant 1.000000e+00 : f32
    %148 = vector.broadcast %cst_73 : f32 to vector<1x32xf32>
    %149 = arith.addf %148, %147 : vector<1x32xf32>
    %150 = arith.divf %148, %149 : vector<1x32xf32>
    %151 = vector.extract_strided_slice %140 {offsets = [0, 32], sizes = [1, 32], strides = [1, 1]} : vector<1x96xf32> to vector<1x32xf32>
    %152 = vector.extract_strided_slice %142 {offsets = [0, 32], sizes = [1, 32], strides = [1, 1]} : vector<1x96xf32> to vector<1x32xf32>
    %153 = arith.addf %151, %152 : vector<1x32xf32>
    %154 = arith.negf %153 : vector<1x32xf32>
    %155 = math.exp %154 : vector<1x32xf32>
    %cst_74 = arith.constant 1.000000e+00 : f32
    %156 = vector.broadcast %cst_74 : f32 to vector<1x32xf32>
    %157 = arith.addf %156, %155 : vector<1x32xf32>
    %158 = arith.divf %156, %157 : vector<1x32xf32>
    %159 = vector.extract_strided_slice %140 {offsets = [0, 64], sizes = [1, 32], strides = [1, 1]} : vector<1x96xf32> to vector<1x32xf32>
    %160 = vector.extract_strided_slice %142 {offsets = [0, 64], sizes = [1, 32], strides = [1, 1]} : vector<1x96xf32> to vector<1x32xf32>
    %161 = arith.mulf %150, %160 : vector<1x32xf32>
    %162 = arith.addf %159, %161 : vector<1x32xf32>
    %163 = math.tanh %162 : vector<1x32xf32>
    %cst_75 = arith.constant 1.000000e+00 : f32
    %164 = vector.broadcast %cst_75 : f32 to vector<1x32xf32>
    %165 = arith.subf %164, %158 : vector<1x32xf32>
    %166 = arith.mulf %165, %163 : vector<1x32xf32>
    %167 = arith.mulf %158, %66 : vector<1x32xf32>
    %168 = arith.addf %166, %167 : vector<1x32xf32>
    %cst_76 = arith.constant 0.000000e+00 : f32
    %169 = vector.broadcast %cst_76 : f32 to vector<1x32xf32>
    %170 = arith.cmpf oge, %168, %169 : vector<1x32xf32>
    %cst_77 = arith.constant 0.00999999977 : f32
    %171 = vector.broadcast %cst_77 : f32 to vector<1x32xf32>
    %172 = arith.mulf %171, %168 : vector<1x32xf32>
    %173 = arith.select %170, %168, %172 : vector<1x32xi1>, vector<1x32xf32>
    %cst_78 = arith.constant dense<0.000000e+00> : vector<1x96xf32>
    %174 = tpu.matmul %173, %8, %cst_78 {dimension_numbers = #tpu.dot_dimension_numbers<[1], [0], [0], [1], [0, 0, 1, 1], [], []>} : vector<1x32xf32>, vector<32x96xf32>, vector<1x96xf32> -> vector<1x96xf32>
    %175 = arith.addf %174, %10 : vector<1x96xf32>
    %cst_79 = arith.constant dense<0.000000e+00> : vector<1x96xf32>
    %176 = tpu.matmul %101, %9, %cst_79 {dimension_numbers = #tpu.dot_dimension_numbers<[1], [0], [0], [1], [0, 0, 1, 1], [], []>} : vector<1x32xf32>, vector<32x96xf32>, vector<1x96xf32> -> vector<1x96xf32>
    %177 = arith.addf %176, %11 : vector<1x96xf32>
    %178 = vector.extract_strided_slice %175 {offsets = [0, 0], sizes = [1, 32], strides = [1, 1]} : vector<1x96xf32> to vector<1x32xf32>
    %179 = vector.extract_strided_slice %177 {offsets = [0, 0], sizes = [1, 32], strides = [1, 1]} : vector<1x96xf32> to vector<1x32xf32>
    %180 = arith.addf %178, %179 : vector<1x32xf32>
    %181 = arith.negf %180 : vector<1x32xf32>
    %182 = math.exp %181 : vector<1x32xf32>
    %cst_80 = arith.constant 1.000000e+00 : f32
    %183 = vector.broadcast %cst_80 : f32 to vector<1x32xf32>
    %184 = arith.addf %183, %182 : vector<1x32xf32>
    %185 = arith.divf %183, %184 : vector<1x32xf32>
    %186 = vector.extract_strided_slice %175 {offsets = [0, 32], sizes = [1, 32], strides = [1, 1]} : vector<1x96xf32> to vector<1x32xf32>
    %187 = vector.extract_strided_slice %177 {offsets = [0, 32], sizes = [1, 32], strides = [1, 1]} : vector<1x96xf32> to vector<1x32xf32>
    %188 = arith.addf %186, %187 : vector<1x32xf32>
    %189 = arith.negf %188 : vector<1x32xf32>
    %190 = math.exp %189 : vector<1x32xf32>
    %cst_81 = arith.constant 1.000000e+00 : f32
    %191 = vector.broadcast %cst_81 : f32 to vector<1x32xf32>
    %192 = arith.addf %191, %190 : vector<1x32xf32>
    %193 = arith.divf %191, %192 : vector<1x32xf32>
    %194 = vector.extract_strided_slice %175 {offsets = [0, 64], sizes = [1, 32], strides = [1, 1]} : vector<1x96xf32> to vector<1x32xf32>
    %195 = vector.extract_strided_slice %177 {offsets = [0, 64], sizes = [1, 32], strides = [1, 1]} : vector<1x96xf32> to vector<1x32xf32>
    %196 = arith.mulf %185, %195 : vector<1x32xf32>
    %197 = arith.addf %194, %196 : vector<1x32xf32>
    %198 = math.tanh %197 : vector<1x32xf32>
    %cst_82 = arith.constant 1.000000e+00 : f32
    %199 = vector.broadcast %cst_82 : f32 to vector<1x32xf32>
    %200 = arith.subf %199, %193 : vector<1x32xf32>
    %201 = arith.mulf %200, %198 : vector<1x32xf32>
    %202 = arith.mulf %193, %101 : vector<1x32xf32>
    %203 = arith.addf %201, %202 : vector<1x32xf32>
    %cst_83 = arith.constant 0.000000e+00 : f32
    %204 = vector.broadcast %cst_83 : f32 to vector<1x32xf32>
    %205 = arith.cmpf oge, %203, %204 : vector<1x32xf32>
    %cst_84 = arith.constant 0.00999999977 : f32
    %206 = vector.broadcast %cst_84 : f32 to vector<1x32xf32>
    %207 = arith.mulf %206, %203 : vector<1x32xf32>
    %208 = arith.select %205, %203, %207 : vector<1x32xi1>, vector<1x32xf32>
    %209 = tpu.concatenate %208, %137 in 1 : vector<1x32xf32>, vector<1x64xf32> -> vector<1x96xf32>
    %cst_85 = arith.constant dense<0.000000e+00> : vector<1x32xf32>
    %210 = tpu.matmul %209, %12, %cst_85 {dimension_numbers = #tpu.dot_dimension_numbers<[1], [0], [0], [1], [0, 0, 1, 1], [], []>} : vector<1x96xf32>, vector<96x32xf32>, vector<1x32xf32> -> vector<1x32xf32>
    %211 = arith.addf %210, %13 : vector<1x32xf32>
    %cst_86 = arith.constant 0.000000e+00 : f32
    %212 = vector.broadcast %cst_86 : f32 to vector<1x32xf32>
    %213 = arith.cmpf oge, %211, %212 : vector<1x32xf32>
    %cst_87 = arith.constant 0.00999999977 : f32
    %214 = vector.broadcast %cst_87 : f32 to vector<1x32xf32>
    %215 = arith.mulf %214, %211 : vector<1x32xf32>
    %216 = arith.select %213, %211, %215 : vector<1x32xi1>, vector<1x32xf32>
    %cst_88 = arith.constant dense<0.000000e+00> : vector<1x16xf32>
    %217 = tpu.matmul %208, %14, %cst_88 {dimension_numbers = #tpu.dot_dimension_numbers<[1], [0], [0], [1], [0, 0, 1, 1], [], []>} : vector<1x32xf32>, vector<32x16xf32>, vector<1x16xf32> -> vector<1x16xf32>
    %218 = arith.addf %217, %15 : vector<1x16xf32>
    %c1_89 = arith.constant 1 : index
    %c0_90 = arith.constant 0 : index
    %219 = vector.load %arg20[%c1_89, %c0_90] : memref<7x16xf32, #tpu.memory_space<vmem>>, vector<1x16xf32>
    tpu.vector_store %arg20[%c1_89, %c0_90], %218 {strides = array<i32>} : memref<7x16xf32, #tpu.memory_space<vmem>>, vector<1x16xf32>,
    %c1_91 = arith.constant 1 : index
    %c0_92 = arith.constant 0 : index
    %220 = vector.load %arg21[%c1_91, %c0_92] : memref<7x32xf32, #tpu.memory_space<vmem>>, vector<1x32xf32>
    tpu.vector_store %arg21[%c1_91, %c0_92], %216 {strides = array<i32>} : memref<7x32xf32, #tpu.memory_space<vmem>>, vector<1x32xf32>,
    %c1_93 = arith.constant 1 : index
    %c0_94 = arith.constant 0 : index
    %221 = vector.load %arg22[%c1_93, %c0_94] : memref<7x8xf32, #tpu.memory_space<vmem>>, vector<1x8xf32>
    tpu.vector_store %arg22[%c1_93, %c0_94], %136 {strides = array<i32>} : memref<7x8xf32, #tpu.memory_space<vmem>>, vector<1x8xf32>,
    %c2 = arith.constant 2 : index
    %c0_95 = arith.constant 0 : index
    %222 = vector.load %arg1[%c2, %c0_95] : memref<7x16xf32, #tpu.memory_space<vmem>>, vector<1x16xf32>
    %cst_96 = arith.constant dense<0.000000e+00> : vector<1x32xf32>
    %223 = tpu.matmul %168, %2, %cst_96 {dimension_numbers = #tpu.dot_dimension_numbers<[1], [0], [0], [1], [0, 0, 1, 1], [], []>} : vector<1x32xf32>, vector<32x32xf32>, vector<1x32xf32> -> vector<1x32xf32>
    %224 = vector.broadcast %223 : vector<1x32xf32> to vector<8x32xf32>
    %225 = arith.addf %224, %0 : vector<8x32xf32>
    %226 = math.tanh %225 : vector<8x32xf32>
    %227 = tpu.transpose %226, [1, 0] : vector<8x32xf32> -> vector<32x8xf32>
    %cst_97 = arith.constant dense<0.000000e+00> : vector<1x8xf32>
    %228 = tpu.matmul %3, %227, %cst_97 {dimension_numbers = #tpu.dot_dimension_numbers<[1], [0], [0], [1], [0, 0, 1, 1], [], []>} : vector<1x32xf32>, vector<32x8xf32>, vector<1x8xf32> -> vector<1x8xf32>
    %cst_98 = arith.constant dense<0xFF800000> : vector<1xf32>
    %229 = vector.multi_reduction <maximumf>, %228, %cst_98 [1] : vector<1x8xf32> to vector<1xf32>
    %230 = vector.shape_cast %229 : vector<1xf32> to vector<1x1xf32>
    %231 = vector.broadcast %230 : vector<1x1xf32> to vector<1x8xf32>
    %232 = arith.subf %228, %231 : vector<1x8xf32>
    %233 = math.exp %232 : vector<1x8xf32>
    %cst_99 = arith.constant dense<0.000000e+00> : vector<1xf32>
    %234 = vector.multi_reduction <add>, %233, %cst_99 [1] : vector<1x8xf32> to vector<1xf32>
    %235 = vector.shape_cast %234 : vector<1xf32> to vector<1x1xf32>
    %236 = tpu.reciprocal %235 {approx = true} : vector<1x1xf32> -> vector<1x1xf32>
    %237 = vector.broadcast %236 : vector<1x1xf32> to vector<1x8xf32>
    %238 = arith.mulf %233, %237 : vector<1x8xf32>
    %cst_100 = arith.constant dense<0.000000e+00> : vector<1x64xf32>
    %239 = tpu.matmul %238, %1, %cst_100 {dimension_numbers = #tpu.dot_dimension_numbers<[1], [0], [0], [1], [0, 0, 1, 1], [], []>} : vector<1x8xf32>, vector<8x64xf32>, vector<1x64xf32> -> vector<1x64xf32>
    %240 = tpu.concatenate %222, %239 in 1 : vector<1x16xf32>, vector<1x64xf32> -> vector<1x80xf32>
    %cst_101 = arith.constant dense<0.000000e+00> : vector<1x96xf32>
    %241 = tpu.matmul %240, %4, %cst_101 {dimension_numbers = #tpu.dot_dimension_numbers<[1], [0], [0], [1], [0, 0, 1, 1], [], []>} : vector<1x80xf32>, vector<80x96xf32>, vector<1x96xf32> -> vector<1x96xf32>
    %242 = arith.addf %241, %6 : vector<1x96xf32>
    %cst_102 = arith.constant dense<0.000000e+00> : vector<1x96xf32>
    %243 = tpu.matmul %168, %5, %cst_102 {dimension_numbers = #tpu.dot_dimension_numbers<[1], [0], [0], [1], [0, 0, 1, 1], [], []>} : vector<1x32xf32>, vector<32x96xf32>, vector<1x96xf32> -> vector<1x96xf32>
    %244 = arith.addf %243, %7 : vector<1x96xf32>
    %245 = vector.extract_strided_slice %242 {offsets = [0, 0], sizes = [1, 32], strides = [1, 1]} : vector<1x96xf32> to vector<1x32xf32>
    %246 = vector.extract_strided_slice %244 {offsets = [0, 0], sizes = [1, 32], strides = [1, 1]} : vector<1x96xf32> to vector<1x32xf32>
    %247 = arith.addf %245, %246 : vector<1x32xf32>
    %248 = arith.negf %247 : vector<1x32xf32>
    %249 = math.exp %248 : vector<1x32xf32>
    %cst_103 = arith.constant 1.000000e+00 : f32
    %250 = vector.broadcast %cst_103 : f32 to vector<1x32xf32>
    %251 = arith.addf %250, %249 : vector<1x32xf32>
    %252 = arith.divf %250, %251 : vector<1x32xf32>
    %253 = vector.extract_strided_slice %242 {offsets = [0, 32], sizes = [1, 32], strides = [1, 1]} : vector<1x96xf32> to vector<1x32xf32>
    %254 = vector.extract_strided_slice %244 {offsets = [0, 32], sizes = [1, 32], strides = [1, 1]} : vector<1x96xf32> to vector<1x32xf32>
    %255 = arith.addf %253, %254 : vector<1x32xf32>
    %256 = arith.negf %255 : vector<1x32xf32>
    %257 = math.exp %256 : vector<1x32xf32>
    %cst_104 = arith.constant 1.000000e+00 : f32
    %258 = vector.broadcast %cst_104 : f32 to vector<1x32xf32>
    %259 = arith.addf %258, %257 : vector<1x32xf32>
    %260 = arith.divf %258, %259 : vector<1x32xf32>
    %261 = vector.extract_strided_slice %242 {offsets = [0, 64], sizes = [1, 32], strides = [1, 1]} : vector<1x96xf32> to vector<1x32xf32>
    %262 = vector.extract_strided_slice %244 {offsets = [0, 64], sizes = [1, 32], strides = [1, 1]} : vector<1x96xf32> to vector<1x32xf32>
    %263 = arith.mulf %252, %262 : vector<1x32xf32>
    %264 = arith.addf %261, %263 : vector<1x32xf32>
    %265 = math.tanh %264 : vector<1x32xf32>
    %cst_105 = arith.constant 1.000000e+00 : f32
    %266 = vector.broadcast %cst_105 : f32 to vector<1x32xf32>
    %267 = arith.subf %266, %260 : vector<1x32xf32>
    %268 = arith.mulf %267, %265 : vector<1x32xf32>
    %269 = arith.mulf %260, %168 : vector<1x32xf32>
    %270 = arith.addf %268, %269 : vector<1x32xf32>
    %cst_106 = arith.constant 0.000000e+00 : f32
    %271 = vector.broadcast %cst_106 : f32 to vector<1x32xf32>
    %272 = arith.cmpf oge, %270, %271 : vector<1x32xf32>
    %cst_107 = arith.constant 0.00999999977 : f32
    %273 = vector.broadcast %cst_107 : f32 to vector<1x32xf32>
    %274 = arith.mulf %273, %270 : vector<1x32xf32>
    %275 = arith.select %272, %270, %274 : vector<1x32xi1>, vector<1x32xf32>
    %cst_108 = arith.constant dense<0.000000e+00> : vector<1x96xf32>
    %276 = tpu.matmul %275, %8, %cst_108 {dimension_numbers = #tpu.dot_dimension_numbers<[1], [0], [0], [1], [0, 0, 1, 1], [], []>} : vector<1x32xf32>, vector<32x96xf32>, vector<1x96xf32> -> vector<1x96xf32>
    %277 = arith.addf %276, %10 : vector<1x96xf32>
    %cst_109 = arith.constant dense<0.000000e+00> : vector<1x96xf32>
    %278 = tpu.matmul %203, %9, %cst_109 {dimension_numbers = #tpu.dot_dimension_numbers<[1], [0], [0], [1], [0, 0, 1, 1], [], []>} : vector<1x32xf32>, vector<32x96xf32>, vector<1x96xf32> -> vector<1x96xf32>
    %279 = arith.addf %278, %11 : vector<1x96xf32>
    %280 = vector.extract_strided_slice %277 {offsets = [0, 0], sizes = [1, 32], strides = [1, 1]} : vector<1x96xf32> to vector<1x32xf32>
    %281 = vector.extract_strided_slice %279 {offsets = [0, 0], sizes = [1, 32], strides = [1, 1]} : vector<1x96xf32> to vector<1x32xf32>
    %282 = arith.addf %280, %281 : vector<1x32xf32>
    %283 = arith.negf %282 : vector<1x32xf32>
    %284 = math.exp %283 : vector<1x32xf32>
    %cst_110 = arith.constant 1.000000e+00 : f32
    %285 = vector.broadcast %cst_110 : f32 to vector<1x32xf32>
    %286 = arith.addf %285, %284 : vector<1x32xf32>
    %287 = arith.divf %285, %286 : vector<1x32xf32>
    %288 = vector.extract_strided_slice %277 {offsets = [0, 32], sizes = [1, 32], strides = [1, 1]} : vector<1x96xf32> to vector<1x32xf32>
    %289 = vector.extract_strided_slice %279 {offsets = [0, 32], sizes = [1, 32], strides = [1, 1]} : vector<1x96xf32> to vector<1x32xf32>
    %290 = arith.addf %288, %289 : vector<1x32xf32>
    %291 = arith.negf %290 : vector<1x32xf32>
    %292 = math.exp %291 : vector<1x32xf32>
    %cst_111 = arith.constant 1.000000e+00 : f32
    %293 = vector.broadcast %cst_111 : f32 to vector<1x32xf32>
    %294 = arith.addf %293, %292 : vector<1x32xf32>
    %295 = arith.divf %293, %294 : vector<1x32xf32>
    %296 = vector.extract_strided_slice %277 {offsets = [0, 64], sizes = [1, 32], strides = [1, 1]} : vector<1x96xf32> to vector<1x32xf32>
    %297 = vector.extract_strided_slice %279 {offsets = [0, 64], sizes = [1, 32], strides = [1, 1]} : vector<1x96xf32> to vector<1x32xf32>
    %298 = arith.mulf %287, %297 : vector<1x32xf32>
    %299 = arith.addf %296, %298 : vector<1x32xf32>
    %300 = math.tanh %299 : vector<1x32xf32>
    %cst_112 = arith.constant 1.000000e+00 : f32
    %301 = vector.broadcast %cst_112 : f32 to vector<1x32xf32>
    %302 = arith.subf %301, %295 : vector<1x32xf32>
    %303 = arith.mulf %302, %300 : vector<1x32xf32>
    %304 = arith.mulf %295, %203 : vector<1x32xf32>
    %305 = arith.addf %303, %304 : vector<1x32xf32>
    %cst_113 = arith.constant 0.000000e+00 : f32
    %306 = vector.broadcast %cst_113 : f32 to vector<1x32xf32>
    %307 = arith.cmpf oge, %305, %306 : vector<1x32xf32>
    %cst_114 = arith.constant 0.00999999977 : f32
    %308 = vector.broadcast %cst_114 : f32 to vector<1x32xf32>
    %309 = arith.mulf %308, %305 : vector<1x32xf32>
    %310 = arith.select %307, %305, %309 : vector<1x32xi1>, vector<1x32xf32>
    %311 = tpu.concatenate %310, %239 in 1 : vector<1x32xf32>, vector<1x64xf32> -> vector<1x96xf32>
    %cst_115 = arith.constant dense<0.000000e+00> : vector<1x32xf32>
    %312 = tpu.matmul %311, %12, %cst_115 {dimension_numbers = #tpu.dot_dimension_numbers<[1], [0], [0], [1], [0, 0, 1, 1], [], []>} : vector<1x96xf32>, vector<96x32xf32>, vector<1x32xf32> -> vector<1x32xf32>
    %313 = arith.addf %312, %13 : vector<1x32xf32>
    %cst_116 = arith.constant 0.000000e+00 : f32
    %314 = vector.broadcast %cst_116 : f32 to vector<1x32xf32>
    %315 = arith.cmpf oge, %313, %314 : vector<1x32xf32>
    %cst_117 = arith.constant 0.00999999977 : f32
    %316 = vector.broadcast %cst_117 : f32 to vector<1x32xf32>
    %317 = arith.mulf %316, %313 : vector<1x32xf32>
    %318 = arith.select %315, %313, %317 : vector<1x32xi1>, vector<1x32xf32>
    %cst_118 = arith.constant dense<0.000000e+00> : vector<1x16xf32>
    %319 = tpu.matmul %310, %14, %cst_118 {dimension_numbers = #tpu.dot_dimension_numbers<[1], [0], [0], [1], [0, 0, 1, 1], [], []>} : vector<1x32xf32>, vector<32x16xf32>, vector<1x16xf32> -> vector<1x16xf32>
    %320 = arith.addf %319, %15 : vector<1x16xf32>
    %c2_119 = arith.constant 2 : index
    %c0_120 = arith.constant 0 : index
    %321 = vector.load %arg20[%c2_119, %c0_120] : memref<7x16xf32, #tpu.memory_space<vmem>>, vector<1x16xf32>
    tpu.vector_store %arg20[%c2_119, %c0_120], %320 {strides = array<i32>} : memref<7x16xf32, #tpu.memory_space<vmem>>, vector<1x16xf32>,
    %c2_121 = arith.constant 2 : index
    %c0_122 = arith.constant 0 : index
    %322 = vector.load %arg21[%c2_121, %c0_122] : memref<7x32xf32, #tpu.memory_space<vmem>>, vector<1x32xf32>
    tpu.vector_store %arg21[%c2_121, %c0_122], %318 {strides = array<i32>} : memref<7x32xf32, #tpu.memory_space<vmem>>, vector<1x32xf32>,
    %c2_123 = arith.constant 2 : index
    %c0_124 = arith.constant 0 : index
    %323 = vector.load %arg22[%c2_123, %c0_124] : memref<7x8xf32, #tpu.memory_space<vmem>>, vector<1x8xf32>
    tpu.vector_store %arg22[%c2_123, %c0_124], %238 {strides = array<i32>} : memref<7x8xf32, #tpu.memory_space<vmem>>, vector<1x8xf32>,
    %c3 = arith.constant 3 : index
    %c0_125 = arith.constant 0 : index
    %324 = vector.load %arg1[%c3, %c0_125] : memref<7x16xf32, #tpu.memory_space<vmem>>, vector<1x16xf32>
    %cst_126 = arith.constant dense<0.000000e+00> : vector<1x32xf32>
    %325 = tpu.matmul %270, %2, %cst_126 {dimension_numbers = #tpu.dot_dimension_numbers<[1], [0], [0], [1], [0, 0, 1, 1], [], []>} : vector<1x32xf32>, vector<32x32xf32>, vector<1x32xf32> -> vector<1x32xf32>
    %326 = vector.broadcast %325 : vector<1x32xf32> to vector<8x32xf32>
    %327 = arith.addf %326, %0 : vector<8x32xf32>
    %328 = math.tanh %327 : vector<8x32xf32>
    %329 = tpu.transpose %328, [1, 0] : vector<8x32xf32> -> vector<32x8xf32>
    %cst_127 = arith.constant dense<0.000000e+00> : vector<1x8xf32>
    %330 = tpu.matmul %3, %329, %cst_127 {dimension_numbers = #tpu.dot_dimension_numbers<[1], [0], [0], [1], [0, 0, 1, 1], [], []>} : vector<1x32xf32>, vector<32x8xf32>, vector<1x8xf32> -> vector<1x8xf32>
    %cst_128 = arith.constant dense<0xFF800000> : vector<1xf32>
    %331 = vector.multi_reduction <maximumf>, %330, %cst_128 [1] : vector<1x8xf32> to vector<1xf32>
    %332 = vector.shape_cast %331 : vector<1xf32> to vector<1x1xf32>
    %333 = vector.broadcast %332 : vector<1x1xf32> to vector<1x8xf32>
    %334 = arith.subf %330, %333 : vector<1x8xf32>
    %335 = math.exp %334 : vector<1x8xf32>
    %cst_129 = arith.constant dense<0.000000e+00> : vector<1xf32>
    %336 = vector.multi_reduction <add>, %335, %cst_129 [1] : vector<1x8xf32> to vector<1xf32>
    %337 = vector.shape_cast %336 : vector<1xf32> to vector<1x1xf32>
    %338 = tpu.reciprocal %337 {approx = true} : vector<1x1xf32> -> vector<1x1xf32>
    %339 = vector.broadcast %338 : vector<1x1xf32> to vector<1x8xf32>
    %340 = arith.mulf %335, %339 : vector<1x8xf32>
    %cst_130 = arith.constant dense<0.000000e+00> : vector<1x64xf32>
    %341 = tpu.matmul %340, %1, %cst_130 {dimension_numbers = #tpu.dot_dimension_numbers<[1], [0], [0], [1], [0, 0, 1, 1], [], []>} : vector<1x8xf32>, vector<8x64xf32>, vector<1x64xf32> -> vector<1x64xf32>
    %342 = tpu.concatenate %324, %341 in 1 : vector<1x16xf32>, vector<1x64xf32> -> vector<1x80xf32>
    %cst_131 = arith.constant dense<0.000000e+00> : vector<1x96xf32>
    %343 = tpu.matmul %342, %4, %cst_131 {dimension_numbers = #tpu.dot_dimension_numbers<[1], [0], [0], [1], [0, 0, 1, 1], [], []>} : vector<1x80xf32>, vector<80x96xf32>, vector<1x96xf32> -> vector<1x96xf32>
    %344 = arith.addf %343, %6 : vector<1x96xf32>
    %cst_132 = arith.constant dense<0.000000e+00> : vector<1x96xf32>
    %345 = tpu.matmul %270, %5, %cst_132 {dimension_numbers = #tpu.dot_dimension_numbers<[1], [0], [0], [1], [0, 0, 1, 1], [], []>} : vector<1x32xf32>, vector<32x96xf32>, vector<1x96xf32> -> vector<1x96xf32>
    %346 = arith.addf %345, %7 : vector<1x96xf32>
    %347 = vector.extract_strided_slice %344 {offsets = [0, 0], sizes = [1, 32], strides = [1, 1]} : vector<1x96xf32> to vector<1x32xf32>
    %348 = vector.extract_strided_slice %346 {offsets = [0, 0], sizes = [1, 32], strides = [1, 1]} : vector<1x96xf32> to vector<1x32xf32>
    %349 = arith.addf %347, %348 : vector<1x32xf32>
    %350 = arith.negf %349 : vector<1x32xf32>
    %351 = math.exp %350 : vector<1x32xf32>
    %cst_133 = arith.constant 1.000000e+00 : f32
    %352 = vector.broadcast %cst_133 : f32 to vector<1x32xf32>
    %353 = arith.addf %352, %351 : vector<1x32xf32>
    %354 = arith.divf %352, %353 : vector<1x32xf32>
    %355 = vector.extract_strided_slice %344 {offsets = [0, 32], sizes = [1, 32], strides = [1, 1]} : vector<1x96xf32> to vector<1x32xf32>
    %356 = vector.extract_strided_slice %346 {offsets = [0, 32], sizes = [1, 32], strides = [1, 1]} : vector<1x96xf32> to vector<1x32xf32>
    %357 = arith.addf %355, %356 : vector<1x32xf32>
    %358 = arith.negf %357 : vector<1x32xf32>
    %359 = math.exp %358 : vector<1x32xf32>
    %cst_134 = arith.constant 1.000000e+00 : f32
    %360 = vector.broadcast %cst_134 : f32 to vector<1x32xf32>
    %361 = arith.addf %360, %359 : vector<1x32xf32>
    %362 = arith.divf %360, %361 : vector<1x32xf32>
    %363 = vector.extract_strided_slice %344 {offsets = [0, 64], sizes = [1, 32], strides = [1, 1]} : vector<1x96xf32> to vector<1x32xf32>
    %364 = vector.extract_strided_slice %346 {offsets = [0, 64], sizes = [1, 32], strides = [1, 1]} : vector<1x96xf32> to vector<1x32xf32>
    %365 = arith.mulf %354, %364 : vector<1x32xf32>
    %366 = arith.addf %363, %365 : vector<1x32xf32>
    %367 = math.tanh %366 : vector<1x32xf32>
    %cst_135 = arith.constant 1.000000e+00 : f32
    %368 = vector.broadcast %cst_135 : f32 to vector<1x32xf32>
    %369 = arith.subf %368, %362 : vector<1x32xf32>
    %370 = arith.mulf %369, %367 : vector<1x32xf32>
    %371 = arith.mulf %362, %270 : vector<1x32xf32>
    %372 = arith.addf %370, %371 : vector<1x32xf32>
    %cst_136 = arith.constant 0.000000e+00 : f32
    %373 = vector.broadcast %cst_136 : f32 to vector<1x32xf32>
    %374 = arith.cmpf oge, %372, %373 : vector<1x32xf32>
    %cst_137 = arith.constant 0.00999999977 : f32
    %375 = vector.broadcast %cst_137 : f32 to vector<1x32xf32>
    %376 = arith.mulf %375, %372 : vector<1x32xf32>
    %377 = arith.select %374, %372, %376 : vector<1x32xi1>, vector<1x32xf32>
    %cst_138 = arith.constant dense<0.000000e+00> : vector<1x96xf32>
    %378 = tpu.matmul %377, %8, %cst_138 {dimension_numbers = #tpu.dot_dimension_numbers<[1], [0], [0], [1], [0, 0, 1, 1], [], []>} : vector<1x32xf32>, vector<32x96xf32>, vector<1x96xf32> -> vector<1x96xf32>
    %379 = arith.addf %378, %10 : vector<1x96xf32>
    %cst_139 = arith.constant dense<0.000000e+00> : vector<1x96xf32>
    %380 = tpu.matmul %305, %9, %cst_139 {dimension_numbers = #tpu.dot_dimension_numbers<[1], [0], [0], [1], [0, 0, 1, 1], [], []>} : vector<1x32xf32>, vector<32x96xf32>, vector<1x96xf32> -> vector<1x96xf32>
    %381 = arith.addf %380, %11 : vector<1x96xf32>
    %382 = vector.extract_strided_slice %379 {offsets = [0, 0], sizes = [1, 32], strides = [1, 1]} : vector<1x96xf32> to vector<1x32xf32>
    %383 = vector.extract_strided_slice %381 {offsets = [0, 0], sizes = [1, 32], strides = [1, 1]} : vector<1x96xf32> to vector<1x32xf32>
    %384 = arith.addf %382, %383 : vector<1x32xf32>
    %385 = arith.negf %384 : vector<1x32xf32>
    %386 = math.exp %385 : vector<1x32xf32>
    %cst_140 = arith.constant 1.000000e+00 : f32
    %387 = vector.broadcast %cst_140 : f32 to vector<1x32xf32>
    %388 = arith.addf %387, %386 : vector<1x32xf32>
    %389 = arith.divf %387, %388 : vector<1x32xf32>
    %390 = vector.extract_strided_slice %379 {offsets = [0, 32], sizes = [1, 32], strides = [1, 1]} : vector<1x96xf32> to vector<1x32xf32>
    %391 = vector.extract_strided_slice %381 {offsets = [0, 32], sizes = [1, 32], strides = [1, 1]} : vector<1x96xf32> to vector<1x32xf32>
    %392 = arith.addf %390, %391 : vector<1x32xf32>
    %393 = arith.negf %392 : vector<1x32xf32>
    %394 = math.exp %393 : vector<1x32xf32>
    %cst_141 = arith.constant 1.000000e+00 : f32
    %395 = vector.broadcast %cst_141 : f32 to vector<1x32xf32>
    %396 = arith.addf %395, %394 : vector<1x32xf32>
    %397 = arith.divf %395, %396 : vector<1x32xf32>
    %398 = vector.extract_strided_slice %379 {offsets = [0, 64], sizes = [1, 32], strides = [1, 1]} : vector<1x96xf32> to vector<1x32xf32>
    %399 = vector.extract_strided_slice %381 {offsets = [0, 64], sizes = [1, 32], strides = [1, 1]} : vector<1x96xf32> to vector<1x32xf32>
    %400 = arith.mulf %389, %399 : vector<1x32xf32>
    %401 = arith.addf %398, %400 : vector<1x32xf32>
    %402 = math.tanh %401 : vector<1x32xf32>
    %cst_142 = arith.constant 1.000000e+00 : f32
    %403 = vector.broadcast %cst_142 : f32 to vector<1x32xf32>
    %404 = arith.subf %403, %397 : vector<1x32xf32>
    %405 = arith.mulf %404, %402 : vector<1x32xf32>
    %406 = arith.mulf %397, %305 : vector<1x32xf32>
    %407 = arith.addf %405, %406 : vector<1x32xf32>
    %cst_143 = arith.constant 0.000000e+00 : f32
    %408 = vector.broadcast %cst_143 : f32 to vector<1x32xf32>
    %409 = arith.cmpf oge, %407, %408 : vector<1x32xf32>
    %cst_144 = arith.constant 0.00999999977 : f32
    %410 = vector.broadcast %cst_144 : f32 to vector<1x32xf32>
    %411 = arith.mulf %410, %407 : vector<1x32xf32>
    %412 = arith.select %409, %407, %411 : vector<1x32xi1>, vector<1x32xf32>
    %413 = tpu.concatenate %412, %341 in 1 : vector<1x32xf32>, vector<1x64xf32> -> vector<1x96xf32>
    %cst_145 = arith.constant dense<0.000000e+00> : vector<1x32xf32>
    %414 = tpu.matmul %413, %12, %cst_145 {dimension_numbers = #tpu.dot_dimension_numbers<[1], [0], [0], [1], [0, 0, 1, 1], [], []>} : vector<1x96xf32>, vector<96x32xf32>, vector<1x32xf32> -> vector<1x32xf32>
    %415 = arith.addf %414, %13 : vector<1x32xf32>
    %cst_146 = arith.constant 0.000000e+00 : f32
    %416 = vector.broadcast %cst_146 : f32 to vector<1x32xf32>
    %417 = arith.cmpf oge, %415, %416 : vector<1x32xf32>
    %cst_147 = arith.constant 0.00999999977 : f32
    %418 = vector.broadcast %cst_147 : f32 to vector<1x32xf32>
    %419 = arith.mulf %418, %415 : vector<1x32xf32>
    %420 = arith.select %417, %415, %419 : vector<1x32xi1>, vector<1x32xf32>
    %cst_148 = arith.constant dense<0.000000e+00> : vector<1x16xf32>
    %421 = tpu.matmul %412, %14, %cst_148 {dimension_numbers = #tpu.dot_dimension_numbers<[1], [0], [0], [1], [0, 0, 1, 1], [], []>} : vector<1x32xf32>, vector<32x16xf32>, vector<1x16xf32> -> vector<1x16xf32>
    %422 = arith.addf %421, %15 : vector<1x16xf32>
    %c3_149 = arith.constant 3 : index
    %c0_150 = arith.constant 0 : index
    %423 = vector.load %arg20[%c3_149, %c0_150] : memref<7x16xf32, #tpu.memory_space<vmem>>, vector<1x16xf32>
    tpu.vector_store %arg20[%c3_149, %c0_150], %422 {strides = array<i32>} : memref<7x16xf32, #tpu.memory_space<vmem>>, vector<1x16xf32>,
    %c3_151 = arith.constant 3 : index
    %c0_152 = arith.constant 0 : index
    %424 = vector.load %arg21[%c3_151, %c0_152] : memref<7x32xf32, #tpu.memory_space<vmem>>, vector<1x32xf32>
    tpu.vector_store %arg21[%c3_151, %c0_152], %420 {strides = array<i32>} : memref<7x32xf32, #tpu.memory_space<vmem>>, vector<1x32xf32>,
    %c3_153 = arith.constant 3 : index
    %c0_154 = arith.constant 0 : index
    %425 = vector.load %arg22[%c3_153, %c0_154] : memref<7x8xf32, #tpu.memory_space<vmem>>, vector<1x8xf32>
    tpu.vector_store %arg22[%c3_153, %c0_154], %340 {strides = array<i32>} : memref<7x8xf32, #tpu.memory_space<vmem>>, vector<1x8xf32>,
    %c4 = arith.constant 4 : index
    %c0_155 = arith.constant 0 : index
    %426 = vector.load %arg1[%c4, %c0_155] : memref<7x16xf32, #tpu.memory_space<vmem>>, vector<1x16xf32>
    %cst_156 = arith.constant dense<0.000000e+00> : vector<1x32xf32>
    %427 = tpu.matmul %372, %2, %cst_156 {dimension_numbers = #tpu.dot_dimension_numbers<[1], [0], [0], [1], [0, 0, 1, 1], [], []>} : vector<1x32xf32>, vector<32x32xf32>, vector<1x32xf32> -> vector<1x32xf32>
    %428 = vector.broadcast %427 : vector<1x32xf32> to vector<8x32xf32>
    %429 = arith.addf %428, %0 : vector<8x32xf32>
    %430 = math.tanh %429 : vector<8x32xf32>
    %431 = tpu.transpose %430, [1, 0] : vector<8x32xf32> -> vector<32x8xf32>
    %cst_157 = arith.constant dense<0.000000e+00> : vector<1x8xf32>
    %432 = tpu.matmul %3, %431, %cst_157 {dimension_numbers = #tpu.dot_dimension_numbers<[1], [0], [0], [1], [0, 0, 1, 1], [], []>} : vector<1x32xf32>, vector<32x8xf32>, vector<1x8xf32> -> vector<1x8xf32>
    %cst_158 = arith.constant dense<0xFF800000> : vector<1xf32>
    %433 = vector.multi_reduction <maximumf>, %432, %cst_158 [1] : vector<1x8xf32> to vector<1xf32>
    %434 = vector.shape_cast %433 : vector<1xf32> to vector<1x1xf32>
    %435 = vector.broadcast %434 : vector<1x1xf32> to vector<1x8xf32>
    %436 = arith.subf %432, %435 : vector<1x8xf32>
    %437 = math.exp %436 : vector<1x8xf32>
    %cst_159 = arith.constant dense<0.000000e+00> : vector<1xf32>
    %438 = vector.multi_reduction <add>, %437, %cst_159 [1] : vector<1x8xf32> to vector<1xf32>
    %439 = vector.shape_cast %438 : vector<1xf32> to vector<1x1xf32>
    %440 = tpu.reciprocal %439 {approx = true} : vector<1x1xf32> -> vector<1x1xf32>
    %441 = vector.broadcast %440 : vector<1x1xf32> to vector<1x8xf32>
    %442 = arith.mulf %437, %441 : vector<1x8xf32>
    %cst_160 = arith.constant dense<0.000000e+00> : vector<1x64xf32>
    %443 = tpu.matmul %442, %1, %cst_160 {dimension_numbers = #tpu.dot_dimension_numbers<[1], [0], [0], [1], [0, 0, 1, 1], [], []>} : vector<1x8xf32>, vector<8x64xf32>, vector<1x64xf32> -> vector<1x64xf32>
    %444 = tpu.concatenate %426, %443 in 1 : vector<1x16xf32>, vector<1x64xf32> -> vector<1x80xf32>
    %cst_161 = arith.constant dense<0.000000e+00> : vector<1x96xf32>
    %445 = tpu.matmul %444, %4, %cst_161 {dimension_numbers = #tpu.dot_dimension_numbers<[1], [0], [0], [1], [0, 0, 1, 1], [], []>} : vector<1x80xf32>, vector<80x96xf32>, vector<1x96xf32> -> vector<1x96xf32>
    %446 = arith.addf %445, %6 : vector<1x96xf32>
    %cst_162 = arith.constant dense<0.000000e+00> : vector<1x96xf32>
    %447 = tpu.matmul %372, %5, %cst_162 {dimension_numbers = #tpu.dot_dimension_numbers<[1], [0], [0], [1], [0, 0, 1, 1], [], []>} : vector<1x32xf32>, vector<32x96xf32>, vector<1x96xf32> -> vector<1x96xf32>
    %448 = arith.addf %447, %7 : vector<1x96xf32>
    %449 = vector.extract_strided_slice %446 {offsets = [0, 0], sizes = [1, 32], strides = [1, 1]} : vector<1x96xf32> to vector<1x32xf32>
    %450 = vector.extract_strided_slice %448 {offsets = [0, 0], sizes = [1, 32], strides = [1, 1]} : vector<1x96xf32> to vector<1x32xf32>
    %451 = arith.addf %449, %450 : vector<1x32xf32>
    %452 = arith.negf %451 : vector<1x32xf32>
    %453 = math.exp %452 : vector<1x32xf32>
    %cst_163 = arith.constant 1.000000e+00 : f32
    %454 = vector.broadcast %cst_163 : f32 to vector<1x32xf32>
    %455 = arith.addf %454, %453 : vector<1x32xf32>
    %456 = arith.divf %454, %455 : vector<1x32xf32>
    %457 = vector.extract_strided_slice %446 {offsets = [0, 32], sizes = [1, 32], strides = [1, 1]} : vector<1x96xf32> to vector<1x32xf32>
    %458 = vector.extract_strided_slice %448 {offsets = [0, 32], sizes = [1, 32], strides = [1, 1]} : vector<1x96xf32> to vector<1x32xf32>
    %459 = arith.addf %457, %458 : vector<1x32xf32>
    %460 = arith.negf %459 : vector<1x32xf32>
    %461 = math.exp %460 : vector<1x32xf32>
    %cst_164 = arith.constant 1.000000e+00 : f32
    %462 = vector.broadcast %cst_164 : f32 to vector<1x32xf32>
    %463 = arith.addf %462, %461 : vector<1x32xf32>
    %464 = arith.divf %462, %463 : vector<1x32xf32>
    %465 = vector.extract_strided_slice %446 {offsets = [0, 64], sizes = [1, 32], strides = [1, 1]} : vector<1x96xf32> to vector<1x32xf32>
    %466 = vector.extract_strided_slice %448 {offsets = [0, 64], sizes = [1, 32], strides = [1, 1]} : vector<1x96xf32> to vector<1x32xf32>
    %467 = arith.mulf %456, %466 : vector<1x32xf32>
    %468 = arith.addf %465, %467 : vector<1x32xf32>
    %469 = math.tanh %468 : vector<1x32xf32>
    %cst_165 = arith.constant 1.000000e+00 : f32
    %470 = vector.broadcast %cst_165 : f32 to vector<1x32xf32>
    %471 = arith.subf %470, %464 : vector<1x32xf32>
    %472 = arith.mulf %471, %469 : vector<1x32xf32>
    %473 = arith.mulf %464, %372 : vector<1x32xf32>
    %474 = arith.addf %472, %473 : vector<1x32xf32>
    %cst_166 = arith.constant 0.000000e+00 : f32
    %475 = vector.broadcast %cst_166 : f32 to vector<1x32xf32>
    %476 = arith.cmpf oge, %474, %475 : vector<1x32xf32>
    %cst_167 = arith.constant 0.00999999977 : f32
    %477 = vector.broadcast %cst_167 : f32 to vector<1x32xf32>
    %478 = arith.mulf %477, %474 : vector<1x32xf32>
    %479 = arith.select %476, %474, %478 : vector<1x32xi1>, vector<1x32xf32>
    %cst_168 = arith.constant dense<0.000000e+00> : vector<1x96xf32>
    %480 = tpu.matmul %479, %8, %cst_168 {dimension_numbers = #tpu.dot_dimension_numbers<[1], [0], [0], [1], [0, 0, 1, 1], [], []>} : vector<1x32xf32>, vector<32x96xf32>, vector<1x96xf32> -> vector<1x96xf32>
    %481 = arith.addf %480, %10 : vector<1x96xf32>
    %cst_169 = arith.constant dense<0.000000e+00> : vector<1x96xf32>
    %482 = tpu.matmul %407, %9, %cst_169 {dimension_numbers = #tpu.dot_dimension_numbers<[1], [0], [0], [1], [0, 0, 1, 1], [], []>} : vector<1x32xf32>, vector<32x96xf32>, vector<1x96xf32> -> vector<1x96xf32>
    %483 = arith.addf %482, %11 : vector<1x96xf32>
    %484 = vector.extract_strided_slice %481 {offsets = [0, 0], sizes = [1, 32], strides = [1, 1]} : vector<1x96xf32> to vector<1x32xf32>
    %485 = vector.extract_strided_slice %483 {offsets = [0, 0], sizes = [1, 32], strides = [1, 1]} : vector<1x96xf32> to vector<1x32xf32>
    %486 = arith.addf %484, %485 : vector<1x32xf32>
    %487 = arith.negf %486 : vector<1x32xf32>
    %488 = math.exp %487 : vector<1x32xf32>
    %cst_170 = arith.constant 1.000000e+00 : f32
    %489 = vector.broadcast %cst_170 : f32 to vector<1x32xf32>
    %490 = arith.addf %489, %488 : vector<1x32xf32>
    %491 = arith.divf %489, %490 : vector<1x32xf32>
    %492 = vector.extract_strided_slice %481 {offsets = [0, 32], sizes = [1, 32], strides = [1, 1]} : vector<1x96xf32> to vector<1x32xf32>
    %493 = vector.extract_strided_slice %483 {offsets = [0, 32], sizes = [1, 32], strides = [1, 1]} : vector<1x96xf32> to vector<1x32xf32>
    %494 = arith.addf %492, %493 : vector<1x32xf32>
    %495 = arith.negf %494 : vector<1x32xf32>
    %496 = math.exp %495 : vector<1x32xf32>
    %cst_171 = arith.constant 1.000000e+00 : f32
    %497 = vector.broadcast %cst_171 : f32 to vector<1x32xf32>
    %498 = arith.addf %497, %496 : vector<1x32xf32>
    %499 = arith.divf %497, %498 : vector<1x32xf32>
    %500 = vector.extract_strided_slice %481 {offsets = [0, 64], sizes = [1, 32], strides = [1, 1]} : vector<1x96xf32> to vector<1x32xf32>
    %501 = vector.extract_strided_slice %483 {offsets = [0, 64], sizes = [1, 32], strides = [1, 1]} : vector<1x96xf32> to vector<1x32xf32>
    %502 = arith.mulf %491, %501 : vector<1x32xf32>
    %503 = arith.addf %500, %502 : vector<1x32xf32>
    %504 = math.tanh %503 : vector<1x32xf32>
    %cst_172 = arith.constant 1.000000e+00 : f32
    %505 = vector.broadcast %cst_172 : f32 to vector<1x32xf32>
    %506 = arith.subf %505, %499 : vector<1x32xf32>
    %507 = arith.mulf %506, %504 : vector<1x32xf32>
    %508 = arith.mulf %499, %407 : vector<1x32xf32>
    %509 = arith.addf %507, %508 : vector<1x32xf32>
    %cst_173 = arith.constant 0.000000e+00 : f32
    %510 = vector.broadcast %cst_173 : f32 to vector<1x32xf32>
    %511 = arith.cmpf oge, %509, %510 : vector<1x32xf32>
    %cst_174 = arith.constant 0.00999999977 : f32
    %512 = vector.broadcast %cst_174 : f32 to vector<1x32xf32>
    %513 = arith.mulf %512, %509 : vector<1x32xf32>
    %514 = arith.select %511, %509, %513 : vector<1x32xi1>, vector<1x32xf32>
    %515 = tpu.concatenate %514, %443 in 1 : vector<1x32xf32>, vector<1x64xf32> -> vector<1x96xf32>
    %cst_175 = arith.constant dense<0.000000e+00> : vector<1x32xf32>
    %516 = tpu.matmul %515, %12, %cst_175 {dimension_numbers = #tpu.dot_dimension_numbers<[1], [0], [0], [1], [0, 0, 1, 1], [], []>} : vector<1x96xf32>, vector<96x32xf32>, vector<1x32xf32> -> vector<1x32xf32>
    %517 = arith.addf %516, %13 : vector<1x32xf32>
    %cst_176 = arith.constant 0.000000e+00 : f32
    %518 = vector.broadcast %cst_176 : f32 to vector<1x32xf32>
    %519 = arith.cmpf oge, %517, %518 : vector<1x32xf32>
    %cst_177 = arith.constant 0.00999999977 : f32
    %520 = vector.broadcast %cst_177 : f32 to vector<1x32xf32>
    %521 = arith.mulf %520, %517 : vector<1x32xf32>
    %522 = arith.select %519, %517, %521 : vector<1x32xi1>, vector<1x32xf32>
    %cst_178 = arith.constant dense<0.000000e+00> : vector<1x16xf32>
    %523 = tpu.matmul %514, %14, %cst_178 {dimension_numbers = #tpu.dot_dimension_numbers<[1], [0], [0], [1], [0, 0, 1, 1], [], []>} : vector<1x32xf32>, vector<32x16xf32>, vector<1x16xf32> -> vector<1x16xf32>
    %524 = arith.addf %523, %15 : vector<1x16xf32>
    %c4_179 = arith.constant 4 : index
    %c0_180 = arith.constant 0 : index
    %525 = vector.load %arg20[%c4_179, %c0_180] : memref<7x16xf32, #tpu.memory_space<vmem>>, vector<1x16xf32>
    tpu.vector_store %arg20[%c4_179, %c0_180], %524 {strides = array<i32>} : memref<7x16xf32, #tpu.memory_space<vmem>>, vector<1x16xf32>,
    %c4_181 = arith.constant 4 : index
    %c0_182 = arith.constant 0 : index
    %526 = vector.load %arg21[%c4_181, %c0_182] : memref<7x32xf32, #tpu.memory_space<vmem>>, vector<1x32xf32>
    tpu.vector_store %arg21[%c4_181, %c0_182], %522 {strides = array<i32>} : memref<7x32xf32, #tpu.memory_space<vmem>>, vector<1x32xf32>,
    %c4_183 = arith.constant 4 : index
    %c0_184 = arith.constant 0 : index
    %527 = vector.load %arg22[%c4_183, %c0_184] : memref<7x8xf32, #tpu.memory_space<vmem>>, vector<1x8xf32>
    tpu.vector_store %arg22[%c4_183, %c0_184], %442 {strides = array<i32>} : memref<7x8xf32, #tpu.memory_space<vmem>>, vector<1x8xf32>,
    %c5 = arith.constant 5 : index
    %c0_185 = arith.constant 0 : index
    %528 = vector.load %arg1[%c5, %c0_185] : memref<7x16xf32, #tpu.memory_space<vmem>>, vector<1x16xf32>
    %cst_186 = arith.constant dense<0.000000e+00> : vector<1x32xf32>
    %529 = tpu.matmul %474, %2, %cst_186 {dimension_numbers = #tpu.dot_dimension_numbers<[1], [0], [0], [1], [0, 0, 1, 1], [], []>} : vector<1x32xf32>, vector<32x32xf32>, vector<1x32xf32> -> vector<1x32xf32>
    %530 = vector.broadcast %529 : vector<1x32xf32> to vector<8x32xf32>
    %531 = arith.addf %530, %0 : vector<8x32xf32>
    %532 = math.tanh %531 : vector<8x32xf32>
    %533 = tpu.transpose %532, [1, 0] : vector<8x32xf32> -> vector<32x8xf32>
    %cst_187 = arith.constant dense<0.000000e+00> : vector<1x8xf32>
    %534 = tpu.matmul %3, %533, %cst_187 {dimension_numbers = #tpu.dot_dimension_numbers<[1], [0], [0], [1], [0, 0, 1, 1], [], []>} : vector<1x32xf32>, vector<32x8xf32>, vector<1x8xf32> -> vector<1x8xf32>
    %cst_188 = arith.constant dense<0xFF800000> : vector<1xf32>
    %535 = vector.multi_reduction <maximumf>, %534, %cst_188 [1] : vector<1x8xf32> to vector<1xf32>
    %536 = vector.shape_cast %535 : vector<1xf32> to vector<1x1xf32>
    %537 = vector.broadcast %536 : vector<1x1xf32> to vector<1x8xf32>
    %538 = arith.subf %534, %537 : vector<1x8xf32>
    %539 = math.exp %538 : vector<1x8xf32>
    %cst_189 = arith.constant dense<0.000000e+00> : vector<1xf32>
    %540 = vector.multi_reduction <add>, %539, %cst_189 [1] : vector<1x8xf32> to vector<1xf32>
    %541 = vector.shape_cast %540 : vector<1xf32> to vector<1x1xf32>
    %542 = tpu.reciprocal %541 {approx = true} : vector<1x1xf32> -> vector<1x1xf32>
    %543 = vector.broadcast %542 : vector<1x1xf32> to vector<1x8xf32>
    %544 = arith.mulf %539, %543 : vector<1x8xf32>
    %cst_190 = arith.constant dense<0.000000e+00> : vector<1x64xf32>
    %545 = tpu.matmul %544, %1, %cst_190 {dimension_numbers = #tpu.dot_dimension_numbers<[1], [0], [0], [1], [0, 0, 1, 1], [], []>} : vector<1x8xf32>, vector<8x64xf32>, vector<1x64xf32> -> vector<1x64xf32>
    %546 = tpu.concatenate %528, %545 in 1 : vector<1x16xf32>, vector<1x64xf32> -> vector<1x80xf32>
    %cst_191 = arith.constant dense<0.000000e+00> : vector<1x96xf32>
    %547 = tpu.matmul %546, %4, %cst_191 {dimension_numbers = #tpu.dot_dimension_numbers<[1], [0], [0], [1], [0, 0, 1, 1], [], []>} : vector<1x80xf32>, vector<80x96xf32>, vector<1x96xf32> -> vector<1x96xf32>
    %548 = arith.addf %547, %6 : vector<1x96xf32>
    %cst_192 = arith.constant dense<0.000000e+00> : vector<1x96xf32>
    %549 = tpu.matmul %474, %5, %cst_192 {dimension_numbers = #tpu.dot_dimension_numbers<[1], [0], [0], [1], [0, 0, 1, 1], [], []>} : vector<1x32xf32>, vector<32x96xf32>, vector<1x96xf32> -> vector<1x96xf32>
    %550 = arith.addf %549, %7 : vector<1x96xf32>
    %551 = vector.extract_strided_slice %548 {offsets = [0, 0], sizes = [1, 32], strides = [1, 1]} : vector<1x96xf32> to vector<1x32xf32>
    %552 = vector.extract_strided_slice %550 {offsets = [0, 0], sizes = [1, 32], strides = [1, 1]} : vector<1x96xf32> to vector<1x32xf32>
    %553 = arith.addf %551, %552 : vector<1x32xf32>
    %554 = arith.negf %553 : vector<1x32xf32>
    %555 = math.exp %554 : vector<1x32xf32>
    %cst_193 = arith.constant 1.000000e+00 : f32
    %556 = vector.broadcast %cst_193 : f32 to vector<1x32xf32>
    %557 = arith.addf %556, %555 : vector<1x32xf32>
    %558 = arith.divf %556, %557 : vector<1x32xf32>
    %559 = vector.extract_strided_slice %548 {offsets = [0, 32], sizes = [1, 32], strides = [1, 1]} : vector<1x96xf32> to vector<1x32xf32>
    %560 = vector.extract_strided_slice %550 {offsets = [0, 32], sizes = [1, 32], strides = [1, 1]} : vector<1x96xf32> to vector<1x32xf32>
    %561 = arith.addf %559, %560 : vector<1x32xf32>
    %562 = arith.negf %561 : vector<1x32xf32>
    %563 = math.exp %562 : vector<1x32xf32>
    %cst_194 = arith.constant 1.000000e+00 : f32
    %564 = vector.broadcast %cst_194 : f32 to vector<1x32xf32>
    %565 = arith.addf %564, %563 : vector<1x32xf32>
    %566 = arith.divf %564, %565 : vector<1x32xf32>
    %567 = vector.extract_strided_slice %548 {offsets = [0, 64], sizes = [1, 32], strides = [1, 1]} : vector<1x96xf32> to vector<1x32xf32>
    %568 = vector.extract_strided_slice %550 {offsets = [0, 64], sizes = [1, 32], strides = [1, 1]} : vector<1x96xf32> to vector<1x32xf32>
    %569 = arith.mulf %558, %568 : vector<1x32xf32>
    %570 = arith.addf %567, %569 : vector<1x32xf32>
    %571 = math.tanh %570 : vector<1x32xf32>
    %cst_195 = arith.constant 1.000000e+00 : f32
    %572 = vector.broadcast %cst_195 : f32 to vector<1x32xf32>
    %573 = arith.subf %572, %566 : vector<1x32xf32>
    %574 = arith.mulf %573, %571 : vector<1x32xf32>
    %575 = arith.mulf %566, %474 : vector<1x32xf32>
    %576 = arith.addf %574, %575 : vector<1x32xf32>
    %cst_196 = arith.constant 0.000000e+00 : f32
    %577 = vector.broadcast %cst_196 : f32 to vector<1x32xf32>
    %578 = arith.cmpf oge, %576, %577 : vector<1x32xf32>
    %cst_197 = arith.constant 0.00999999977 : f32
    %579 = vector.broadcast %cst_197 : f32 to vector<1x32xf32>
    %580 = arith.mulf %579, %576 : vector<1x32xf32>
    %581 = arith.select %578, %576, %580 : vector<1x32xi1>, vector<1x32xf32>
    %cst_198 = arith.constant dense<0.000000e+00> : vector<1x96xf32>
    %582 = tpu.matmul %581, %8, %cst_198 {dimension_numbers = #tpu.dot_dimension_numbers<[1], [0], [0], [1], [0, 0, 1, 1], [], []>} : vector<1x32xf32>, vector<32x96xf32>, vector<1x96xf32> -> vector<1x96xf32>
    %583 = arith.addf %582, %10 : vector<1x96xf32>
    %cst_199 = arith.constant dense<0.000000e+00> : vector<1x96xf32>
    %584 = tpu.matmul %509, %9, %cst_199 {dimension_numbers = #tpu.dot_dimension_numbers<[1], [0], [0], [1], [0, 0, 1, 1], [], []>} : vector<1x32xf32>, vector<32x96xf32>, vector<1x96xf32> -> vector<1x96xf32>
    %585 = arith.addf %584, %11 : vector<1x96xf32>
    %586 = vector.extract_strided_slice %583 {offsets = [0, 0], sizes = [1, 32], strides = [1, 1]} : vector<1x96xf32> to vector<1x32xf32>
    %587 = vector.extract_strided_slice %585 {offsets = [0, 0], sizes = [1, 32], strides = [1, 1]} : vector<1x96xf32> to vector<1x32xf32>
    %588 = arith.addf %586, %587 : vector<1x32xf32>
    %589 = arith.negf %588 : vector<1x32xf32>
    %590 = math.exp %589 : vector<1x32xf32>
    %cst_200 = arith.constant 1.000000e+00 : f32
    %591 = vector.broadcast %cst_200 : f32 to vector<1x32xf32>
    %592 = arith.addf %591, %590 : vector<1x32xf32>
    %593 = arith.divf %591, %592 : vector<1x32xf32>
    %594 = vector.extract_strided_slice %583 {offsets = [0, 32], sizes = [1, 32], strides = [1, 1]} : vector<1x96xf32> to vector<1x32xf32>
    %595 = vector.extract_strided_slice %585 {offsets = [0, 32], sizes = [1, 32], strides = [1, 1]} : vector<1x96xf32> to vector<1x32xf32>
    %596 = arith.addf %594, %595 : vector<1x32xf32>
    %597 = arith.negf %596 : vector<1x32xf32>
    %598 = math.exp %597 : vector<1x32xf32>
    %cst_201 = arith.constant 1.000000e+00 : f32
    %599 = vector.broadcast %cst_201 : f32 to vector<1x32xf32>
    %600 = arith.addf %599, %598 : vector<1x32xf32>
    %601 = arith.divf %599, %600 : vector<1x32xf32>
    %602 = vector.extract_strided_slice %583 {offsets = [0, 64], sizes = [1, 32], strides = [1, 1]} : vector<1x96xf32> to vector<1x32xf32>
    %603 = vector.extract_strided_slice %585 {offsets = [0, 64], sizes = [1, 32], strides = [1, 1]} : vector<1x96xf32> to vector<1x32xf32>
    %604 = arith.mulf %593, %603 : vector<1x32xf32>
    %605 = arith.addf %602, %604 : vector<1x32xf32>
    %606 = math.tanh %605 : vector<1x32xf32>
    %cst_202 = arith.constant 1.000000e+00 : f32
    %607 = vector.broadcast %cst_202 : f32 to vector<1x32xf32>
    %608 = arith.subf %607, %601 : vector<1x32xf32>
    %609 = arith.mulf %608, %606 : vector<1x32xf32>
    %610 = arith.mulf %601, %509 : vector<1x32xf32>
    %611 = arith.addf %609, %610 : vector<1x32xf32>
    %cst_203 = arith.constant 0.000000e+00 : f32
    %612 = vector.broadcast %cst_203 : f32 to vector<1x32xf32>
    %613 = arith.cmpf oge, %611, %612 : vector<1x32xf32>
    %cst_204 = arith.constant 0.00999999977 : f32
    %614 = vector.broadcast %cst_204 : f32 to vector<1x32xf32>
    %615 = arith.mulf %614, %611 : vector<1x32xf32>
    %616 = arith.select %613, %611, %615 : vector<1x32xi1>, vector<1x32xf32>
    %617 = tpu.concatenate %616, %545 in 1 : vector<1x32xf32>, vector<1x64xf32> -> vector<1x96xf32>
    %cst_205 = arith.constant dense<0.000000e+00> : vector<1x32xf32>
    %618 = tpu.matmul %617, %12, %cst_205 {dimension_numbers = #tpu.dot_dimension_numbers<[1], [0], [0], [1], [0, 0, 1, 1], [], []>} : vector<1x96xf32>, vector<96x32xf32>, vector<1x32xf32> -> vector<1x32xf32>
    %619 = arith.addf %618, %13 : vector<1x32xf32>
    %cst_206 = arith.constant 0.000000e+00 : f32
    %620 = vector.broadcast %cst_206 : f32 to vector<1x32xf32>
    %621 = arith.cmpf oge, %619, %620 : vector<1x32xf32>
    %cst_207 = arith.constant 0.00999999977 : f32
    %622 = vector.broadcast %cst_207 : f32 to vector<1x32xf32>
    %623 = arith.mulf %622, %619 : vector<1x32xf32>
    %624 = arith.select %621, %619, %623 : vector<1x32xi1>, vector<1x32xf32>
    %cst_208 = arith.constant dense<0.000000e+00> : vector<1x16xf32>
    %625 = tpu.matmul %616, %14, %cst_208 {dimension_numbers = #tpu.dot_dimension_numbers<[1], [0], [0], [1], [0, 0, 1, 1], [], []>} : vector<1x32xf32>, vector<32x16xf32>, vector<1x16xf32> -> vector<1x16xf32>
    %626 = arith.addf %625, %15 : vector<1x16xf32>
    %c5_209 = arith.constant 5 : index
    %c0_210 = arith.constant 0 : index
    %627 = vector.load %arg20[%c5_209, %c0_210] : memref<7x16xf32, #tpu.memory_space<vmem>>, vector<1x16xf32>
    tpu.vector_store %arg20[%c5_209, %c0_210], %626 {strides = array<i32>} : memref<7x16xf32, #tpu.memory_space<vmem>>, vector<1x16xf32>,
    %c5_211 = arith.constant 5 : index
    %c0_212 = arith.constant 0 : index
    %628 = vector.load %arg21[%c5_211, %c0_212] : memref<7x32xf32, #tpu.memory_space<vmem>>, vector<1x32xf32>
    tpu.vector_store %arg21[%c5_211, %c0_212], %624 {strides = array<i32>} : memref<7x32xf32, #tpu.memory_space<vmem>>, vector<1x32xf32>,
    %c5_213 = arith.constant 5 : index
    %c0_214 = arith.constant 0 : index
    %629 = vector.load %arg22[%c5_213, %c0_214] : memref<7x8xf32, #tpu.memory_space<vmem>>, vector<1x8xf32>
    tpu.vector_store %arg22[%c5_213, %c0_214], %544 {strides = array<i32>} : memref<7x8xf32, #tpu.memory_space<vmem>>, vector<1x8xf32>,
    %c6 = arith.constant 6 : index
    %c0_215 = arith.constant 0 : index
    %630 = vector.load %arg1[%c6, %c0_215] : memref<7x16xf32, #tpu.memory_space<vmem>>, vector<1x16xf32>
    %cst_216 = arith.constant dense<0.000000e+00> : vector<1x32xf32>
    %631 = tpu.matmul %576, %2, %cst_216 {dimension_numbers = #tpu.dot_dimension_numbers<[1], [0], [0], [1], [0, 0, 1, 1], [], []>} : vector<1x32xf32>, vector<32x32xf32>, vector<1x32xf32> -> vector<1x32xf32>
    %632 = vector.broadcast %631 : vector<1x32xf32> to vector<8x32xf32>
    %633 = arith.addf %632, %0 : vector<8x32xf32>
    %634 = math.tanh %633 : vector<8x32xf32>
    %635 = tpu.transpose %634, [1, 0] : vector<8x32xf32> -> vector<32x8xf32>
    %cst_217 = arith.constant dense<0.000000e+00> : vector<1x8xf32>
    %636 = tpu.matmul %3, %635, %cst_217 {dimension_numbers = #tpu.dot_dimension_numbers<[1], [0], [0], [1], [0, 0, 1, 1], [], []>} : vector<1x32xf32>, vector<32x8xf32>, vector<1x8xf32> -> vector<1x8xf32>
    %cst_218 = arith.constant dense<0xFF800000> : vector<1xf32>
    %637 = vector.multi_reduction <maximumf>, %636, %cst_218 [1] : vector<1x8xf32> to vector<1xf32>
    %638 = vector.shape_cast %637 : vector<1xf32> to vector<1x1xf32>
    %639 = vector.broadcast %638 : vector<1x1xf32> to vector<1x8xf32>
    %640 = arith.subf %636, %639 : vector<1x8xf32>
    %641 = math.exp %640 : vector<1x8xf32>
    %cst_219 = arith.constant dense<0.000000e+00> : vector<1xf32>
    %642 = vector.multi_reduction <add>, %641, %cst_219 [1] : vector<1x8xf32> to vector<1xf32>
    %643 = vector.shape_cast %642 : vector<1xf32> to vector<1x1xf32>
    %644 = tpu.reciprocal %643 {approx = true} : vector<1x1xf32> -> vector<1x1xf32>
    %645 = vector.broadcast %644 : vector<1x1xf32> to vector<1x8xf32>
    %646 = arith.mulf %641, %645 : vector<1x8xf32>
    %cst_220 = arith.constant dense<0.000000e+00> : vector<1x64xf32>
    %647 = tpu.matmul %646, %1, %cst_220 {dimension_numbers = #tpu.dot_dimension_numbers<[1], [0], [0], [1], [0, 0, 1, 1], [], []>} : vector<1x8xf32>, vector<8x64xf32>, vector<1x64xf32> -> vector<1x64xf32>
    %648 = tpu.concatenate %630, %647 in 1 : vector<1x16xf32>, vector<1x64xf32> -> vector<1x80xf32>
    %cst_221 = arith.constant dense<0.000000e+00> : vector<1x96xf32>
    %649 = tpu.matmul %648, %4, %cst_221 {dimension_numbers = #tpu.dot_dimension_numbers<[1], [0], [0], [1], [0, 0, 1, 1], [], []>} : vector<1x80xf32>, vector<80x96xf32>, vector<1x96xf32> -> vector<1x96xf32>
    %650 = arith.addf %649, %6 : vector<1x96xf32>
    %cst_222 = arith.constant dense<0.000000e+00> : vector<1x96xf32>
    %651 = tpu.matmul %576, %5, %cst_222 {dimension_numbers = #tpu.dot_dimension_numbers<[1], [0], [0], [1], [0, 0, 1, 1], [], []>} : vector<1x32xf32>, vector<32x96xf32>, vector<1x96xf32> -> vector<1x96xf32>
    %652 = arith.addf %651, %7 : vector<1x96xf32>
    %653 = vector.extract_strided_slice %650 {offsets = [0, 0], sizes = [1, 32], strides = [1, 1]} : vector<1x96xf32> to vector<1x32xf32>
    %654 = vector.extract_strided_slice %652 {offsets = [0, 0], sizes = [1, 32], strides = [1, 1]} : vector<1x96xf32> to vector<1x32xf32>
    %655 = arith.addf %653, %654 : vector<1x32xf32>
    %656 = arith.negf %655 : vector<1x32xf32>
    %657 = math.exp %656 : vector<1x32xf32>
    %cst_223 = arith.constant 1.000000e+00 : f32
    %658 = vector.broadcast %cst_223 : f32 to vector<1x32xf32>
    %659 = arith.addf %658, %657 : vector<1x32xf32>
    %660 = arith.divf %658, %659 : vector<1x32xf32>
    %661 = vector.extract_strided_slice %650 {offsets = [0, 32], sizes = [1, 32], strides = [1, 1]} : vector<1x96xf32> to vector<1x32xf32>
    %662 = vector.extract_strided_slice %652 {offsets = [0, 32], sizes = [1, 32], strides = [1, 1]} : vector<1x96xf32> to vector<1x32xf32>
    %663 = arith.addf %661, %662 : vector<1x32xf32>
    %664 = arith.negf %663 : vector<1x32xf32>
    %665 = math.exp %664 : vector<1x32xf32>
    %cst_224 = arith.constant 1.000000e+00 : f32
    %666 = vector.broadcast %cst_224 : f32 to vector<1x32xf32>
    %667 = arith.addf %666, %665 : vector<1x32xf32>
    %668 = arith.divf %666, %667 : vector<1x32xf32>
    %669 = vector.extract_strided_slice %650 {offsets = [0, 64], sizes = [1, 32], strides = [1, 1]} : vector<1x96xf32> to vector<1x32xf32>
    %670 = vector.extract_strided_slice %652 {offsets = [0, 64], sizes = [1, 32], strides = [1, 1]} : vector<1x96xf32> to vector<1x32xf32>
    %671 = arith.mulf %660, %670 : vector<1x32xf32>
    %672 = arith.addf %669, %671 : vector<1x32xf32>
    %673 = math.tanh %672 : vector<1x32xf32>
    %cst_225 = arith.constant 1.000000e+00 : f32
    %674 = vector.broadcast %cst_225 : f32 to vector<1x32xf32>
    %675 = arith.subf %674, %668 : vector<1x32xf32>
    %676 = arith.mulf %675, %673 : vector<1x32xf32>
    %677 = arith.mulf %668, %576 : vector<1x32xf32>
    %678 = arith.addf %676, %677 : vector<1x32xf32>
    %cst_226 = arith.constant 0.000000e+00 : f32
    %679 = vector.broadcast %cst_226 : f32 to vector<1x32xf32>
    %680 = arith.cmpf oge, %678, %679 : vector<1x32xf32>
    %cst_227 = arith.constant 0.00999999977 : f32
    %681 = vector.broadcast %cst_227 : f32 to vector<1x32xf32>
    %682 = arith.mulf %681, %678 : vector<1x32xf32>
    %683 = arith.select %680, %678, %682 : vector<1x32xi1>, vector<1x32xf32>
    %cst_228 = arith.constant dense<0.000000e+00> : vector<1x96xf32>
    %684 = tpu.matmul %683, %8, %cst_228 {dimension_numbers = #tpu.dot_dimension_numbers<[1], [0], [0], [1], [0, 0, 1, 1], [], []>} : vector<1x32xf32>, vector<32x96xf32>, vector<1x96xf32> -> vector<1x96xf32>
    %685 = arith.addf %684, %10 : vector<1x96xf32>
    %cst_229 = arith.constant dense<0.000000e+00> : vector<1x96xf32>
    %686 = tpu.matmul %611, %9, %cst_229 {dimension_numbers = #tpu.dot_dimension_numbers<[1], [0], [0], [1], [0, 0, 1, 1], [], []>} : vector<1x32xf32>, vector<32x96xf32>, vector<1x96xf32> -> vector<1x96xf32>
    %687 = arith.addf %686, %11 : vector<1x96xf32>
    %688 = vector.extract_strided_slice %685 {offsets = [0, 0], sizes = [1, 32], strides = [1, 1]} : vector<1x96xf32> to vector<1x32xf32>
    %689 = vector.extract_strided_slice %687 {offsets = [0, 0], sizes = [1, 32], strides = [1, 1]} : vector<1x96xf32> to vector<1x32xf32>
    %690 = arith.addf %688, %689 : vector<1x32xf32>
    %691 = arith.negf %690 : vector<1x32xf32>
    %692 = math.exp %691 : vector<1x32xf32>
    %cst_230 = arith.constant 1.000000e+00 : f32
    %693 = vector.broadcast %cst_230 : f32 to vector<1x32xf32>
    %694 = arith.addf %693, %692 : vector<1x32xf32>
    %695 = arith.divf %693, %694 : vector<1x32xf32>
    %696 = vector.extract_strided_slice %685 {offsets = [0, 32], sizes = [1, 32], strides = [1, 1]} : vector<1x96xf32> to vector<1x32xf32>
    %697 = vector.extract_strided_slice %687 {offsets = [0, 32], sizes = [1, 32], strides = [1, 1]} : vector<1x96xf32> to vector<1x32xf32>
    %698 = arith.addf %696, %697 : vector<1x32xf32>
    %699 = arith.negf %698 : vector<1x32xf32>
    %700 = math.exp %699 : vector<1x32xf32>
    %cst_231 = arith.constant 1.000000e+00 : f32
    %701 = vector.broadcast %cst_231 : f32 to vector<1x32xf32>
    %702 = arith.addf %701, %700 : vector<1x32xf32>
    %703 = arith.divf %701, %702 : vector<1x32xf32>
    %704 = vector.extract_strided_slice %685 {offsets = [0, 64], sizes = [1, 32], strides = [1, 1]} : vector<1x96xf32> to vector<1x32xf32>
    %705 = vector.extract_strided_slice %687 {offsets = [0, 64], sizes = [1, 32], strides = [1, 1]} : vector<1x96xf32> to vector<1x32xf32>
    %706 = arith.mulf %695, %705 : vector<1x32xf32>
    %707 = arith.addf %704, %706 : vector<1x32xf32>
    %708 = math.tanh %707 : vector<1x32xf32>
    %cst_232 = arith.constant 1.000000e+00 : f32
    %709 = vector.broadcast %cst_232 : f32 to vector<1x32xf32>
    %710 = arith.subf %709, %703 : vector<1x32xf32>
    %711 = arith.mulf %710, %708 : vector<1x32xf32>
    %712 = arith.mulf %703, %611 : vector<1x32xf32>
    %713 = arith.addf %711, %712 : vector<1x32xf32>
    %cst_233 = arith.constant 0.000000e+00 : f32
    %714 = vector.broadcast %cst_233 : f32 to vector<1x32xf32>
    %715 = arith.cmpf oge, %713, %714 : vector<1x32xf32>
    %cst_234 = arith.constant 0.00999999977 : f32
    %716 = vector.broadcast %cst_234 : f32 to vector<1x32xf32>
    %717 = arith.mulf %716, %713 : vector<1x32xf32>
    %718 = arith.select %715, %713, %717 : vector<1x32xi1>, vector<1x32xf32>
    %719 = tpu.concatenate %718, %647 in 1 : vector<1x32xf32>, vector<1x64xf32> -> vector<1x96xf32>
    %cst_235 = arith.constant dense<0.000000e+00> : vector<1x32xf32>
    %720 = tpu.matmul %719, %12, %cst_235 {dimension_numbers = #tpu.dot_dimension_numbers<[1], [0], [0], [1], [0, 0, 1, 1], [], []>} : vector<1x96xf32>, vector<96x32xf32>, vector<1x32xf32> -> vector<1x32xf32>
    %721 = arith.addf %720, %13 : vector<1x32xf32>
    %cst_236 = arith.constant 0.000000e+00 : f32
    %722 = vector.broadcast %cst_236 : f32 to vector<1x32xf32>
    %723 = arith.cmpf oge, %721, %722 : vector<1x32xf32>
    %cst_237 = arith.constant 0.00999999977 : f32
    %724 = vector.broadcast %cst_237 : f32 to vector<1x32xf32>
    %725 = arith.mulf %724, %721 : vector<1x32xf32>
    %726 = arith.select %723, %721, %725 : vector<1x32xi1>, vector<1x32xf32>
    %cst_238 = arith.constant dense<0.000000e+00> : vector<1x16xf32>
    %727 = tpu.matmul %718, %14, %cst_238 {dimension_numbers = #tpu.dot_dimension_numbers<[1], [0], [0], [1], [0, 0, 1, 1], [], []>} : vector<1x32xf32>, vector<32x16xf32>, vector<1x16xf32> -> vector<1x16xf32>
    %728 = arith.addf %727, %15 : vector<1x16xf32>
    %c6_239 = arith.constant 6 : index
    %c0_240 = arith.constant 0 : index
    %729 = vector.load %arg20[%c6_239, %c0_240] : memref<7x16xf32, #tpu.memory_space<vmem>>, vector<1x16xf32>
    tpu.vector_store %arg20[%c6_239, %c0_240], %728 {strides = array<i32>} : memref<7x16xf32, #tpu.memory_space<vmem>>, vector<1x16xf32>,
    %c6_241 = arith.constant 6 : index
    %c0_242 = arith.constant 0 : index
    %730 = vector.load %arg21[%c6_241, %c0_242] : memref<7x32xf32, #tpu.memory_space<vmem>>, vector<1x32xf32>
    tpu.vector_store %arg21[%c6_241, %c0_242], %726 {strides = array<i32>} : memref<7x32xf32, #tpu.memory_space<vmem>>, vector<1x32xf32>,
    %c6_243 = arith.constant 6 : index
    %c0_244 = arith.constant 0 : index
    %731 = vector.load %arg22[%c6_243, %c0_244] : memref<7x8xf32, #tpu.memory_space<vmem>>, vector<1x8xf32>
    tpu.vector_store %arg22[%c6_243, %c0_244], %646 {strides = array<i32>} : memref<7x8xf32, #tpu.memory_space<vmem>>, vector<1x8xf32>,
    %c0_245 = arith.constant 0 : index
    %c0_246 = arith.constant 0 : index
    %732 = vector.load %arg23[%c0_245, %c0_246] : memref<1x32xf32, #tpu.memory_space<vmem>>, vector<1x32xf32>
    tpu.vector_store %arg23[%c0_245, %c0_246], %678 {strides = array<i32>} : memref<1x32xf32, #tpu.memory_space<vmem>>, vector<1x32xf32>,
    %c0_247 = arith.constant 0 : index
    %c0_248 = arith.constant 0 : index
    %733 = vector.load %arg24[%c0_247, %c0_248] : memref<1x32xf32, #tpu.memory_space<vmem>>, vector<1x32xf32>
    tpu.vector_store %arg24[%c0_247, %c0_248], %713 {strides = array<i32>} : memref<1x32xf32, #tpu.memory_space<vmem>>, vector<1x32xf32>,
    return
  }
  func.func @transform_0(%arg0: i32) -> (i32, i32) {
    %c0_i32 = arith.constant 0 : i32
    %c0_i32_0 = arith.constant 0 : i32
    %c0_i32_1 = arith.constant 0 : i32
    return %c0_i32, %c0_i32_0 : i32, i32
  }
  func.func @transform_1(%arg0: i32) -> (i32, i32) {
    %c0_i32 = arith.constant 0 : i32
    %c0_i32_0 = arith.constant 0 : i32
    %c0_i32_1 = arith.constant 0 : i32
    return %c0_i32, %c0_i32_0 : i32, i32
  }
  func.func @transform_2(%arg0: i32) -> (i32, i32) {
    %c0_i32 = arith.constant 0 : i32
    %c0_i32_0 = arith.constant 0 : i32
    %c0_i32_1 = arith.constant 0 : i32
    return %c0_i32, %c0_i32_0 : i32, i32
  }
  func.func @transform_3(%arg0: i32) -> (i32, i32) {
    %c0_i32 = arith.constant 0 : i32
    %c0_i32_0 = arith.constant 0 : i32
    %c0_i32_1 = arith.constant 0 : i32
    return %c0_i32, %c0_i32_0 : i32, i32
  }
  func.func @transform_4(%arg0: i32) -> (i32, i32) {
    %c0_i32 = arith.constant 0 : i32
    %c0_i32_0 = arith.constant 0 : i32
    %c0_i32_1 = arith.constant 0 : i32
    return %c0_i32, %c0_i32_0 : i32, i32
  }
  func.func @transform_5(%arg0: i32) -> (i32, i32) {
    %c0_i32 = arith.constant 0 : i32
    %c0_i32_0 = arith.constant 0 : i32
    %c0_i32_1 = arith.constant 0 : i32
    return %c0_i32, %c0_i32_0 : i32, i32
  }
  func.func @transform_6(%arg0: i32) -> (i32, i32) {
    %c0_i32 = arith.constant 0 : i32
    %c0_i32_0 = arith.constant 0 : i32
    %c0_i32_1 = arith.constant 0 : i32
    return %c0_i32, %c0_i32_0 : i32, i32
  }
  func.func @transform_7(%arg0: i32) -> (i32, i32) {
    %c0_i32 = arith.constant 0 : i32
    %c0_i32_0 = arith.constant 0 : i32
    %c0_i32_1 = arith.constant 0 : i32
    return %c0_i32, %c0_i32_0 : i32, i32
  }
  func.func @transform_8(%arg0: i32) -> (i32, i32) {
    %c0_i32 = arith.constant 0 : i32
    %c0_i32_0 = arith.constant 0 : i32
    %c0_i32_1 = arith.constant 0 : i32
    return %c0_i32, %c0_i32_0 : i32, i32
  }
  func.func @transform_9(%arg0: i32) -> (i32, i32) {
    %c0_i32 = arith.constant 0 : i32
    %c0_i32_0 = arith.constant 0 : i32
    %c0_i32_1 = arith.constant 0 : i32
    return %c0_i32, %c0_i32_0 : i32, i32
  }
  func.func @transform_10(%arg0: i32) -> (i32, i32) {
    %c0_i32 = arith.constant 0 : i32
    %c0_i32_0 = arith.constant 0 : i32
    %c0_i32_1 = arith.constant 0 : i32
    return %c0_i32, %c0_i32_0 : i32, i32
  }
  func.func @transform_11(%arg0: i32) -> (i32, i32) {
    %c0_i32 = arith.constant 0 : i32
    %c0_i32_0 = arith.constant 0 : i32
    %c0_i32_1 = arith.constant 0 : i32
    return %c0_i32, %c0_i32_0 : i32, i32
  }
  func.func @transform_12(%arg0: i32) -> (i32, i32) {
    %c0_i32 = arith.constant 0 : i32
    %c0_i32_0 = arith.constant 0 : i32
    %c0_i32_1 = arith.constant 0 : i32
    return %c0_i32, %c0_i32_0 : i32, i32
  }
  func.func @transform_13(%arg0: i32) -> (i32, i32) {
    %c0_i32 = arith.constant 0 : i32
    %c0_i32_0 = arith.constant 0 : i32
    %c0_i32_1 = arith.constant 0 : i32
    return %c0_i32, %c0_i32_0 : i32, i32
  }
  func.func @transform_14(%arg0: i32) -> (i32, i32) {
    %c0_i32 = arith.constant 0 : i32
    %c0_i32_0 = arith.constant 0 : i32
    %c0_i32_1 = arith.constant 0 : i32
    return %c0_i32, %c0_i32_0 : i32, i32
  }
  func.func @transform_15(%arg0: i32) -> (i32, i32) {
    %c0_i32 = arith.constant 0 : i32
    %c0_i32_0 = arith.constant 0 : i32
    %c0_i32_1 = arith.constant 0 : i32
    return %c0_i32, %c0_i32_0 : i32, i32
  }
  func.func @transform_16(%arg0: i32) -> (i32, i32) {
    %c0_i32 = arith.constant 0 : i32
    %c0_i32_0 = arith.constant 0 : i32
    %c0_i32_1 = arith.constant 0 : i32
    return %c0_i32, %c0_i32_0 : i32, i32
  }
  func.func @transform_17(%arg0: i32) -> (i32, i32) {
    %c0_i32 = arith.constant 0 : i32
    %c0_i32_0 = arith.constant 0 : i32
    %c0_i32_1 = arith.constant 0 : i32
    return %c0_i32, %c0_i32_0 : i32, i32
  }
  func.func @transform_18(%arg0: i32) -> (i32, i32) {
    %c0_i32 = arith.constant 0 : i32
    %c0_i32_0 = arith.constant 0 : i32
    %c0_i32_1 = arith.constant 0 : i32
    return %c0_i32, %c0_i32_0 : i32, i32
  }
  func.func @transform_19(%arg0: i32) -> (i32, i32) {
    %c0_i32 = arith.constant 0 : i32
    %c0_i32_0 = arith.constant 0 : i32
    %c0_i32_1 = arith.constant 0 : i32
    return %c0_i32, %c0_i32_0 : i32, i32
  }
  func.func @transform_20(%arg0: i32) -> (i32, i32) {
    %c0_i32 = arith.constant 0 : i32
    %c0_i32_0 = arith.constant 0 : i32
    %c0_i32_1 = arith.constant 0 : i32
    return %c0_i32, %c0_i32_0 : i32, i32
  }
  func.func @transform_21(%arg0: i32) -> (i32, i32) {
    %c0_i32 = arith.constant 0 : i32
    %c0_i32_0 = arith.constant 0 : i32
    %c0_i32_1 = arith.constant 0 : i32
    return %c0_i32, %c0_i32_0 : i32, i32
  }
  func.func @transform_22(%arg0: i32) -> (i32, i32) {
    %c0_i32 = arith.constant 0 : i32
    %c0_i32_0 = arith.constant 0 : i32
    %c0_i32_1 = arith.constant 0 : i32
    return %c0_i32, %c0_i32_0 : i32, i32
  }
  func.func @transform_23(%arg0: i32) -> (i32, i32) {
    %c0_i32 = arith.constant 0 : i32
    %c0_i32_0 = arith.constant 0 : i32
    %c0_i32_1 = arith.constant 0 : i32
    return %c0_i32, %c0_i32_0 : i32, i32
  }
}

</mosaic_0001>

<llo_original>
// kernel: tpu_custom_call.1
$region0: #{tpu_custom_call.1}
  #allocation0 [shape = 'u32[]', space=smem, size = 0x4, offset = 0x4, fixed_abs, tag = 'smem constant byte address 0x4 - core index']
  #allocation1 [shape = 'u32[72,128]{1,0:T(1,128)}', space=vmem, size = 0x9000, scoped, tag = 'internal scratch']
  %s0 = inlined_call_operand.hbm [shape: f32[7,16], index: 0, kind: input, shape index: {}]
  %s1 = inlined_call_operand.hbm [shape: f32[8,32], index: 1, kind: input, shape index: {}]
  %s2 = inlined_call_operand.hbm [shape: f32[8,64], index: 2, kind: input, shape index: {}]
  %s3 = inlined_call_operand.hbm [shape: f32[1,32], index: 3, kind: input, shape index: {}]
  %s4 = inlined_call_operand.hbm [shape: f32[1,32], index: 4, kind: input, shape index: {}]
  %s5 = inlined_call_operand.vmem [shape: f32[32,32], index: 5, kind: input, shape index: {}]
  %s6 = inlined_call_operand.hbm [shape: f32[1,32], index: 6, kind: input, shape index: {}]
  %s7 = inlined_call_operand.vmem [shape: f32[80,96], index: 7, kind: input, shape index: {}]
  %s8 = inlined_call_operand.vmem [shape: f32[32,96], index: 8, kind: input, shape index: {}]
  %s9 = inlined_call_operand.hbm [shape: f32[1,96], index: 9, kind: input, shape index: {}]
  %s10 = inlined_call_operand.hbm [shape: f32[1,96], index: 10, kind: input, shape index: {}]
  %s11 = inlined_call_operand.hbm [shape: f32[32,96], index: 11, kind: input, shape index: {}]
  %s12 = inlined_call_operand.hbm [shape: f32[32,96], index: 12, kind: input, shape index: {}]
  %s13 = inlined_call_operand.hbm [shape: f32[1,96], index: 13, kind: input, shape index: {}]
  %s14 = inlined_call_operand.hbm [shape: f32[1,96], index: 14, kind: input, shape index: {}]
  %s15 = inlined_call_operand.vmem [shape: f32[96,32], index: 15, kind: input, shape index: {}]
  %s16 = inlined_call_operand.hbm [shape: f32[1,32], index: 16, kind: input, shape index: {}]
  %s17 = inlined_call_operand.vmem [shape: f32[32,16], index: 17, kind: input, shape index: {}]
  %s18 = inlined_call_operand.vmem [shape: f32[1,16], index: 18, kind: input, shape index: {}]
  %s19 = inlined_call_operand.hbm [shape: f32[7,16], index: 19, kind: output, shape index: {0}]
  %s20 = inlined_call_operand.hbm [shape: f32[7,32], index: 20, kind: output, shape index: {1}]
  %s21 = inlined_call_operand.hbm [shape: f32[7,8], index: 21, kind: output, shape index: {2}]
  %s22 = inlined_call_operand.hbm [shape: f32[1,32], index: 22, kind: output, shape index: {3}]
  %s23 = inlined_call_operand.hbm [shape: f32[1,32], index: 23, kind: output, shape index: {4}]
  %24 = xla_tuple %s19, %s20, %s21, %s22, %s23
  %s25 = sld [smem:[#allocation0]]
  $region170: #{tpu_custom_call.1} parent=0
    _
  %s27 = ssub.s32 1, %s25
  %s28 = scalar_select 0, %s27, %s25
  $region1: #{tpu_custom_call.1} parent=0
    #allocation2 [shape = 'u8[4096]{0}', space=vmem, size = 0x1000, scoped, tag = 'input window, operand 0, single buffered']
    #allocation3 [shape = 's32[1]{0}', space=sflag, size = 0x4, scoped, tag = 'scoped memory for tpu_custom_call.1']
    #allocation4 [shape = 's32[1]{0}', space=sflag, size = 0x4, scoped, tag = 'scoped memory for tpu_custom_call.1']
    #allocation5 [shape = 'u8[4096]{0}', space=vmem, size = 0x1000, scoped, tag = 'input window, operand 1, single buffered']
    #allocation6 [shape = 's32[1]{0}', space=sflag, size = 0x4, scoped, tag = 'scoped memory for tpu_custom_call.1']
    #allocation7 [shape = 'u8[4096]{0}', space=vmem, size = 0x1000, scoped, tag = 'input window, operand 2, single buffered']
    #allocation8 [shape = 'u8[512]{0}', space=vmem, size = 0x400, scoped, tag = 'input window, operand 3, single buffered']
    #allocation9 [shape = 's32[1]{0}', space=sflag, size = 0x4, scoped, tag = 'scoped memory for tpu_custom_call.1']
    #allocation10 [shape = 'u8[512]{0}', space=vmem, size = 0x400, scoped, tag = 'input window, operand 4, single buffered']
    #allocation11 [shape = 'u8[512]{0}', space=vmem, size = 0x400, scoped, tag = 'input window, operand 6, single buffered']
    #allocation12 [shape = 's32[1]{0}', space=sflag, size = 0x4, scoped, tag = 'scoped memory for tpu_custom_call.1']
    #allocation13 [shape = 'u8[512]{0}', space=vmem, size = 0x400, scoped, tag = 'input window, operand 9, single buffered']
    #allocation14 [shape = 'u8[512]{0}', space=vmem, size = 0x400, scoped, tag = 'input window, operand 10, single buffered']
    #allocation15 [shape = 's32[1]{0}', space=sflag, size = 0x4, scoped, tag = 'scoped memory for tpu_custom_call.1']
    #allocation16 [shape = 'u8[16384]{0}', space=vmem, size = 0x4000, scoped, tag = 'input window, operand 11, single buffered']
    #allocation17 [shape = 'u8[16384]{0}', space=vmem, size = 0x4000, scoped, tag = 'input window, operand 12, single buffered']
    #allocation18 [shape = 's32[1]{0}', space=sflag, size = 0x4, scoped, tag = 'scoped memory for tpu_custom_call.1']
    #allocation19 [shape = 'u8[512]{0}', space=vmem, size = 0x400, scoped, tag = 'input window, operand 13, single buffered']
    #allocation20 [shape = 'u8[512]{0}', space=vmem, size = 0x400, scoped, tag = 'input window, operand 14, single buffered']
    #allocation21 [shape = 's32[1]{0}', space=sflag, size = 0x4, scoped, tag = 'scoped memory for tpu_custom_call.1']
    #allocation22 [shape = 'u8[512]{0}', space=vmem, size = 0x400, scoped, tag = 'input window, operand 16, single buffered']
    #allocation23 [shape = 'u8[4096]{0}', space=vmem, size = 0x1000, scoped, tag = 'output window, operand 0, single buffered']
    #allocation24 [shape = 'u8[4096]{0}', space=vmem, size = 0x1000, scoped, tag = 'output window, operand 1, single buffered']
    #allocation25 [shape = 's32[1]{0}', space=sflag, size = 0x4, scoped, tag = 'scoped memory for tpu_custom_call.1']
    #allocation26 [shape = 'u8[4096]{0}', space=vmem, size = 0x1000, scoped, tag = 'output window, operand 2, single buffered']
    #allocation27 [shape = 'u8[512]{0}', space=vmem, size = 0x400, scoped, tag = 'output window, operand 3, single buffered']
    #allocation28 [shape = 's32[1]{0}', space=sflag, size = 0x4, scoped, tag = 'scoped memory for tpu_custom_call.1']
    #allocation29 [shape = 'u8[512]{0}', space=vmem, size = 0x400, scoped, tag = 'output window, operand 4, single buffered']
    %29 = vsyncpa [#allocation3], 0
    %30 = vsyncpa [#allocation6], 0
    %31 = vsyncpa [#allocation9], 0
    %32 = vsyncpa [#allocation12], 0
    %33 = vsyncpa [#allocation15], 0
    %34 = vsyncpa [#allocation18], 0
    %35 = vsyncpa [#allocation21], 0
    %36 = vsyncpa [#allocation4], 0
    %37 = vsyncpa [#allocation25], 0
    %38 = vsyncpa [#allocation28], 0
    // Predicated region
    $region2: #{tpu_custom_call.1} parent=1 // pred_check
      _
    $region3: #{tpu_custom_call.1} parent=1 // pred_check_branch
      %40 = sbr.rel (0) target = $region5
    $region4: #{tpu_custom_call.1} parent=1 // pred_region
      %42 = vsyncadd [#allocation3], 0
      %s44 = sshll.u32 %s0, 4
      %s45 = int_to_ptr.hbm [resolvable:$true] %s44
      %s46 = sshll.u32 [#allocation2], 4
      %s47 = int_to_ptr.vmem [resolvable:$true] %s46
      %49 = dma.hbm_to_vmem [thread:$0]  %s45, 128, %s47, [#allocation3]
    $region5: #{tpu_custom_call.1} parent=1 // pred_fallthru
      _
    // Predicated region
    $region6: #{tpu_custom_call.1} parent=1 // pred_check
      _
    $region7: #{tpu_custom_call.1} parent=1 // pred_check_branch
      %51 = sbr.rel (0) target = $region9
    $region8: #{tpu_custom_call.1} parent=1 // pred_region
      %53 = vsyncadd [#allocation6], 0
      %s55 = sshll.u32 %s1, 4
      %s56 = int_to_ptr.hbm [resolvable:$true] %s55
      %s57 = sshll.u32 [#allocation5], 4
      %s58 = int_to_ptr.vmem [resolvable:$true] %s57
      %60 = dma.hbm_to_vmem [thread:$0]  %s56, 128, %s58, [#allocation6]
    $region9: #{tpu_custom_call.1} parent=1 // pred_fallthru
      _
    // Predicated region
    $region10: #{tpu_custom_call.1} parent=1 // pred_check
      _
    $region11: #{tpu_custom_call.1} parent=1 // pred_check_branch
      %62 = sbr.rel (0) target = $region13
    $region12: #{tpu_custom_call.1} parent=1 // pred_region
      %64 = vsyncadd [#allocation6], 0
      %s66 = sshll.u32 %s2, 4
      %s67 = int_to_ptr.hbm [resolvable:$true] %s66
      %s68 = sshll.u32 [#allocation7], 4
      %s69 = int_to_ptr.vmem [resolvable:$true] %s68
      %71 = dma.hbm_to_vmem [thread:$0]  %s67, 128, %s69, [#allocation6]
    $region13: #{tpu_custom_call.1} parent=1 // pred_fallthru
      _
    // Predicated region
    $region14: #{tpu_custom_call.1} parent=1 // pred_check
      _
    $region15: #{tpu_custom_call.1} parent=1 // pred_check_branch
      %73 = sbr.rel (0) target = $region17
    $region16: #{tpu_custom_call.1} parent=1 // pred_region
      %75 = vsyncadd [#allocation9], 0
      %s77 = sshll.u32 %s3, 4
      %s78 = int_to_ptr.hbm [resolvable:$true] %s77
      %s79 = sshll.u32 [#allocation8], 4
      %s80 = int_to_ptr.vmem [resolvable:$true] %s79
      %82 = dma.hbm_to_vmem [thread:$0]  %s78, 16, %s80, [#allocation9]
    $region17: #{tpu_custom_call.1} parent=1 // pred_fallthru
      _
    // Predicated region
    $region18: #{tpu_custom_call.1} parent=1 // pred_check
      _
    $region19: #{tpu_custom_call.1} parent=1 // pred_check_branch
      %84 = sbr.rel (0) target = $region21
    $region20: #{tpu_custom_call.1} parent=1 // pred_region
      %86 = vsyncadd [#allocation9], 0
      %s88 = sshll.u32 %s4, 4
      %s89 = int_to_ptr.hbm [resolvable:$true] %s88
      %s90 = sshll.u32 [#allocation10], 4
      %s91 = int_to_ptr.vmem [resolvable:$true] %s90
      %93 = dma.hbm_to_vmem [thread:$0]  %s89, 16, %s91, [#allocation9]
    $region21: #{tpu_custom_call.1} parent=1 // pred_fallthru
      _
    // Predicated region
    $region22: #{tpu_custom_call.1} parent=1 // pred_check
      _
    $region23: #{tpu_custom_call.1} parent=1 // pred_check_branch
      %95 = sbr.rel (0) target = $region25
    $region24: #{tpu_custom_call.1} parent=1 // pred_region
      _
    $region25: #{tpu_custom_call.1} parent=1 // pred_fallthru
      _
    // Predicated region
    $region26: #{tpu_custom_call.1} parent=1 // pred_check
      _
    $region27: #{tpu_custom_call.1} parent=1 // pred_check_branch
      %97 = sbr.rel (0) target = $region29
    $region28: #{tpu_custom_call.1} parent=1 // pred_region
      %99 = vsyncadd [#allocation12], 0
      %s101 = sshll.u32 %s6, 4
      %s102 = int_to_ptr.hbm [resolvable:$true] %s101
      %s103 = sshll.u32 [#allocation11], 4
      %s104 = int_to_ptr.vmem [resolvable:$true] %s103
      %106 = dma.hbm_to_vmem [thread:$0]  %s102, 16, %s104, [#allocation12]
    $region29: #{tpu_custom_call.1} parent=1 // pred_fallthru
      _
    // Predicated region
    $region30: #{tpu_custom_call.1} parent=1 // pred_check
      _
    $region31: #{tpu_custom_call.1} parent=1 // pred_check_branch
      %108 = sbr.rel (0) target = $region33
    $region32: #{tpu_custom_call.1} parent=1 // pred_region
      _
    $region33: #{tpu_custom_call.1} parent=1 // pred_fallthru
      _
    // Predicated region
    $region34: #{tpu_custom_call.1} parent=1 // pred_check
      _
    $region35: #{tpu_custom_call.1} parent=1 // pred_check_branch
      %110 = sbr.rel (0) target = $region37
    $region36: #{tpu_custom_call.1} parent=1 // pred_region
      _
    $region37: #{tpu_custom_call.1} parent=1 // pred_fallthru
      _
    // Predicated region
    $region38: #{tpu_custom_call.1} parent=1 // pred_check
      _
    $region39: #{tpu_custom_call.1} parent=1 // pred_check_branch
      %112 = sbr.rel (0) target = $region41
    $region40: #{tpu_custom_call.1} parent=1 // pred_region
      %114 = vsyncadd [#allocation12], 0
      %s116 = sshll.u32 %s9, 4
      %s117 = int_to_ptr.hbm [resolvable:$true] %s116
      %s118 = sshll.u32 [#allocation13], 4
      %s119 = int_to_ptr.vmem [resolvable:$true] %s118
      %121 = dma.hbm_to_vmem [thread:$0]  %s117, 16, %s119, [#allocation12]
    $region41: #{tpu_custom_call.1} parent=1 // pred_fallthru
      _
    // Predicated region
    $region42: #{tpu_custom_call.1} parent=1 // pred_check
      _
    $region43: #{tpu_custom_call.1} parent=1 // pred_check_branch
      %123 = sbr.rel (0) target = $region45
    $region44: #{tpu_custom_call.1} parent=1 // pred_region
      %125 = vsyncadd [#allocation15], 0
      %s127 = sshll.u32 %s10, 4
      %s128 = int_to_ptr.hbm [resolvable:$true] %s127
      %s129 = sshll.u32 [#allocation14], 4
      %s130 = int_to_ptr.vmem [resolvable:$true] %s129
      %132 = dma.hbm_to_vmem [thread:$0]  %s128, 16, %s130, [#allocation15]
    $region45: #{tpu_custom_call.1} parent=1 // pred_fallthru
      _
    // Predicated region
    $region46: #{tpu_custom_call.1} parent=1 // pred_check
      _
    $region47: #{tpu_custom_call.1} parent=1 // pred_check_branch
      %134 = sbr.rel (0) target = $region49
    $region48: #{tpu_custom_call.1} parent=1 // pred_region
      %136 = vsyncadd [#allocation15], 0
      %s137 = sshll.u32 %s11, 4
      %s138 = int_to_ptr.hbm [resolvable:$true] %s137
      %s139 = sshll.u32 [#allocation16], 4
      %s140 = int_to_ptr.vmem [resolvable:$true] %s139
      %145 = dma.hbm_to_vmem [thread:$0]  %s138, 512, %s140, [#allocation15], 128, 128, 8
    $region49: #{tpu_custom_call.1} parent=1 // pred_fallthru
      _
    // Predicated region
    $region50: #{tpu_custom_call.1} parent=1 // pred_check
      _
    $region51: #{tpu_custom_call.1} parent=1 // pred_check_branch
      %147 = sbr.rel (0) target = $region53
    $region52: #{tpu_custom_call.1} parent=1 // pred_region
      %149 = vsyncadd [#allocation18], 0
      %s150 = sshll.u32 %s12, 4
      %s151 = int_to_ptr.hbm [resolvable:$true] %s150
      %s152 = sshll.u32 [#allocation17], 4
      %s153 = int_to_ptr.vmem [resolvable:$true] %s152
      %158 = dma.hbm_to_vmem [thread:$0]  %s151, 512, %s153, [#allocation18], 128, 128, 8
    $region53: #{tpu_custom_call.1} parent=1 // pred_fallthru
      _
    // Predicated region
    $region54: #{tpu_custom_call.1} parent=1 // pred_check
      _
    $region55: #{tpu_custom_call.1} parent=1 // pred_check_branch
      %160 = sbr.rel (0) target = $region57
    $region56: #{tpu_custom_call.1} parent=1 // pred_region
      %162 = vsyncadd [#allocation18], 0
      %s164 = sshll.u32 %s13, 4
      %s165 = int_to_ptr.hbm [resolvable:$true] %s164
      %s166 = sshll.u32 [#allocation19], 4
      %s167 = int_to_ptr.vmem [resolvable:$true] %s166
      %169 = dma.hbm_to_vmem [thread:$0]  %s165, 16, %s167, [#allocation18]
    $region57: #{tpu_custom_call.1} parent=1 // pred_fallthru
      _
    // Predicated region
    $region58: #{tpu_custom_call.1} parent=1 // pred_check
      _
    $region59: #{tpu_custom_call.1} parent=1 // pred_check_branch
      %171 = sbr.rel (0) target = $region61
    $region60: #{tpu_custom_call.1} parent=1 // pred_region
      %173 = vsyncadd [#allocation21], 0
      %s175 = sshll.u32 %s14, 4
      %s176 = int_to_ptr.hbm [resolvable:$true] %s175
      %s177 = sshll.u32 [#allocation20], 4
      %s178 = int_to_ptr.vmem [resolvable:$true] %s177
      %180 = dma.hbm_to_vmem [thread:$0]  %s176, 16, %s178, [#allocation21]
    $region61: #{tpu_custom_call.1} parent=1 // pred_fallthru
      _
    // Predicated region
    $region62: #{tpu_custom_call.1} parent=1 // pred_check
      _
    $region63: #{tpu_custom_call.1} parent=1 // pred_check_branch
      %182 = sbr.rel (0) target = $region65
    $region64: #{tpu_custom_call.1} parent=1 // pred_region
      _
    $region65: #{tpu_custom_call.1} parent=1 // pred_fallthru
      _
    // Predicated region
    $region66: #{tpu_custom_call.1} parent=1 // pred_check
      _
    $region67: #{tpu_custom_call.1} parent=1 // pred_check_branch
      %184 = sbr.rel (0) target = $region69
    $region68: #{tpu_custom_call.1} parent=1 // pred_region
      %186 = vsyncadd [#allocation21], 0
      %s188 = sshll.u32 %s16, 4
      %s189 = int_to_ptr.hbm [resolvable:$true] %s188
      %s190 = sshll.u32 [#allocation22], 4
      %s191 = int_to_ptr.vmem [resolvable:$true] %s190
      %193 = dma.hbm_to_vmem [thread:$0]  %s189, 16, %s191, [#allocation21]
    $region69: #{tpu_custom_call.1} parent=1 // pred_fallthru
      _
    // Predicated region
    $region70: #{tpu_custom_call.1} parent=1 // pred_check
      _
    $region71: #{tpu_custom_call.1} parent=1 // pred_check_branch
      %195 = sbr.rel (0) target = $region73
    $region72: #{tpu_custom_call.1} parent=1 // pred_region
      _
    $region73: #{tpu_custom_call.1} parent=1 // pred_fallthru
      _
    // Predicated region
    $region74: #{tpu_custom_call.1} parent=1 // pred_check
      _
    $region75: #{tpu_custom_call.1} parent=1 // pred_check_branch
      %197 = sbr.rel (0) target = $region77
    $region76: #{tpu_custom_call.1} parent=1 // pred_region
      _
    $region77: #{tpu_custom_call.1} parent=1 // pred_fallthru
      _
    // Predicated region
    $region78: #{tpu_custom_call.1} parent=1 // pred_check
      _
    $region79: #{tpu_custom_call.1} parent=1 // pred_check_branch
      %199 = sbr.rel (0) target = $region81
    $region80: #{tpu_custom_call.1} parent=1 // pred_region
      %201 = dma.done [#allocation3], 128
    $region81: #{tpu_custom_call.1} parent=1 // pred_fallthru
      _
    // Predicated region
    $region82: #{tpu_custom_call.1} parent=1 // pred_check
      _
    $region83: #{tpu_custom_call.1} parent=1 // pred_check_branch
      %203 = sbr.rel (0) target = $region85
    $region84: #{tpu_custom_call.1} parent=1 // pred_region
      %205 = dma.done [#allocation6], 128
    $region85: #{tpu_custom_call.1} parent=1 // pred_fallthru
      _
    // Predicated region
    $region86: #{tpu_custom_call.1} parent=1 // pred_check
      _
    $region87: #{tpu_custom_call.1} parent=1 // pred_check_branch
      %207 = sbr.rel (0) target = $region89
    $region88: #{tpu_custom_call.1} parent=1 // pred_region
      %209 = dma.done [#allocation6], 128
    $region89: #{tpu_custom_call.1} parent=1 // pred_fallthru
      _
    // Predicated region
    $region90: #{tpu_custom_call.1} parent=1 // pred_check
      _
    $region91: #{tpu_custom_call.1} parent=1 // pred_check_branch
      %211 = sbr.rel (0) target = $region93
    $region92: #{tpu_custom_call.1} parent=1 // pred_region
      %213 = dma.done [#allocation9], 16
    $region93: #{tpu_custom_call.1} parent=1 // pred_fallthru
      _
    // Predicated region
    $region94: #{tpu_custom_call.1} parent=1 // pred_check
      _
    $region95: #{tpu_custom_call.1} parent=1 // pred_check_branch
      %215 = sbr.rel (0) target = $region97
    $region96: #{tpu_custom_call.1} parent=1 // pred_region
      %217 = dma.done [#allocation9], 16
    $region97: #{tpu_custom_call.1} parent=1 // pred_fallthru
      _
    // Predicated region
    $region98: #{tpu_custom_call.1} parent=1 // pred_check
      _
    $region99: #{tpu_custom_call.1} parent=1 // pred_check_branch
      %219 = sbr.rel (0) target = $region101
    $region100: #{tpu_custom_call.1} parent=1 // pred_region
      %221 = dma.done [#allocation12], 16
    $region101: #{tpu_custom_call.1} parent=1 // pred_fallthru
      _
    // Predicated region
    $region102: #{tpu_custom_call.1} parent=1 // pred_check
      _
    $region103: #{tpu_custom_call.1} parent=1 // pred_check_branch
      %223 = sbr.rel (0) target = $region105
    $region104: #{tpu_custom_call.1} parent=1 // pred_region
      %225 = dma.done [#allocation12], 16
    $region105: #{tpu_custom_call.1} parent=1 // pred_fallthru
      _
    // Predicated region
    $region106: #{tpu_custom_call.1} parent=1 // pred_check
      _
    $region107: #{tpu_custom_call.1} parent=1 // pred_check_branch
      %227 = sbr.rel (0) target = $region109
    $region108: #{tpu_custom_call.1} parent=1 // pred_region
      %229 = dma.done [#allocation15], 16
    $region109: #{tpu_custom_call.1} parent=1 // pred_fallthru
      _
    // Predicated region
    $region110: #{tpu_custom_call.1} parent=1 // pred_check
      _
    $region111: #{tpu_custom_call.1} parent=1 // pred_check_branch
      %231 = sbr.rel (0) target = $region113
    $region112: #{tpu_custom_call.1} parent=1 // pred_region
      %233 = dma.done [#allocation15], 512
    $region113: #{tpu_custom_call.1} parent=1 // pred_fallthru
      _
    // Predicated region
    $region114: #{tpu_custom_call.1} parent=1 // pred_check
      _
    $region115: #{tpu_custom_call.1} parent=1 // pred_check_branch
      %235 = sbr.rel (0) target = $region117
    $region116: #{tpu_custom_call.1} parent=1 // pred_region
      %237 = dma.done [#allocation18], 512
    $region117: #{tpu_custom_call.1} parent=1 // pred_fallthru
      _
    // Predicated region
    $region118: #{tpu_custom_call.1} parent=1 // pred_check
      _
    $region119: #{tpu_custom_call.1} parent=1 // pred_check_branch
      %239 = sbr.rel (0) target = $region121
    $region120: #{tpu_custom_call.1} parent=1 // pred_region
      %241 = dma.done [#allocation18], 16
    $region121: #{tpu_custom_call.1} parent=1 // pred_fallthru
      _
    // Predicated region
    $region122: #{tpu_custom_call.1} parent=1 // pred_check
      _
    $region123: #{tpu_custom_call.1} parent=1 // pred_check_branch
      %243 = sbr.rel (0) target = $region125
    $region124: #{tpu_custom_call.1} parent=1 // pred_region
      %245 = dma.done [#allocation21], 16
    $region125: #{tpu_custom_call.1} parent=1 // pred_fallthru
      _
    // Predicated region
    $region126: #{tpu_custom_call.1} parent=1 // pred_check
      _
    $region127: #{tpu_custom_call.1} parent=1 // pred_check_branch
      %247 = sbr.rel (0) target = $region129
    $region128: #{tpu_custom_call.1} parent=1 // pred_region
      %249 = dma.done [#allocation21], 16
    $region129: #{tpu_custom_call.1} parent=1 // pred_fallthru
      _
    %v250 = vld [vmem:[#allocation5] sm:$0xff]
    %v251 = vld [vmem:[#allocation7] sm:$0xff]
    %v252 = vld [vmem:[%s5] sm:$0xff]
    %v253 = vld [vmem:[%s5 + $0x8] sm:$0xff]
    %v254 = vld [vmem:[%s5 + $0x10] sm:$0xff]
    %v255 = vld [vmem:[%s5 + $0x18] sm:$0xff]
    %v256 = vld [vmem:[#allocation11] sm:$0x1]
    %v257 = vld [vmem:[%s7] sm:$0xff]
    %v258 = vld [vmem:[%s7 + $0x8] sm:$0xff]
    %v259 = vld [vmem:[%s7 + $0x10] sm:$0xff]
    %v260 = vld [vmem:[%s7 + $0x18] sm:$0xff]
    %v261 = vld [vmem:[%s7 + $0x20] sm:$0xff]
    %v262 = vld [vmem:[%s7 + $0x28] sm:$0xff]
    %v263 = vld [vmem:[%s7 + $0x30] sm:$0xff]
    %v264 = vld [vmem:[%s7 + $0x38] sm:$0xff]
    %v265 = vld [vmem:[%s7 + $0x40] sm:$0xff]
    %v266 = vld [vmem:[%s7 + $0x48] sm:$0xff]
    %v267 = vld [vmem:[%s8] sm:$0xff]
    %v268 = vld [vmem:[%s8 + $0x8] sm:$0xff]
    %v269 = vld [vmem:[%s8 + $0x10] sm:$0xff]
    %v270 = vld [vmem:[%s8 + $0x18] sm:$0xff]
    %v271 = vld [vmem:[#allocation13] sm:$0x1]
    %v272 = vld [vmem:[#allocation14] sm:$0x1]
    %v273 = vld [vmem:[#allocation16] sm:$0xff]
    %v274 = vld [vmem:[#allocation16 + $0x8] sm:$0xff]
    %v275 = vld [vmem:[#allocation16 + $0x10] sm:$0xff]
    %v276 = vld [vmem:[#allocation16 + $0x18] sm:$0xff]
    %v277 = vld [vmem:[#allocation17] sm:$0xff]
    %v278 = vld [vmem:[#allocation17 + $0x8] sm:$0xff]
    %v279 = vld [vmem:[#allocation17 + $0x10] sm:$0xff]
    %v280 = vld [vmem:[#allocation17 + $0x18] sm:$0xff]
    %v281 = vld [vmem:[#allocation19] sm:$0x1]
    %v282 = vld [vmem:[#allocation20] sm:$0x1]
    %v283 = vld [vmem:[%s15] sm:$0xff]
    %v284 = vld [vmem:[%s15 + $0x8] sm:$0xff]
    %v285 = vld [vmem:[%s15 + $0x10] sm:$0xff]
    %v286 = vld [vmem:[%s15 + $0x18] sm:$0xff]
    %v287 = vld [vmem:[%s15 + $0x20] sm:$0xff]
    %v288 = vld [vmem:[%s15 + $0x28] sm:$0xff]
    %v289 = vld [vmem:[%s15 + $0x30] sm:$0xff]
    %v290 = vld [vmem:[%s15 + $0x38] sm:$0xff]
    %v291 = vld [vmem:[%s15 + $0x40] sm:$0xff]
    %v292 = vld [vmem:[%s15 + $0x48] sm:$0xff]
    %v293 = vld [vmem:[%s15 + $0x50] sm:$0xff]
    %v294 = vld [vmem:[%s15 + $0x58] sm:$0xff]
    %v295 = vld [vmem:[#allocation22] sm:$0x1]
    %v296 = vld [vmem:[%s17] sm:$0xff]
    %v297 = vld [vmem:[%s17 + $0x8] sm:$0xff]
    %v298 = vld [vmem:[%s17 + $0x10] sm:$0xff]
    %v299 = vld [vmem:[%s17 + $0x18] sm:$0xff]
    %v300 = vld [vmem:[%s18] sm:$0x1]
    %v301 = vld [vmem:[#allocation8] sm:$0x1]
    %v302 = vld [vmem:[#allocation10] sm:$0x1]
    %v303 = vld [vmem:[#allocation2] sm:$0x1]
    %vm304 = vcmask 261120
    %v306 = vsel %vm304, %v301, 0
    %308 = vmatpush.msra.mxu0 0.0
    %309 = vmatpush.msra.mxu0 0.0
    %310 = vmatpush.msra.mxu0 0.0
    %311 = vmatpush.msra.mxu0 0.0
    %312 = vmatpush.msra.mxu0 0.0
    %313 = vmatpush.msra.mxu0 0.0
    %314 = vmatpush.msra.mxu0 0.0
    %315 = vmatpush.msra.mxu0 0.0
    %316 = vmatpush.msra.mxu0 0.0
    %317 = vmatpush.msra.mxu0 0.0
    %318 = vmatpush.msra.mxu0 0.0
    %319 = vmatpush.msra.mxu0 0.0
    %320 = vmatpush.msra.mxu0 %v255
    %321 = vmatpush.msra.mxu0 %v254
    %322 = vmatpush.msra.mxu0 %v253
    %323 = vmatpush.msra.mxu0 %v252
    %324 = vmatmul.f32.gmra.mxu0 %v306
    %v325 = vpop.f32.mrf.mxu0
    %v326 = vadd.f32 0.0, %v325
    %327 = vdwg.mxu0
    %v328 = vperm.slane %v326, 0
    %v329 = vadd.f32 %v328, %v250
    %v330 = vtanh.pop %v329
    %v332 = vsel %vm304, %v256, 0
    %v335 = vsel %vm304, %v330, 0
    %337 = vmatpush.xpose.msra.mxu0 0.0
    %338 = vmatpush.xpose.msra.mxu0 0.0
    %339 = vmatpush.xpose.msra.mxu0 0.0
    %340 = vmatpush.xpose.msra.mxu0 0.0
    %341 = vmatpush.xpose.msra.mxu0 0.0
    %342 = vmatpush.xpose.msra.mxu0 0.0
    %343 = vmatpush.xpose.msra.mxu0 0.0
    %344 = vmatpush.xpose.msra.mxu0 0.0
    %345 = vmatpush.xpose.msra.mxu0 0.0
    %346 = vmatpush.xpose.msra.mxu0 0.0
    %347 = vmatpush.xpose.msra.mxu0 0.0
    %348 = vmatpush.xpose.msra.mxu0 0.0
    %349 = vmatpush.xpose.msra.mxu0 0.0
    %350 = vmatpush.xpose.msra.mxu0 0.0
    %351 = vmatpush.xpose.msra.mxu0 0.0
    %352 = vmatpush.xpose.msra.mxu0 %v335
    %353 = vmatmul.f32.gmra.mxu0 %v332
    %v354 = vpop.f32.mrf.mxu0
    %v355 = vadd.f32 0.0, %v354
    %356 = vdwg.mxu0
    %vm357 = vcmask 57344
    %v358 = vsel %vm357, %v355, -inf
    %359 = vmax.xlane.f32.xlu0 %v358
    %v360 = vpop.xlane.xlu0 %359
    %v361 = vsub.f32 %v355, %v360
    %v362 = vmul.f32 %v361, 1.442695
    %v363 = vpow.pop %v362
    %v364 = vsel %vm357, %v363, 0.0
    %365 = vadd.xlane.f32.xlu0 %v364
    %v366 = vpop.xlane.xlu0 %365
    %v367 = vrcp.pop %v366
    %v368 = vmul.f32 %v363, %v367
    %vm369 = vcmask 64512
    %v371 = vsel %vm369, %v368, 0
    %373 = vmatpush.msra.mxu0 0.0
    %374 = vmatpush.msra.mxu0 0.0
    %375 = vmatpush.msra.mxu0 0.0
    %376 = vmatpush.msra.mxu0 0.0
    %377 = vmatpush.msra.mxu0 0.0
    %378 = vmatpush.msra.mxu0 0.0
    %379 = vmatpush.msra.mxu0 0.0
    %380 = vmatpush.msra.mxu0 0.0
    %381 = vmatpush.msra.mxu0 0.0
    %382 = vmatpush.msra.mxu0 0.0
    %383 = vmatpush.msra.mxu0 0.0
    %384 = vmatpush.msra.mxu0 0.0
    %385 = vmatpush.msra.mxu0 0.0
    %386 = vmatpush.msra.mxu0 0.0
    %387 = vmatpush.msra.mxu0 0.0
    %388 = vmatpush.msra.mxu0 %v251
    %389 = vmatmul.f32.gmra.mxu0 %v371
    %v390 = vpop.f32.mrf.mxu0
    %v391 = vadd.f32 0.0, %v390
    %392 = vdwg.mxu0
    %394 = vrot.lane.b32.xlu0 %v391, 16
    %v395 = vpop.permute.xlu0 %394
    %vm397 = vcmask 130048
    %v398 = vsel %vm397, %v303, %v395
    %vm399 = vcmask 654336
    %v401 = vsel %vm399, %v398, 0
    %403 = vmatpush.msra.mxu0 0.0
    %404 = vmatpush.msra.mxu0 0.0
    %405 = vmatpush.msra.mxu0 0.0
    %406 = vmatpush.msra.mxu0 0.0
    %407 = vmatpush.msra.mxu0 0.0
    %408 = vmatpush.msra.mxu0 0.0
    %409 = vmatpush.msra.mxu0 %v266
    %410 = vmatpush.msra.mxu0 %v265
    %411 = vmatpush.msra.mxu0 %v264
    %412 = vmatpush.msra.mxu0 %v263
    %413 = vmatpush.msra.mxu0 %v262
    %414 = vmatpush.msra.mxu0 %v261
    %415 = vmatpush.msra.mxu0 %v260
    %416 = vmatpush.msra.mxu0 %v259
    %417 = vmatpush.msra.mxu0 %v258
    %418 = vmatpush.msra.mxu0 %v257
    %419 = vmatmul.f32.gmra.mxu0 %v401
    %v420 = vpop.f32.mrf.mxu0
    %v421 = vadd.f32 %v271, %v420
    %422 = vdwg.mxu0
    %423 = vmatpush.msra.mxu0 0.0
    %424 = vmatpush.msra.mxu0 0.0
    %425 = vmatpush.msra.mxu0 0.0
    %426 = vmatpush.msra.mxu0 0.0
    %427 = vmatpush.msra.mxu0 0.0
    %428 = vmatpush.msra.mxu0 0.0
    %429 = vmatpush.msra.mxu0 0.0
    %430 = vmatpush.msra.mxu0 0.0
    %431 = vmatpush.msra.mxu0 0.0
    %432 = vmatpush.msra.mxu0 0.0
    %433 = vmatpush.msra.mxu0 0.0
    %434 = vmatpush.msra.mxu0 0.0
    %435 = vmatpush.msra.mxu0 %v270
    %436 = vmatpush.msra.mxu0 %v269
    %437 = vmatpush.msra.mxu0 %v268
    %438 = vmatpush.msra.mxu0 %v267
    %439 = vmatmul.f32.gmra.mxu0 %v306
    %v440 = vpop.f32.mrf.mxu0
    %v441 = vadd.f32 %v272, %v440
    %442 = vdwg.mxu0
    %v443 = vadd.f32 %v421, %v441
    %v444 = vxor.u32 %v443, 2147483648
    %v445 = vmul.f32 %v444, 1.442695
    %v446 = vpow.pop %v445
    %v447 = vadd.f32 %v446, 1.0
    %v448 = vrcp.pop %v447
    %v449 = vmul.f32 %v447, %v448
    %v450 = vsub.f32 1.0, %v449
    %v451 = vmul.f32 %v448, %v450
    %v452 = vadd.f32 %v448, %v451
    %vm453 = vweird.f32 %v447
    %vm454 = vweird.f32 %v448
    %vm455 = vmor %vm453, %vm454
    %v456 = vsel %vm455, %v448, %v452
    %v457 = vand.u32 2147483647, %v447
    %vm458 = vcmp.eq.f32.partialorder %v457, 8.507059e+37
    %v459 = vand.u32 %v447, 2147483648
    %v460 = vor.u32 1.1754944e-38, %v459
    %v461 = vsel %vm458, %v460, %v456
    %v462 = vmul.f32 1.0, %v461
    %464 = vrot.lane.b32.xlu0 %v441, 64
    %v465 = vpop.permute.xlu0 %464
    %v467 = vmul.f32 %v462, %v465
    %469 = vrot.lane.b32.xlu0 %v467, 64
    %v470 = vpop.permute.xlu0 %469
    %v472 = vadd.f32 %v421, %v470
    %v473 = vtanh.pop %v472
    %v474 = vsub.f32 1.0, %v462
    %476 = vrot.lane.b32.xlu0 %v473, 96
    %v477 = vpop.permute.xlu0 %476
    %v479 = vmul.f32 %v474, %v477
    %v480 = vperm.slane %v301, 0
    %481 = vrot.lane.b32.xlu0 %v480, 32
    %v482 = vpop.permute.xlu0 %481
    %v484 = vmul.f32 %v462, %v482
    %v485 = vadd.f32 %v479, %v484
    %vm486 = vcmp.ge.f32.partialorder %v485, 0.0
    %v487 = vmul.f32 %v485, 0.01
    %v488 = vsel %vm486, %v485, %v487
    %490 = vrot.lane.b32.xlu0 %v488, 96
    %v491 = vpop.permute.xlu0 %490
    %v492 = vsel %vm304, %v491, 0
    %494 = vmatpush.msra.mxu0 0.0
    %495 = vmatpush.msra.mxu0 0.0
    %496 = vmatpush.msra.mxu0 0.0
    %497 = vmatpush.msra.mxu0 0.0
    %498 = vmatpush.msra.mxu0 0.0
    %499 = vmatpush.msra.mxu0 0.0
    %500 = vmatpush.msra.mxu0 0.0
    %501 = vmatpush.msra.mxu0 0.0
    %502 = vmatpush.msra.mxu0 0.0
    %503 = vmatpush.msra.mxu0 0.0
    %504 = vmatpush.msra.mxu0 0.0
    %505 = vmatpush.msra.mxu0 0.0
    %506 = vmatpush.msra.mxu0 %v276
    %507 = vmatpush.msra.mxu0 %v275
    %508 = vmatpush.msra.mxu0 %v274
    %509 = vmatpush.msra.mxu0 %v273
    %510 = vmatmul.f32.gmra.mxu0 %v492
    %v511 = vpop.f32.mrf.mxu0
    %v512 = vadd.f32 %v281, %v511
    %513 = vdwg.mxu0
    %v515 = vsel %vm304, %v302, 0
    %517 = vmatpush.msra.mxu0 0.0
    %518 = vmatpush.msra.mxu0 0.0
    %519 = vmatpush.msra.mxu0 0.0
    %520 = vmatpush.msra.mxu0 0.0
    %521 = vmatpush.msra.mxu0 0.0
    %522 = vmatpush.msra.mxu0 0.0
    %523 = vmatpush.msra.mxu0 0.0
    %524 = vmatpush.msra.mxu0 0.0
    %525 = vmatpush.msra.mxu0 0.0
    %526 = vmatpush.msra.mxu0 0.0
    %527 = vmatpush.msra.mxu0 0.0
    %528 = vmatpush.msra.mxu0 0.0
    %529 = vmatpush.msra.mxu0 %v280
    %530 = vmatpush.msra.mxu0 %v279
    %531 = vmatpush.msra.mxu0 %v278
    %532 = vmatpush.msra.mxu0 %v277
    %533 = vmatmul.f32.gmra.mxu0 %v515
    %v534 = vpop.f32.mrf.mxu0
    %v535 = vadd.f32 %v282, %v534
    %536 = vdwg.mxu0
    %v537 = vadd.f32 %v512, %v535
    %v538 = vxor.u32 %v537, 2147483648
    %v539 = vmul.f32 %v538, 1.442695
    %v540 = vpow.pop %v539
    %v541 = vadd.f32 %v540, 1.0
    %v542 = vrcp.pop %v541
    %v543 = vmul.f32 %v541, %v542
    %v544 = vsub.f32 1.0, %v543
    %v545 = vmul.f32 %v542, %v544
    %v546 = vadd.f32 %v542, %v545
    %vm547 = vweird.f32 %v541
    %vm548 = vweird.f32 %v542
    %vm549 = vmor %vm547, %vm548
    %v550 = vsel %vm549, %v542, %v546
    %v551 = vand.u32 2147483647, %v541
    %vm552 = vcmp.eq.f32.partialorder %v551, 8.507059e+37
    %v553 = vand.u32 %v541, 2147483648
    %v554 = vor.u32 1.1754944e-38, %v553
    %v555 = vsel %vm552, %v554, %v550
    %v556 = vmul.f32 1.0, %v555
    %558 = vrot.lane.b32.xlu0 %v535, 64
    %v559 = vpop.permute.xlu0 %558
    %v561 = vmul.f32 %v556, %v559
    %563 = vrot.lane.b32.xlu0 %v561, 64
    %v564 = vpop.permute.xlu0 %563
    %v566 = vadd.f32 %v512, %v564
    %v567 = vtanh.pop %v566
    %v568 = vsub.f32 1.0, %v556
    %570 = vrot.lane.b32.xlu0 %v567, 96
    %v571 = vpop.permute.xlu0 %570
    %v573 = vmul.f32 %v568, %v571
    %v574 = vperm.slane %v302, 0
    %575 = vrot.lane.b32.xlu0 %v574, 32
    %v576 = vpop.permute.xlu0 %575
    %v578 = vmul.f32 %v556, %v576
    %v579 = vadd.f32 %v573, %v578
    %vm580 = vcmp.ge.f32.partialorder %v579, 0.0
    %v581 = vmul.f32 %v579, 0.01
    %v582 = vsel %vm580, %v579, %v581
    %584 = vrot.lane.b32.xlu0 %v582, 96
    %v585 = vpop.permute.xlu0 %584
    %587 = vrot.lane.b32.xlu0 %v391, 32
    %v588 = vpop.permute.xlu0 %587
    %v590 = vsel %vm304, %v585, %v588
    %vm591 = vcmask 785408
    %v593 = vsel %vm591, %v590, 0
    %595 = vmatpush.msra.mxu0 0.0
    %596 = vmatpush.msra.mxu0 0.0
    %597 = vmatpush.msra.mxu0 0.0
    %598 = vmatpush.msra.mxu0 0.0
    %599 = vmatpush.msra.mxu0 %v294
    %600 = vmatpush.msra.mxu0 %v293
    %601 = vmatpush.msra.mxu0 %v292
    %602 = vmatpush.msra.mxu0 %v291
    %603 = vmatpush.msra.mxu0 %v290
    %604 = vmatpush.msra.mxu0 %v289
    %605 = vmatpush.msra.mxu0 %v288
    %606 = vmatpush.msra.mxu0 %v287
    %607 = vmatpush.msra.mxu0 %v286
    %608 = vmatpush.msra.mxu0 %v285
    %609 = vmatpush.msra.mxu0 %v284
    %610 = vmatpush.msra.mxu0 %v283
    %611 = vmatmul.f32.gmra.mxu0 %v593
    %v612 = vpop.f32.mrf.mxu0
    %v613 = vadd.f32 %v295, %v612
    %614 = vdwg.mxu0
    %vm615 = vcmp.ge.f32.partialorder %v613, 0.0
    %v616 = vmul.f32 %v613, 0.01
    %v617 = vsel %vm615, %v613, %v616
    %v618 = vsel %vm304, %v585, 0
    %620 = vmatpush.msra.mxu0 0.0
    %621 = vmatpush.msra.mxu0 0.0
    %622 = vmatpush.msra.mxu0 0.0
    %623 = vmatpush.msra.mxu0 0.0
    %624 = vmatpush.msra.mxu0 0.0
    %625 = vmatpush.msra.mxu0 0.0
    %626 = vmatpush.msra.mxu0 0.0
    %627 = vmatpush.msra.mxu0 0.0
    %628 = vmatpush.msra.mxu0 0.0
    %629 = vmatpush.msra.mxu0 0.0
    %630 = vmatpush.msra.mxu0 0.0
    %631 = vmatpush.msra.mxu0 0.0
    %632 = vmatpush.msra.mxu0 %v299
    %633 = vmatpush.msra.mxu0 %v298
    %634 = vmatpush.msra.mxu0 %v297
    %635 = vmatpush.msra.mxu0 %v296
    %636 = vmatmul.f32.gmra.mxu0 %v618
    %v637 = vpop.f32.mrf.mxu0
    %v638 = vadd.f32 %v300, %v637
    %639 = vdwg.mxu0
    %vm640 = vcmask 122880
    %641 = vst.msk [vmem:[#allocation23] sm:$0x1] %vm640, %v638
    %vm642 = vcmask 253952
    %643 = vst.msk [vmem:[#allocation24] sm:$0x1] %vm642, %v617
    %644 = vst.msk [vmem:[#allocation26] sm:$0x1] %vm357, %v368
    %v645 = vld [vmem:[#allocation2 + $0x1] sm:$0x1]
    %647 = vrot.lane.b32.xlu0 %v485, 96
    %v648 = vpop.permute.xlu0 %647
    %v649 = vsel %vm304, %v648, 0
    %651 = vmatpush.msra.mxu0 0.0
    %652 = vmatpush.msra.mxu0 0.0
    %653 = vmatpush.msra.mxu0 0.0
    %654 = vmatpush.msra.mxu0 0.0
    %655 = vmatpush.msra.mxu0 0.0
    %656 = vmatpush.msra.mxu0 0.0
    %657 = vmatpush.msra.mxu0 0.0
    %658 = vmatpush.msra.mxu0 0.0
    %659 = vmatpush.msra.mxu0 0.0
    %660 = vmatpush.msra.mxu0 0.0
    %661 = vmatpush.msra.mxu0 0.0
    %662 = vmatpush.msra.mxu0 0.0
    %663 = vmatpush.msra.mxu0 %v255
    %664 = vmatpush.msra.mxu0 %v254
    %665 = vmatpush.msra.mxu0 %v253
    %666 = vmatpush.msra.mxu0 %v252
    %667 = vmatmul.f32.gmra.mxu0 %v649
    %v668 = vpop.f32.mrf.mxu0
    %v669 = vadd.f32 0.0, %v668
    %670 = vdwg.mxu0
    %v671 = vperm.slane %v669, 0
    %v672 = vadd.f32 %v671, %v250
    %v673 = vtanh.pop %v672
    %v675 = vsel %vm304, %v673, 0
    %677 = vmatpush.xpose.msra.mxu0 0.0
    %678 = vmatpush.xpose.msra.mxu0 0.0
    %679 = vmatpush.xpose.msra.mxu0 0.0
    %680 = vmatpush.xpose.msra.mxu0 0.0
    %681 = vmatpush.xpose.msra.mxu0 0.0
    %682 = vmatpush.xpose.msra.mxu0 0.0
    %683 = vmatpush.xpose.msra.mxu0 0.0
    %684 = vmatpush.xpose.msra.mxu0 0.0
    %685 = vmatpush.xpose.msra.mxu0 0.0
    %686 = vmatpush.xpose.msra.mxu0 0.0
    %687 = vmatpush.xpose.msra.mxu0 0.0
    %688 = vmatpush.xpose.msra.mxu0 0.0
    %689 = vmatpush.xpose.msra.mxu0 0.0
    %690 = vmatpush.xpose.msra.mxu0 0.0
    %691 = vmatpush.xpose.msra.mxu0 0.0
    %692 = vmatpush.xpose.msra.mxu0 %v675
    %693 = vmatmul.f32.gmra.mxu0 %v332
    %v694 = vpop.f32.mrf.mxu0
    %v695 = vadd.f32 0.0, %v694
    %696 = vdwg.mxu0
    %v697 = vsel %vm357, %v695, -inf
    %698 = vmax.xlane.f32.xlu0 %v697
    %v699 = vpop.xlane.xlu0 %698
    %v700 = vsub.f32 %v695, %v699
    %v701 = vmul.f32 %v700, 1.442695
    %v702 = vpow.pop %v701
    %v703 = vsel %vm357, %v702, 0.0
    %704 = vadd.xlane.f32.xlu0 %v703
    %v705 = vpop.xlane.xlu0 %704
    %v706 = vrcp.pop %v705
    %v707 = vmul.f32 %v702, %v706
    %v709 = vsel %vm369, %v707, 0
    %711 = vmatpush.msra.mxu0 0.0
    %712 = vmatpush.msra.mxu0 0.0
    %713 = vmatpush.msra.mxu0 0.0
    %714 = vmatpush.msra.mxu0 0.0
    %715 = vmatpush.msra.mxu0 0.0
    %716 = vmatpush.msra.mxu0 0.0
    %717 = vmatpush.msra.mxu0 0.0
    %718 = vmatpush.msra.mxu0 0.0
    %719 = vmatpush.msra.mxu0 0.0
    %720 = vmatpush.msra.mxu0 0.0
    %721 = vmatpush.msra.mxu0 0.0
    %722 = vmatpush.msra.mxu0 0.0
    %723 = vmatpush.msra.mxu0 0.0
    %724 = vmatpush.msra.mxu0 0.0
    %725 = vmatpush.msra.mxu0 0.0
    %726 = vmatpush.msra.mxu0 %v251
    %727 = vmatmul.f32.gmra.mxu0 %v709
    %v728 = vpop.f32.mrf.mxu0
    %v729 = vadd.f32 0.0, %v728
    %730 = vdwg.mxu0
    %732 = vrot.lane.b32.xlu0 %v729, 16
    %v733 = vpop.permute.xlu0 %732
    %v735 = vsel %vm397, %v645, %v733
    %v737 = vsel %vm399, %v735, 0
    %739 = vmatpush.msra.mxu0 0.0
    %740 = vmatpush.msra.mxu0 0.0
    %741 = vmatpush.msra.mxu0 0.0
    %742 = vmatpush.msra.mxu0 0.0
    %743 = vmatpush.msra.mxu0 0.0
    %744 = vmatpush.msra.mxu0 0.0
    %745 = vmatpush.msra.mxu0 %v266
    %746 = vmatpush.msra.mxu0 %v265
    %747 = vmatpush.msra.mxu0 %v264
    %748 = vmatpush.msra.mxu0 %v263
    %749 = vmatpush.msra.mxu0 %v262
    %750 = vmatpush.msra.mxu0 %v261
    %751 = vmatpush.msra.mxu0 %v260
    %752 = vmatpush.msra.mxu0 %v259
    %753 = vmatpush.msra.mxu0 %v258
    %754 = vmatpush.msra.mxu0 %v257
    %755 = vmatmul.f32.gmra.mxu0 %v737
    %v756 = vpop.f32.mrf.mxu0
    %v757 = vadd.f32 %v271, %v756
    %758 = vdwg.mxu0
    %759 = vmatpush.msra.mxu0 0.0
    %760 = vmatpush.msra.mxu0 0.0
    %761 = vmatpush.msra.mxu0 0.0
    %762 = vmatpush.msra.mxu0 0.0
    %763 = vmatpush.msra.mxu0 0.0
    %764 = vmatpush.msra.mxu0 0.0
    %765 = vmatpush.msra.mxu0 0.0
    %766 = vmatpush.msra.mxu0 0.0
    %767 = vmatpush.msra.mxu0 0.0
    %768 = vmatpush.msra.mxu0 0.0
    %769 = vmatpush.msra.mxu0 0.0
    %770 = vmatpush.msra.mxu0 0.0
    %771 = vmatpush.msra.mxu0 %v270
    %772 = vmatpush.msra.mxu0 %v269
    %773 = vmatpush.msra.mxu0 %v268
    %774 = vmatpush.msra.mxu0 %v267
    %775 = vmatmul.f32.gmra.mxu0 %v649
    %v776 = vpop.f32.mrf.mxu0
    %v777 = vadd.f32 %v272, %v776
    %778 = vdwg.mxu0
    %v779 = vadd.f32 %v757, %v777
    %v780 = vxor.u32 %v779, 2147483648
    %v781 = vmul.f32 %v780, 1.442695
    %v782 = vpow.pop %v781
    %v783 = vadd.f32 %v782, 1.0
    %v784 = vrcp.pop %v783
    %v785 = vmul.f32 %v783, %v784
    %v786 = vsub.f32 1.0, %v785
    %v787 = vmul.f32 %v784, %v786
    %v788 = vadd.f32 %v784, %v787
    %vm789 = vweird.f32 %v783
    %vm790 = vweird.f32 %v784
    %vm791 = vmor %vm789, %vm790
    %v792 = vsel %vm791, %v784, %v788
    %v793 = vand.u32 2147483647, %v783
    %vm794 = vcmp.eq.f32.partialorder %v793, 8.507059e+37
    %v795 = vand.u32 %v783, 2147483648
    %v796 = vor.u32 1.1754944e-38, %v795
    %v797 = vsel %vm794, %v796, %v792
    %v798 = vmul.f32 1.0, %v797
    %800 = vrot.lane.b32.xlu0 %v777, 64
    %v801 = vpop.permute.xlu0 %800
    %v803 = vmul.f32 %v798, %v801
    %805 = vrot.lane.b32.xlu0 %v803, 64
    %v806 = vpop.permute.xlu0 %805
    %v808 = vadd.f32 %v757, %v806
    %v809 = vtanh.pop %v808
    %v810 = vsub.f32 1.0, %v798
    %812 = vrot.lane.b32.xlu0 %v809, 96
    %v813 = vpop.permute.xlu0 %812
    %v815 = vmul.f32 %v810, %v813
    %v816 = vmul.f32 %v798, %v485
    %v817 = vadd.f32 %v815, %v816
    %vm818 = vcmp.ge.f32.partialorder %v817, 0.0
    %v819 = vmul.f32 %v817, 0.01
    %v820 = vsel %vm818, %v817, %v819
    %822 = vrot.lane.b32.xlu0 %v820, 96
    %v823 = vpop.permute.xlu0 %822
    %v824 = vsel %vm304, %v823, 0
    %826 = vmatpush.msra.mxu0 0.0
    %827 = vmatpush.msra.mxu0 0.0
    %828 = vmatpush.msra.mxu0 0.0
    %829 = vmatpush.msra.mxu0 0.0
    %830 = vmatpush.msra.mxu0 0.0
    %831 = vmatpush.msra.mxu0 0.0
    %832 = vmatpush.msra.mxu0 0.0
    %833 = vmatpush.msra.mxu0 0.0
    %834 = vmatpush.msra.mxu0 0.0
    %835 = vmatpush.msra.mxu0 0.0
    %836 = vmatpush.msra.mxu0 0.0
    %837 = vmatpush.msra.mxu0 0.0
    %838 = vmatpush.msra.mxu0 %v276
    %839 = vmatpush.msra.mxu0 %v275
    %840 = vmatpush.msra.mxu0 %v274
    %841 = vmatpush.msra.mxu0 %v273
    %842 = vmatmul.f32.gmra.mxu0 %v824
    %v843 = vpop.f32.mrf.mxu0
    %v844 = vadd.f32 %v281, %v843
    %845 = vdwg.mxu0
    %847 = vrot.lane.b32.xlu0 %v579, 96
    %v848 = vpop.permute.xlu0 %847
    %v849 = vsel %vm304, %v848, 0
    %851 = vmatpush.msra.mxu0 0.0
    %852 = vmatpush.msra.mxu0 0.0
    %853 = vmatpush.msra.mxu0 0.0
    %854 = vmatpush.msra.mxu0 0.0
    %855 = vmatpush.msra.mxu0 0.0
    %856 = vmatpush.msra.mxu0 0.0
    %857 = vmatpush.msra.mxu0 0.0
    %858 = vmatpush.msra.mxu0 0.0
    %859 = vmatpush.msra.mxu0 0.0
    %860 = vmatpush.msra.mxu0 0.0
    %861 = vmatpush.msra.mxu0 0.0
    %862 = vmatpush.msra.mxu0 0.0
    %863 = vmatpush.msra.mxu0 %v280
    %864 = vmatpush.msra.mxu0 %v279
    %865 = vmatpush.msra.mxu0 %v278
    %866 = vmatpush.msra.mxu0 %v277
    %867 = vmatmul.f32.gmra.mxu0 %v849
    %v868 = vpop.f32.mrf.mxu0
    %v869 = vadd.f32 %v282, %v868
    %870 = vdwg.mxu0
    %v871 = vadd.f32 %v844, %v869
    %v872 = vxor.u32 %v871, 2147483648
    %v873 = vmul.f32 %v872, 1.442695
    %v874 = vpow.pop %v873
    %v875 = vadd.f32 %v874, 1.0
    %v876 = vrcp.pop %v875
    %v877 = vmul.f32 %v875, %v876
    %v878 = vsub.f32 1.0, %v877
    %v879 = vmul.f32 %v876, %v878
    %v880 = vadd.f32 %v876, %v879
    %vm881 = vweird.f32 %v875
    %vm882 = vweird.f32 %v876
    %vm883 = vmor %vm881, %vm882
    %v884 = vsel %vm883, %v876, %v880
    %v885 = vand.u32 2147483647, %v875
    %vm886 = vcmp.eq.f32.partialorder %v885, 8.507059e+37
    %v887 = vand.u32 %v875, 2147483648
    %v888 = vor.u32 1.1754944e-38, %v887
    %v889 = vsel %vm886, %v888, %v884
    %v890 = vmul.f32 1.0, %v889
    %892 = vrot.lane.b32.xlu0 %v869, 64
    %v893 = vpop.permute.xlu0 %892
    %v895 = vmul.f32 %v890, %v893
    %897 = vrot.lane.b32.xlu0 %v895, 64
    %v898 = vpop.permute.xlu0 %897
    %v900 = vadd.f32 %v844, %v898
    %v901 = vtanh.pop %v900
    %v902 = vsub.f32 1.0, %v890
    %904 = vrot.lane.b32.xlu0 %v901, 96
    %v905 = vpop.permute.xlu0 %904
    %v907 = vmul.f32 %v902, %v905
    %v908 = vmul.f32 %v890, %v579
    %v909 = vadd.f32 %v907, %v908
    %vm910 = vcmp.ge.f32.partialorder %v909, 0.0
    %v911 = vmul.f32 %v909, 0.01
    %v912 = vsel %vm910, %v909, %v911
    %914 = vrot.lane.b32.xlu0 %v912, 96
    %v915 = vpop.permute.xlu0 %914
    %917 = vrot.lane.b32.xlu0 %v729, 32
    %v918 = vpop.permute.xlu0 %917
    %v920 = vsel %vm304, %v915, %v918
    %v922 = vsel %vm591, %v920, 0
    %924 = vmatpush.msra.mxu0 0.0
    %925 = vmatpush.msra.mxu0 0.0
    %926 = vmatpush.msra.mxu0 0.0
    %927 = vmatpush.msra.mxu0 0.0
    %928 = vmatpush.msra.mxu0 %v294
    %929 = vmatpush.msra.mxu0 %v293
    %930 = vmatpush.msra.mxu0 %v292
    %931 = vmatpush.msra.mxu0 %v291
    %932 = vmatpush.msra.mxu0 %v290
    %933 = vmatpush.msra.mxu0 %v289
    %934 = vmatpush.msra.mxu0 %v288
    %935 = vmatpush.msra.mxu0 %v287
    %936 = vmatpush.msra.mxu0 %v286
    %937 = vmatpush.msra.mxu0 %v285
    %938 = vmatpush.msra.mxu0 %v284
    %939 = vmatpush.msra.mxu0 %v283
    %940 = vmatmul.f32.gmra.mxu0 %v922
    %v941 = vpop.f32.mrf.mxu0
    %v942 = vadd.f32 %v295, %v941
    %943 = vdwg.mxu0
    %vm944 = vcmp.ge.f32.partialorder %v942, 0.0
    %v945 = vmul.f32 %v942, 0.01
    %v946 = vsel %vm944, %v942, %v945
    %v947 = vsel %vm304, %v915, 0
    %949 = vmatpush.msra.mxu0 0.0
    %950 = vmatpush.msra.mxu0 0.0
    %951 = vmatpush.msra.mxu0 0.0
    %952 = vmatpush.msra.mxu0 0.0
    %953 = vmatpush.msra.mxu0 0.0
    %954 = vmatpush.msra.mxu0 0.0
    %955 = vmatpush.msra.mxu0 0.0
    %956 = vmatpush.msra.mxu0 0.0
    %957 = vmatpush.msra.mxu0 0.0
    %958 = vmatpush.msra.mxu0 0.0
    %959 = vmatpush.msra.mxu0 0.0
    %960 = vmatpush.msra.mxu0 0.0
    %961 = vmatpush.msra.mxu0 %v299
    %962 = vmatpush.msra.mxu0 %v298
    %963 = vmatpush.msra.mxu0 %v297
    %964 = vmatpush.msra.mxu0 %v296
    %965 = vmatmul.f32.gmra.mxu0 %v947
    %v966 = vpop.f32.mrf.mxu0
    %v967 = vadd.f32 %v300, %v966
    %968 = vdwg.mxu0
    %969 = vst.msk [vmem:[#allocation23 + $0x1] sm:$0x1] %vm640, %v967
    %970 = vst.msk [vmem:[#allocation24 + $0x1] sm:$0x1] %vm642, %v946
    %971 = vst.msk [vmem:[#allocation26 + $0x1] sm:$0x1] %vm357, %v707
    %v972 = vld [vmem:[#allocation2 + $0x2] sm:$0x1]
    %974 = vrot.lane.b32.xlu0 %v817, 96
    %v975 = vpop.permute.xlu0 %974
    %v976 = vsel %vm304, %v975, 0
    %978 = vmatpush.msra.mxu0 0.0
    %979 = vmatpush.msra.mxu0 0.0
    %980 = vmatpush.msra.mxu0 0.0
    %981 = vmatpush.msra.mxu0 0.0
    %982 = vmatpush.msra.mxu0 0.0
    %983 = vmatpush.msra.mxu0 0.0
    %984 = vmatpush.msra.mxu0 0.0
    %985 = vmatpush.msra.mxu0 0.0
    %986 = vmatpush.msra.mxu0 0.0
    %987 = vmatpush.msra.mxu0 0.0
    %988 = vmatpush.msra.mxu0 0.0
    %989 = vmatpush.msra.mxu0 0.0
    %990 = vmatpush.msra.mxu0 %v255
    %991 = vmatpush.msra.mxu0 %v254
    %992 = vmatpush.msra.mxu0 %v253
    %993 = vmatpush.msra.mxu0 %v252
    %994 = vmatmul.f32.gmra.mxu0 %v976
    %v995 = vpop.f32.mrf.mxu0
    %v996 = vadd.f32 0.0, %v995
    %997 = vdwg.mxu0
    %v998 = vperm.slane %v996, 0
    %v999 = vadd.f32 %v998, %v250
    %v1000 = vtanh.pop %v999
    %v1002 = vsel %vm304, %v1000, 0
    %1004 = vmatpush.xpose.msra.mxu0 0.0
    %1005 = vmatpush.xpose.msra.mxu0 0.0
    %1006 = vmatpush.xpose.msra.mxu0 0.0
    %1007 = vmatpush.xpose.msra.mxu0 0.0
    %1008 = vmatpush.xpose.msra.mxu0 0.0
    %1009 = vmatpush.xpose.msra.mxu0 0.0
    %1010 = vmatpush.xpose.msra.mxu0 0.0
    %1011 = vmatpush.xpose.msra.mxu0 0.0
    %1012 = vmatpush.xpose.msra.mxu0 0.0
    %1013 = vmatpush.xpose.msra.mxu0 0.0
    %1014 = vmatpush.xpose.msra.mxu0 0.0
    %1015 = vmatpush.xpose.msra.mxu0 0.0
    %1016 = vmatpush.xpose.msra.mxu0 0.0
    %1017 = vmatpush.xpose.msra.mxu0 0.0
    %1018 = vmatpush.xpose.msra.mxu0 0.0
    %1019 = vmatpush.xpose.msra.mxu0 %v1002
    %1020 = vmatmul.f32.gmra.mxu0 %v332
    %v1021 = vpop.f32.mrf.mxu0
    %v1022 = vadd.f32 0.0, %v1021
    %1023 = vdwg.mxu0
    %v1024 = vsel %vm357, %v1022, -inf
    %1025 = vmax.xlane.f32.xlu0 %v1024
    %v1026 = vpop.xlane.xlu0 %1025
    %v1027 = vsub.f32 %v1022, %v1026
    %v1028 = vmul.f32 %v1027, 1.442695
    %v1029 = vpow.pop %v1028
    %v1030 = vsel %vm357, %v1029, 0.0
    %1031 = vadd.xlane.f32.xlu0 %v1030
    %v1032 = vpop.xlane.xlu0 %1031
    %v1033 = vrcp.pop %v1032
    %v1034 = vmul.f32 %v1029, %v1033
    %v1036 = vsel %vm369, %v1034, 0
    %1038 = vmatpush.msra.mxu0 0.0
    %1039 = vmatpush.msra.mxu0 0.0
    %1040 = vmatpush.msra.mxu0 0.0
    %1041 = vmatpush.msra.mxu0 0.0
    %1042 = vmatpush.msra.mxu0 0.0
    %1043 = vmatpush.msra.mxu0 0.0
    %1044 = vmatpush.msra.mxu0 0.0
    %1045 = vmatpush.msra.mxu0 0.0
    %1046 = vmatpush.msra.mxu0 0.0
    %1047 = vmatpush.msra.mxu0 0.0
    %1048 = vmatpush.msra.mxu0 0.0
    %1049 = vmatpush.msra.mxu0 0.0
    %1050 = vmatpush.msra.mxu0 0.0
    %1051 = vmatpush.msra.mxu0 0.0
    %1052 = vmatpush.msra.mxu0 0.0
    %1053 = vmatpush.msra.mxu0 %v251
    %1054 = vmatmul.f32.gmra.mxu0 %v1036
    %v1055 = vpop.f32.mrf.mxu0
    %v1056 = vadd.f32 0.0, %v1055
    %1057 = vdwg.mxu0
    %1059 = vrot.lane.b32.xlu0 %v1056, 16
    %v1060 = vpop.permute.xlu0 %1059
    %v1062 = vsel %vm397, %v972, %v1060
    %v1064 = vsel %vm399, %v1062, 0
    %1066 = vmatpush.msra.mxu0 0.0
    %1067 = vmatpush.msra.mxu0 0.0
    %1068 = vmatpush.msra.mxu0 0.0
    %1069 = vmatpush.msra.mxu0 0.0
    %1070 = vmatpush.msra.mxu0 0.0
    %1071 = vmatpush.msra.mxu0 0.0
    %1072 = vmatpush.msra.mxu0 %v266
    %1073 = vmatpush.msra.mxu0 %v265
    %1074 = vmatpush.msra.mxu0 %v264
    %1075 = vmatpush.msra.mxu0 %v263
    %1076 = vmatpush.msra.mxu0 %v262
    %1077 = vmatpush.msra.mxu0 %v261
    %1078 = vmatpush.msra.mxu0 %v260
    %1079 = vmatpush.msra.mxu0 %v259
    %1080 = vmatpush.msra.mxu0 %v258
    %1081 = vmatpush.msra.mxu0 %v257
    %1082 = vmatmul.f32.gmra.mxu0 %v1064
    %v1083 = vpop.f32.mrf.mxu0
    %v1084 = vadd.f32 %v271, %v1083
    %1085 = vdwg.mxu0
    %1086 = vmatpush.msra.mxu0 0.0
    %1087 = vmatpush.msra.mxu0 0.0
    %1088 = vmatpush.msra.mxu0 0.0
    %1089 = vmatpush.msra.mxu0 0.0
    %1090 = vmatpush.msra.mxu0 0.0
    %1091 = vmatpush.msra.mxu0 0.0
    %1092 = vmatpush.msra.mxu0 0.0
    %1093 = vmatpush.msra.mxu0 0.0
    %1094 = vmatpush.msra.mxu0 0.0
    %1095 = vmatpush.msra.mxu0 0.0
    %1096 = vmatpush.msra.mxu0 0.0
    %1097 = vmatpush.msra.mxu0 0.0
    %1098 = vmatpush.msra.mxu0 %v270
    %1099 = vmatpush.msra.mxu0 %v269
    %1100 = vmatpush.msra.mxu0 %v268
    %1101 = vmatpush.msra.mxu0 %v267
    %1102 = vmatmul.f32.gmra.mxu0 %v976
    %v1103 = vpop.f32.mrf.mxu0
    %v1104 = vadd.f32 %v272, %v1103
    %1105 = vdwg.mxu0
    %v1106 = vadd.f32 %v1084, %v1104
    %v1107 = vxor.u32 %v1106, 2147483648
    %v1108 = vmul.f32 %v1107, 1.442695
    %v1109 = vpow.pop %v1108
    %v1110 = vadd.f32 %v1109, 1.0
    %v1111 = vrcp.pop %v1110
    %v1112 = vmul.f32 %v1110, %v1111
    %v1113 = vsub.f32 1.0, %v1112
    %v1114 = vmul.f32 %v1111, %v1113
    %v1115 = vadd.f32 %v1111, %v1114
    %vm1116 = vweird.f32 %v1110
    %vm1117 = vweird.f32 %v1111
    %vm1118 = vmor %vm1116, %vm1117
    %v1119 = vsel %vm1118, %v1111, %v1115
    %v1120 = vand.u32 2147483647, %v1110
    %vm1121 = vcmp.eq.f32.partialorder %v1120, 8.507059e+37
    %v1122 = vand.u32 %v1110, 2147483648
    %v1123 = vor.u32 1.1754944e-38, %v1122
    %v1124 = vsel %vm1121, %v1123, %v1119
    %v1125 = vmul.f32 1.0, %v1124
    %1127 = vrot.lane.b32.xlu0 %v1104, 64
    %v1128 = vpop.permute.xlu0 %1127
    %v1130 = vmul.f32 %v1125, %v1128
    %1132 = vrot.lane.b32.xlu0 %v1130, 64
    %v1133 = vpop.permute.xlu0 %1132
    %v1135 = vadd.f32 %v1084, %v1133
    %v1136 = vtanh.pop %v1135
    %v1137 = vsub.f32 1.0, %v1125
    %1139 = vrot.lane.b32.xlu0 %v1136, 96
    %v1140 = vpop.permute.xlu0 %1139
    %v1142 = vmul.f32 %v1137, %v1140
    %v1143 = vmul.f32 %v1125, %v817
    %v1144 = vadd.f32 %v1142, %v1143
    %vm1145 = vcmp.ge.f32.partialorder %v1144, 0.0
    %v1146 = vmul.f32 %v1144, 0.01
    %v1147 = vsel %vm1145, %v1144, %v1146
    %1149 = vrot.lane.b32.xlu0 %v1147, 96
    %v1150 = vpop.permute.xlu0 %1149
    %v1151 = vsel %vm304, %v1150, 0
    %1153 = vmatpush.msra.mxu0 0.0
    %1154 = vmatpush.msra.mxu0 0.0
    %1155 = vmatpush.msra.mxu0 0.0
    %1156 = vmatpush.msra.mxu0 0.0
    %1157 = vmatpush.msra.mxu0 0.0
    %1158 = vmatpush.msra.mxu0 0.0
    %1159 = vmatpush.msra.mxu0 0.0
    %1160 = vmatpush.msra.mxu0 0.0
    %1161 = vmatpush.msra.mxu0 0.0
    %1162 = vmatpush.msra.mxu0 0.0
    %1163 = vmatpush.msra.mxu0 0.0
    %1164 = vmatpush.msra.mxu0 0.0
    %1165 = vmatpush.msra.mxu0 %v276
    %1166 = vmatpush.msra.mxu0 %v275
    %1167 = vmatpush.msra.mxu0 %v274
    %1168 = vmatpush.msra.mxu0 %v273
    %1169 = vmatmul.f32.gmra.mxu0 %v1151
    %v1170 = vpop.f32.mrf.mxu0
    %v1171 = vadd.f32 %v281, %v1170
    %1172 = vdwg.mxu0
    %1174 = vrot.lane.b32.xlu0 %v909, 96
    %v1175 = vpop.permute.xlu0 %1174
    %v1176 = vsel %vm304, %v1175, 0
    %1178 = vmatpush.msra.mxu0 0.0
    %1179 = vmatpush.msra.mxu0 0.0
    %1180 = vmatpush.msra.mxu0 0.0
    %1181 = vmatpush.msra.mxu0 0.0
    %1182 = vmatpush.msra.mxu0 0.0
    %1183 = vmatpush.msra.mxu0 0.0
    %1184 = vmatpush.msra.mxu0 0.0
    %1185 = vmatpush.msra.mxu0 0.0
    %1186 = vmatpush.msra.mxu0 0.0
    %1187 = vmatpush.msra.mxu0 0.0
    %1188 = vmatpush.msra.mxu0 0.0
    %1189 = vmatpush.msra.mxu0 0.0
    %1190 = vmatpush.msra.mxu0 %v280
    %1191 = vmatpush.msra.mxu0 %v279
    %1192 = vmatpush.msra.mxu0 %v278
    %1193 = vmatpush.msra.mxu0 %v277
    %1194 = vmatmul.f32.gmra.mxu0 %v1176
    %v1195 = vpop.f32.mrf.mxu0
    %v1196 = vadd.f32 %v282, %v1195
    %1197 = vdwg.mxu0
    %v1198 = vadd.f32 %v1171, %v1196
    %v1199 = vxor.u32 %v1198, 2147483648
    %v1200 = vmul.f32 %v1199, 1.442695
    %v1201 = vpow.pop %v1200
    %v1202 = vadd.f32 %v1201, 1.0
    %v1203 = vrcp.pop %v1202
    %v1204 = vmul.f32 %v1202, %v1203
    %v1205 = vsub.f32 1.0, %v1204
    %v1206 = vmul.f32 %v1203, %v1205
    %v1207 = vadd.f32 %v1203, %v1206
    %vm1208 = vweird.f32 %v1202
    %vm1209 = vweird.f32 %v1203
    %vm1210 = vmor %vm1208, %vm1209
    %v1211 = vsel %vm1210, %v1203, %v1207
    %v1212 = vand.u32 2147483647, %v1202
    %vm1213 = vcmp.eq.f32.partialorder %v1212, 8.507059e+37
    %v1214 = vand.u32 %v1202, 2147483648
    %v1215 = vor.u32 1.1754944e-38, %v1214
    %v1216 = vsel %vm1213, %v1215, %v1211
    %v1217 = vmul.f32 1.0, %v1216
    %1219 = vrot.lane.b32.xlu0 %v1196, 64
    %v1220 = vpop.permute.xlu0 %1219
    %v1222 = vmul.f32 %v1217, %v1220
    %1224 = vrot.lane.b32.xlu0 %v1222, 64
    %v1225 = vpop.permute.xlu0 %1224
    %v1227 = vadd.f32 %v1171, %v1225
    %v1228 = vtanh.pop %v1227
    %v1229 = vsub.f32 1.0, %v1217
    %1231 = vrot.lane.b32.xlu0 %v1228, 96
    %v1232 = vpop.permute.xlu0 %1231
    %v1234 = vmul.f32 %v1229, %v1232
    %v1235 = vmul.f32 %v1217, %v909
    %v1236 = vadd.f32 %v1234, %v1235
    %vm1237 = vcmp.ge.f32.partialorder %v1236, 0.0
    %v1238 = vmul.f32 %v1236, 0.01
    %v1239 = vsel %vm1237, %v1236, %v1238
    %1241 = vrot.lane.b32.xlu0 %v1239, 96
    %v1242 = vpop.permute.xlu0 %1241
    %1244 = vrot.lane.b32.xlu0 %v1056, 32
    %v1245 = vpop.permute.xlu0 %1244
    %v1247 = vsel %vm304, %v1242, %v1245
    %v1249 = vsel %vm591, %v1247, 0
    %1251 = vmatpush.msra.mxu0 0.0
    %1252 = vmatpush.msra.mxu0 0.0
    %1253 = vmatpush.msra.mxu0 0.0
    %1254 = vmatpush.msra.mxu0 0.0
    %1255 = vmatpush.msra.mxu0 %v294
    %1256 = vmatpush.msra.mxu0 %v293
    %1257 = vmatpush.msra.mxu0 %v292
    %1258 = vmatpush.msra.mxu0 %v291
    %1259 = vmatpush.msra.mxu0 %v290
    %1260 = vmatpush.msra.mxu0 %v289
    %1261 = vmatpush.msra.mxu0 %v288
    %1262 = vmatpush.msra.mxu0 %v287
    %1263 = vmatpush.msra.mxu0 %v286
    %1264 = vmatpush.msra.mxu0 %v285
    %1265 = vmatpush.msra.mxu0 %v284
    %1266 = vmatpush.msra.mxu0 %v283
    %1267 = vmatmul.f32.gmra.mxu0 %v1249
    %v1268 = vpop.f32.mrf.mxu0
    %v1269 = vadd.f32 %v295, %v1268
    %1270 = vdwg.mxu0
    %vm1271 = vcmp.ge.f32.partialorder %v1269, 0.0
    %v1272 = vmul.f32 %v1269, 0.01
    %v1273 = vsel %vm1271, %v1269, %v1272
    %v1274 = vsel %vm304, %v1242, 0
    %1276 = vmatpush.msra.mxu0 0.0
    %1277 = vmatpush.msra.mxu0 0.0
    %1278 = vmatpush.msra.mxu0 0.0
    %1279 = vmatpush.msra.mxu0 0.0
    %1280 = vmatpush.msra.mxu0 0.0
    %1281 = vmatpush.msra.mxu0 0.0
    %1282 = vmatpush.msra.mxu0 0.0
    %1283 = vmatpush.msra.mxu0 0.0
    %1284 = vmatpush.msra.mxu0 0.0
    %1285 = vmatpush.msra.mxu0 0.0
    %1286 = vmatpush.msra.mxu0 0.0
    %1287 = vmatpush.msra.mxu0 0.0
    %1288 = vmatpush.msra.mxu0 %v299
    %1289 = vmatpush.msra.mxu0 %v298
    %1290 = vmatpush.msra.mxu0 %v297
    %1291 = vmatpush.msra.mxu0 %v296
    %1292 = vmatmul.f32.gmra.mxu0 %v1274
    %v1293 = vpop.f32.mrf.mxu0
    %v1294 = vadd.f32 %v300, %v1293
    %1295 = vdwg.mxu0
    %1296 = vst.msk [vmem:[#allocation23 + $0x2] sm:$0x1] %vm640, %v1294
    %1297 = vst.msk [vmem:[#allocation24 + $0x2] sm:$0x1] %vm642, %v1273
    %1298 = vst.msk [vmem:[#allocation26 + $0x2] sm:$0x1] %vm357, %v1034
    %v1299 = vld [vmem:[#allocation2 + $0x3] sm:$0x1]
    %1301 = vrot.lane.b32.xlu0 %v1144, 96
    %v1302 = vpop.permute.xlu0 %1301
    %v1303 = vsel %vm304, %v1302, 0
    %1305 = vmatpush.msra.mxu0 0.0
    %1306 = vmatpush.msra.mxu0 0.0
    %1307 = vmatpush.msra.mxu0 0.0
    %1308 = vmatpush.msra.mxu0 0.0
    %1309 = vmatpush.msra.mxu0 0.0
    %1310 = vmatpush.msra.mxu0 0.0
    %1311 = vmatpush.msra.mxu0 0.0
    %1312 = vmatpush.msra.mxu0 0.0
    %1313 = vmatpush.msra.mxu0 0.0
    %1314 = vmatpush.msra.mxu0 0.0
    %1315 = vmatpush.msra.mxu0 0.0
    %1316 = vmatpush.msra.mxu0 0.0
    %1317 = vmatpush.msra.mxu0 %v255
    %1318 = vmatpush.msra.mxu0 %v254
    %1319 = vmatpush.msra.mxu0 %v253
    %1320 = vmatpush.msra.mxu0 %v252
    %1321 = vmatmul.f32.gmra.mxu0 %v1303
    %v1322 = vpop.f32.mrf.mxu0
    %v1323 = vadd.f32 0.0, %v1322
    %1324 = vdwg.mxu0
    %v1325 = vperm.slane %v1323, 0
    %v1326 = vadd.f32 %v1325, %v250
    %v1327 = vtanh.pop %v1326
    %v1329 = vsel %vm304, %v1327, 0
    %1331 = vmatpush.xpose.msra.mxu0 0.0
    %1332 = vmatpush.xpose.msra.mxu0 0.0
    %1333 = vmatpush.xpose.msra.mxu0 0.0
    %1334 = vmatpush.xpose.msra.mxu0 0.0
    %1335 = vmatpush.xpose.msra.mxu0 0.0
    %1336 = vmatpush.xpose.msra.mxu0 0.0
    %1337 = vmatpush.xpose.msra.mxu0 0.0
    %1338 = vmatpush.xpose.msra.mxu0 0.0
    %1339 = vmatpush.xpose.msra.mxu0 0.0
    %1340 = vmatpush.xpose.msra.mxu0 0.0
    %1341 = vmatpush.xpose.msra.mxu0 0.0
    %1342 = vmatpush.xpose.msra.mxu0 0.0
    %1343 = vmatpush.xpose.msra.mxu0 0.0
    %1344 = vmatpush.xpose.msra.mxu0 0.0
    %1345 = vmatpush.xpose.msra.mxu0 0.0
    %1346 = vmatpush.xpose.msra.mxu0 %v1329
    %1347 = vmatmul.f32.gmra.mxu0 %v332
    %v1348 = vpop.f32.mrf.mxu0
    %v1349 = vadd.f32 0.0, %v1348
    %1350 = vdwg.mxu0
    %v1351 = vsel %vm357, %v1349, -inf
    %1352 = vmax.xlane.f32.xlu0 %v1351
    %v1353 = vpop.xlane.xlu0 %1352
    %v1354 = vsub.f32 %v1349, %v1353
    %v1355 = vmul.f32 %v1354, 1.442695
    %v1356 = vpow.pop %v1355
    %v1357 = vsel %vm357, %v1356, 0.0
    %1358 = vadd.xlane.f32.xlu0 %v1357
    %v1359 = vpop.xlane.xlu0 %1358
    %v1360 = vrcp.pop %v1359
    %v1361 = vmul.f32 %v1356, %v1360
    %v1363 = vsel %vm369, %v1361, 0
    %1365 = vmatpush.msra.mxu0 0.0
    %1366 = vmatpush.msra.mxu0 0.0
    %1367 = vmatpush.msra.mxu0 0.0
    %1368 = vmatpush.msra.mxu0 0.0
    %1369 = vmatpush.msra.mxu0 0.0
    %1370 = vmatpush.msra.mxu0 0.0
    %1371 = vmatpush.msra.mxu0 0.0
    %1372 = vmatpush.msra.mxu0 0.0
    %1373 = vmatpush.msra.mxu0 0.0
    %1374 = vmatpush.msra.mxu0 0.0
    %1375 = vmatpush.msra.mxu0 0.0
    %1376 = vmatpush.msra.mxu0 0.0
    %1377 = vmatpush.msra.mxu0 0.0
    %1378 = vmatpush.msra.mxu0 0.0
    %1379 = vmatpush.msra.mxu0 0.0
    %1380 = vmatpush.msra.mxu0 %v251
    %1381 = vmatmul.f32.gmra.mxu0 %v1363
    %v1382 = vpop.f32.mrf.mxu0
    %v1383 = vadd.f32 0.0, %v1382
    %1384 = vdwg.mxu0
    %1386 = vrot.lane.b32.xlu0 %v1383, 16
    %v1387 = vpop.permute.xlu0 %1386
    %v1389 = vsel %vm397, %v1299, %v1387
    %v1391 = vsel %vm399, %v1389, 0
    %1393 = vmatpush.msra.mxu0 0.0
    %1394 = vmatpush.msra.mxu0 0.0
    %1395 = vmatpush.msra.mxu0 0.0
    %1396 = vmatpush.msra.mxu0 0.0
    %1397 = vmatpush.msra.mxu0 0.0
    %1398 = vmatpush.msra.mxu0 0.0
    %1399 = vmatpush.msra.mxu0 %v266
    %1400 = vmatpush.msra.mxu0 %v265
    %1401 = vmatpush.msra.mxu0 %v264
    %1402 = vmatpush.msra.mxu0 %v263
    %1403 = vmatpush.msra.mxu0 %v262
    %1404 = vmatpush.msra.mxu0 %v261
    %1405 = vmatpush.msra.mxu0 %v260
    %1406 = vmatpush.msra.mxu0 %v259
    %1407 = vmatpush.msra.mxu0 %v258
    %1408 = vmatpush.msra.mxu0 %v257
    %1409 = vmatmul.f32.gmra.mxu0 %v1391
    %v1410 = vpop.f32.mrf.mxu0
    %v1411 = vadd.f32 %v271, %v1410
    %1412 = vdwg.mxu0
    %1413 = vmatpush.msra.mxu0 0.0
    %1414 = vmatpush.msra.mxu0 0.0
    %1415 = vmatpush.msra.mxu0 0.0
    %1416 = vmatpush.msra.mxu0 0.0
    %1417 = vmatpush.msra.mxu0 0.0
    %1418 = vmatpush.msra.mxu0 0.0
    %1419 = vmatpush.msra.mxu0 0.0
    %1420 = vmatpush.msra.mxu0 0.0
    %1421 = vmatpush.msra.mxu0 0.0
    %1422 = vmatpush.msra.mxu0 0.0
    %1423 = vmatpush.msra.mxu0 0.0
    %1424 = vmatpush.msra.mxu0 0.0
    %1425 = vmatpush.msra.mxu0 %v270
    %1426 = vmatpush.msra.mxu0 %v269
    %1427 = vmatpush.msra.mxu0 %v268
    %1428 = vmatpush.msra.mxu0 %v267
    %1429 = vmatmul.f32.gmra.mxu0 %v1303
    %v1430 = vpop.f32.mrf.mxu0
    %v1431 = vadd.f32 %v272, %v1430
    %1432 = vdwg.mxu0
    %v1433 = vadd.f32 %v1411, %v1431
    %v1434 = vxor.u32 %v1433, 2147483648
    %v1435 = vmul.f32 %v1434, 1.442695
    %v1436 = vpow.pop %v1435
    %v1437 = vadd.f32 %v1436, 1.0
    %v1438 = vrcp.pop %v1437
    %v1439 = vmul.f32 %v1437, %v1438
    %v1440 = vsub.f32 1.0, %v1439
    %v1441 = vmul.f32 %v1438, %v1440
    %v1442 = vadd.f32 %v1438, %v1441
    %vm1443 = vweird.f32 %v1437
    %vm1444 = vweird.f32 %v1438
    %vm1445 = vmor %vm1443, %vm1444
    %v1446 = vsel %vm1445, %v1438, %v1442
    %v1447 = vand.u32 2147483647, %v1437
    %vm1448 = vcmp.eq.f32.partialorder %v1447, 8.507059e+37
    %v1449 = vand.u32 %v1437, 2147483648
    %v1450 = vor.u32 1.1754944e-38, %v1449
    %v1451 = vsel %vm1448, %v1450, %v1446
    %v1452 = vmul.f32 1.0, %v1451
    %1454 = vrot.lane.b32.xlu0 %v1431, 64
    %v1455 = vpop.permute.xlu0 %1454
    %v1457 = vmul.f32 %v1452, %v1455
    %1459 = vrot.lane.b32.xlu0 %v1457, 64
    %v1460 = vpop.permute.xlu0 %1459
    %v1462 = vadd.f32 %v1411, %v1460
    %v1463 = vtanh.pop %v1462
    %v1464 = vsub.f32 1.0, %v1452
    %1466 = vrot.lane.b32.xlu0 %v1463, 96
    %v1467 = vpop.permute.xlu0 %1466
    %v1469 = vmul.f32 %v1464, %v1467
    %v1470 = vmul.f32 %v1452, %v1144
    %v1471 = vadd.f32 %v1469, %v1470
    %vm1472 = vcmp.ge.f32.partialorder %v1471, 0.0
    %v1473 = vmul.f32 %v1471, 0.01
    %v1474 = vsel %vm1472, %v1471, %v1473
    %1476 = vrot.lane.b32.xlu0 %v1474, 96
    %v1477 = vpop.permute.xlu0 %1476
    %v1478 = vsel %vm304, %v1477, 0
    %1480 = vmatpush.msra.mxu0 0.0
    %1481 = vmatpush.msra.mxu0 0.0
    %1482 = vmatpush.msra.mxu0 0.0
    %1483 = vmatpush.msra.mxu0 0.0
    %1484 = vmatpush.msra.mxu0 0.0
    %1485 = vmatpush.msra.mxu0 0.0
    %1486 = vmatpush.msra.mxu0 0.0
    %1487 = vmatpush.msra.mxu0 0.0
    %1488 = vmatpush.msra.mxu0 0.0
    %1489 = vmatpush.msra.mxu0 0.0
    %1490 = vmatpush.msra.mxu0 0.0
    %1491 = vmatpush.msra.mxu0 0.0
    %1492 = vmatpush.msra.mxu0 %v276
    %1493 = vmatpush.msra.mxu0 %v275
    %1494 = vmatpush.msra.mxu0 %v274
    %1495 = vmatpush.msra.mxu0 %v273
    %1496 = vmatmul.f32.gmra.mxu0 %v1478
    %v1497 = vpop.f32.mrf.mxu0
    %v1498 = vadd.f32 %v281, %v1497
    %1499 = vdwg.mxu0
    %1501 = vrot.lane.b32.xlu0 %v1236, 96
    %v1502 = vpop.permute.xlu0 %1501
    %v1503 = vsel %vm304, %v1502, 0
    %1505 = vmatpush.msra.mxu0 0.0
    %1506 = vmatpush.msra.mxu0 0.0
    %1507 = vmatpush.msra.mxu0 0.0
    %1508 = vmatpush.msra.mxu0 0.0
    %1509 = vmatpush.msra.mxu0 0.0
    %1510 = vmatpush.msra.mxu0 0.0
    %1511 = vmatpush.msra.mxu0 0.0
    %1512 = vmatpush.msra.mxu0 0.0
    %1513 = vmatpush.msra.mxu0 0.0
    %1514 = vmatpush.msra.mxu0 0.0
    %1515 = vmatpush.msra.mxu0 0.0
    %1516 = vmatpush.msra.mxu0 0.0
    %1517 = vmatpush.msra.mxu0 %v280
    %1518 = vmatpush.msra.mxu0 %v279
    %1519 = vmatpush.msra.mxu0 %v278
    %1520 = vmatpush.msra.mxu0 %v277
    %1521 = vmatmul.f32.gmra.mxu0 %v1503
    %v1522 = vpop.f32.mrf.mxu0
    %v1523 = vadd.f32 %v282, %v1522
    %1524 = vdwg.mxu0
    %v1525 = vadd.f32 %v1498, %v1523
    %v1526 = vxor.u32 %v1525, 2147483648
    %v1527 = vmul.f32 %v1526, 1.442695
    %v1528 = vpow.pop %v1527
    %v1529 = vadd.f32 %v1528, 1.0
    %v1530 = vrcp.pop %v1529
    %v1531 = vmul.f32 %v1529, %v1530
    %v1532 = vsub.f32 1.0, %v1531
    %v1533 = vmul.f32 %v1530, %v1532
    %v1534 = vadd.f32 %v1530, %v1533
    %vm1535 = vweird.f32 %v1529
    %vm1536 = vweird.f32 %v1530
    %vm1537 = vmor %vm1535, %vm1536
    %v1538 = vsel %vm1537, %v1530, %v1534
    %v1539 = vand.u32 2147483647, %v1529
    %vm1540 = vcmp.eq.f32.partialorder %v1539, 8.507059e+37
    %v1541 = vand.u32 %v1529, 2147483648
    %v1542 = vor.u32 1.1754944e-38, %v1541
    %v1543 = vsel %vm1540, %v1542, %v1538
    %v1544 = vmul.f32 1.0, %v1543
    %1546 = vrot.lane.b32.xlu0 %v1523, 64
    %v1547 = vpop.permute.xlu0 %1546
    %v1549 = vmul.f32 %v1544, %v1547
    %1551 = vrot.lane.b32.xlu0 %v1549, 64
    %v1552 = vpop.permute.xlu0 %1551
    %v1554 = vadd.f32 %v1498, %v1552
    %v1555 = vtanh.pop %v1554
    %v1556 = vsub.f32 1.0, %v1544
    %1558 = vrot.lane.b32.xlu0 %v1555, 96
    %v1559 = vpop.permute.xlu0 %1558
    %v1561 = vmul.f32 %v1556, %v1559
    %v1562 = vmul.f32 %v1544, %v1236
    %v1563 = vadd.f32 %v1561, %v1562
    %vm1564 = vcmp.ge.f32.partialorder %v1563, 0.0
    %v1565 = vmul.f32 %v1563, 0.01
    %v1566 = vsel %vm1564, %v1563, %v1565
    %1568 = vrot.lane.b32.xlu0 %v1566, 96
    %v1569 = vpop.permute.xlu0 %1568
    %1571 = vrot.lane.b32.xlu0 %v1383, 32
    %v1572 = vpop.permute.xlu0 %1571
    %v1574 = vsel %vm304, %v1569, %v1572
    %v1576 = vsel %vm591, %v1574, 0
    %1578 = vmatpush.msra.mxu0 0.0
    %1579 = vmatpush.msra.mxu0 0.0
    %1580 = vmatpush.msra.mxu0 0.0
    %1581 = vmatpush.msra.mxu0 0.0
    %1582 = vmatpush.msra.mxu0 %v294
    %1583 = vmatpush.msra.mxu0 %v293
    %1584 = vmatpush.msra.mxu0 %v292
    %1585 = vmatpush.msra.mxu0 %v291
    %1586 = vmatpush.msra.mxu0 %v290
    %1587 = vmatpush.msra.mxu0 %v289
    %1588 = vmatpush.msra.mxu0 %v288
    %1589 = vmatpush.msra.mxu0 %v287
    %1590 = vmatpush.msra.mxu0 %v286
    %1591 = vmatpush.msra.mxu0 %v285
    %1592 = vmatpush.msra.mxu0 %v284
    %1593 = vmatpush.msra.mxu0 %v283
    %1594 = vmatmul.f32.gmra.mxu0 %v1576
    %v1595 = vpop.f32.mrf.mxu0
    %v1596 = vadd.f32 %v295, %v1595
    %1597 = vdwg.mxu0
    %vm1598 = vcmp.ge.f32.partialorder %v1596, 0.0
    %v1599 = vmul.f32 %v1596, 0.01
    %v1600 = vsel %vm1598, %v1596, %v1599
    %v1601 = vsel %vm304, %v1569, 0
    %1603 = vmatpush.msra.mxu0 0.0
    %1604 = vmatpush.msra.mxu0 0.0
    %1605 = vmatpush.msra.mxu0 0.0
    %1606 = vmatpush.msra.mxu0 0.0
    %1607 = vmatpush.msra.mxu0 0.0
    %1608 = vmatpush.msra.mxu0 0.0
    %1609 = vmatpush.msra.mxu0 0.0
    %1610 = vmatpush.msra.mxu0 0.0
    %1611 = vmatpush.msra.mxu0 0.0
    %1612 = vmatpush.msra.mxu0 0.0
    %1613 = vmatpush.msra.mxu0 0.0
    %1614 = vmatpush.msra.mxu0 0.0
    %1615 = vmatpush.msra.mxu0 %v299
    %1616 = vmatpush.msra.mxu0 %v298
    %1617 = vmatpush.msra.mxu0 %v297
    %1618 = vmatpush.msra.mxu0 %v296
    %1619 = vmatmul.f32.gmra.mxu0 %v1601
    %v1620 = vpop.f32.mrf.mxu0
    %v1621 = vadd.f32 %v300, %v1620
    %1622 = vdwg.mxu0
    %1623 = vst.msk [vmem:[#allocation23 + $0x3] sm:$0x1] %vm640, %v1621
    %1624 = vst.msk [vmem:[#allocation24 + $0x3] sm:$0x1] %vm642, %v1600
    %1625 = vst.msk [vmem:[#allocation26 + $0x3] sm:$0x1] %vm357, %v1361
    %v1626 = vld [vmem:[#allocation2 + $0x4] sm:$0x1]
    %1628 = vrot.lane.b32.xlu0 %v1471, 96
    %v1629 = vpop.permute.xlu0 %1628
    %v1630 = vsel %vm304, %v1629, 0
    %1632 = vmatpush.msra.mxu0 0.0
    %1633 = vmatpush.msra.mxu0 0.0
    %1634 = vmatpush.msra.mxu0 0.0
    %1635 = vmatpush.msra.mxu0 0.0
    %1636 = vmatpush.msra.mxu0 0.0
    %1637 = vmatpush.msra.mxu0 0.0
    %1638 = vmatpush.msra.mxu0 0.0
    %1639 = vmatpush.msra.mxu0 0.0
    %1640 = vmatpush.msra.mxu0 0.0
    %1641 = vmatpush.msra.mxu0 0.0
    %1642 = vmatpush.msra.mxu0 0.0
    %1643 = vmatpush.msra.mxu0 0.0
    %1644 = vmatpush.msra.mxu0 %v255
    %1645 = vmatpush.msra.mxu0 %v254
    %1646 = vmatpush.msra.mxu0 %v253
    %1647 = vmatpush.msra.mxu0 %v252
    %1648 = vmatmul.f32.gmra.mxu0 %v1630
    %v1649 = vpop.f32.mrf.mxu0
    %v1650 = vadd.f32 0.0, %v1649
    %1651 = vdwg.mxu0
    %v1652 = vperm.slane %v1650, 0
    %v1653 = vadd.f32 %v1652, %v250
    %v1654 = vtanh.pop %v1653
    %v1656 = vsel %vm304, %v1654, 0
    %1658 = vmatpush.xpose.msra.mxu0 0.0
    %1659 = vmatpush.xpose.msra.mxu0 0.0
    %1660 = vmatpush.xpose.msra.mxu0 0.0
    %1661 = vmatpush.xpose.msra.mxu0 0.0
    %1662 = vmatpush.xpose.msra.mxu0 0.0
    %1663 = vmatpush.xpose.msra.mxu0 0.0
    %1664 = vmatpush.xpose.msra.mxu0 0.0
    %1665 = vmatpush.xpose.msra.mxu0 0.0
    %1666 = vmatpush.xpose.msra.mxu0 0.0
    %1667 = vmatpush.xpose.msra.mxu0 0.0
    %1668 = vmatpush.xpose.msra.mxu0 0.0
    %1669 = vmatpush.xpose.msra.mxu0 0.0
    %1670 = vmatpush.xpose.msra.mxu0 0.0
    %1671 = vmatpush.xpose.msra.mxu0 0.0
    %1672 = vmatpush.xpose.msra.mxu0 0.0
    %1673 = vmatpush.xpose.msra.mxu0 %v1656
    %1674 = vmatmul.f32.gmra.mxu0 %v332
    %v1675 = vpop.f32.mrf.mxu0
    %v1676 = vadd.f32 0.0, %v1675
    %1677 = vdwg.mxu0
    %v1678 = vsel %vm357, %v1676, -inf
    %1679 = vmax.xlane.f32.xlu0 %v1678
    %v1680 = vpop.xlane.xlu0 %1679
    %v1681 = vsub.f32 %v1676, %v1680
    %v1682 = vmul.f32 %v1681, 1.442695
    %v1683 = vpow.pop %v1682
    %v1684 = vsel %vm357, %v1683, 0.0
    %1685 = vadd.xlane.f32.xlu0 %v1684
    %v1686 = vpop.xlane.xlu0 %1685
    %v1687 = vrcp.pop %v1686
    %v1688 = vmul.f32 %v1683, %v1687
    %v1690 = vsel %vm369, %v1688, 0
    %1692 = vmatpush.msra.mxu0 0.0
    %1693 = vmatpush.msra.mxu0 0.0
    %1694 = vmatpush.msra.mxu0 0.0
    %1695 = vmatpush.msra.mxu0 0.0
    %1696 = vmatpush.msra.mxu0 0.0
    %1697 = vmatpush.msra.mxu0 0.0
    %1698 = vmatpush.msra.mxu0 0.0
    %1699 = vmatpush.msra.mxu0 0.0
    %1700 = vmatpush.msra.mxu0 0.0
    %1701 = vmatpush.msra.mxu0 0.0
    %1702 = vmatpush.msra.mxu0 0.0
    %1703 = vmatpush.msra.mxu0 0.0
    %1704 = vmatpush.msra.mxu0 0.0
    %1705 = vmatpush.msra.mxu0 0.0
    %1706 = vmatpush.msra.mxu0 0.0
    %1707 = vmatpush.msra.mxu0 %v251
    %1708 = vmatmul.f32.gmra.mxu0 %v1690
    %v1709 = vpop.f32.mrf.mxu0
    %v1710 = vadd.f32 0.0, %v1709
    %1711 = vdwg.mxu0
    %1713 = vrot.lane.b32.xlu0 %v1710, 16
    %v1714 = vpop.permute.xlu0 %1713
    %v1716 = vsel %vm397, %v1626, %v1714
    %v1718 = vsel %vm399, %v1716, 0
    %1720 = vmatpush.msra.mxu0 0.0
    %1721 = vmatpush.msra.mxu0 0.0
    %1722 = vmatpush.msra.mxu0 0.0
    %1723 = vmatpush.msra.mxu0 0.0
    %1724 = vmatpush.msra.mxu0 0.0
    %1725 = vmatpush.msra.mxu0 0.0
    %1726 = vmatpush.msra.mxu0 %v266
    %1727 = vmatpush.msra.mxu0 %v265
    %1728 = vmatpush.msra.mxu0 %v264
    %1729 = vmatpush.msra.mxu0 %v263
    %1730 = vmatpush.msra.mxu0 %v262
    %1731 = vmatpush.msra.mxu0 %v261
    %1732 = vmatpush.msra.mxu0 %v260
    %1733 = vmatpush.msra.mxu0 %v259
    %1734 = vmatpush.msra.mxu0 %v258
    %1735 = vmatpush.msra.mxu0 %v257
    %1736 = vmatmul.f32.gmra.mxu0 %v1718
    %v1737 = vpop.f32.mrf.mxu0
    %v1738 = vadd.f32 %v271, %v1737
    %1739 = vdwg.mxu0
    %1740 = vmatpush.msra.mxu0 0.0
    %1741 = vmatpush.msra.mxu0 0.0
    %1742 = vmatpush.msra.mxu0 0.0
    %1743 = vmatpush.msra.mxu0 0.0
    %1744 = vmatpush.msra.mxu0 0.0
    %1745 = vmatpush.msra.mxu0 0.0
    %1746 = vmatpush.msra.mxu0 0.0
    %1747 = vmatpush.msra.mxu0 0.0
    %1748 = vmatpush.msra.mxu0 0.0
    %1749 = vmatpush.msra.mxu0 0.0
    %1750 = vmatpush.msra.mxu0 0.0
    %1751 = vmatpush.msra.mxu0 0.0
    %1752 = vmatpush.msra.mxu0 %v270
    %1753 = vmatpush.msra.mxu0 %v269
    %1754 = vmatpush.msra.mxu0 %v268
    %1755 = vmatpush.msra.mxu0 %v267
    %1756 = vmatmul.f32.gmra.mxu0 %v1630
    %v1757 = vpop.f32.mrf.mxu0
    %v1758 = vadd.f32 %v272, %v1757
    %1759 = vdwg.mxu0
    %v1760 = vadd.f32 %v1738, %v1758
    %v1761 = vxor.u32 %v1760, 2147483648
    %v1762 = vmul.f32 %v1761, 1.442695
    %v1763 = vpow.pop %v1762
    %v1764 = vadd.f32 %v1763, 1.0
    %v1765 = vrcp.pop %v1764
    %v1766 = vmul.f32 %v1764, %v1765
    %v1767 = vsub.f32 1.0, %v1766
    %v1768 = vmul.f32 %v1765, %v1767
    %v1769 = vadd.f32 %v1765, %v1768
    %vm1770 = vweird.f32 %v1764
    %vm1771 = vweird.f32 %v1765
    %vm1772 = vmor %vm1770, %vm1771
    %v1773 = vsel %vm1772, %v1765, %v1769
    %v1774 = vand.u32 2147483647, %v1764
    %vm1775 = vcmp.eq.f32.partialorder %v1774, 8.507059e+37
    %v1776 = vand.u32 %v1764, 2147483648
    %v1777 = vor.u32 1.1754944e-38, %v1776
    %v1778 = vsel %vm1775, %v1777, %v1773
    %v1779 = vmul.f32 1.0, %v1778
    %1781 = vrot.lane.b32.xlu0 %v1758, 64
    %v1782 = vpop.permute.xlu0 %1781
    %v1784 = vmul.f32 %v1779, %v1782
    %1786 = vrot.lane.b32.xlu0 %v1784, 64
    %v1787 = vpop.permute.xlu0 %1786
    %v1789 = vadd.f32 %v1738, %v1787
    %v1790 = vtanh.pop %v1789
    %v1791 = vsub.f32 1.0, %v1779
    %1793 = vrot.lane.b32.xlu0 %v1790, 96
    %v1794 = vpop.permute.xlu0 %1793
    %v1796 = vmul.f32 %v1791, %v1794
    %v1797 = vmul.f32 %v1779, %v1471
    %v1798 = vadd.f32 %v1796, %v1797
    %vm1799 = vcmp.ge.f32.partialorder %v1798, 0.0
    %v1800 = vmul.f32 %v1798, 0.01
    %v1801 = vsel %vm1799, %v1798, %v1800
    %1803 = vrot.lane.b32.xlu0 %v1801, 96
    %v1804 = vpop.permute.xlu0 %1803
    %v1805 = vsel %vm304, %v1804, 0
    %1807 = vmatpush.msra.mxu0 0.0
    %1808 = vmatpush.msra.mxu0 0.0
    %1809 = vmatpush.msra.mxu0 0.0
    %1810 = vmatpush.msra.mxu0 0.0
    %1811 = vmatpush.msra.mxu0 0.0
    %1812 = vmatpush.msra.mxu0 0.0
    %1813 = vmatpush.msra.mxu0 0.0
    %1814 = vmatpush.msra.mxu0 0.0
    %1815 = vmatpush.msra.mxu0 0.0
    %1816 = vmatpush.msra.mxu0 0.0
    %1817 = vmatpush.msra.mxu0 0.0
    %1818 = vmatpush.msra.mxu0 0.0
    %1819 = vmatpush.msra.mxu0 %v276
    %1820 = vmatpush.msra.mxu0 %v275
    %1821 = vmatpush.msra.mxu0 %v274
    %1822 = vmatpush.msra.mxu0 %v273
    %1823 = vmatmul.f32.gmra.mxu0 %v1805
    %v1824 = vpop.f32.mrf.mxu0
    %v1825 = vadd.f32 %v281, %v1824
    %1826 = vdwg.mxu0
    %1828 = vrot.lane.b32.xlu0 %v1563, 96
    %v1829 = vpop.permute.xlu0 %1828
    %v1830 = vsel %vm304, %v1829, 0
    %1832 = vmatpush.msra.mxu0 0.0
    %1833 = vmatpush.msra.mxu0 0.0
    %1834 = vmatpush.msra.mxu0 0.0
    %1835 = vmatpush.msra.mxu0 0.0
    %1836 = vmatpush.msra.mxu0 0.0
    %1837 = vmatpush.msra.mxu0 0.0
    %1838 = vmatpush.msra.mxu0 0.0
    %1839 = vmatpush.msra.mxu0 0.0
    %1840 = vmatpush.msra.mxu0 0.0
    %1841 = vmatpush.msra.mxu0 0.0
    %1842 = vmatpush.msra.mxu0 0.0
    %1843 = vmatpush.msra.mxu0 0.0
    %1844 = vmatpush.msra.mxu0 %v280
    %1845 = vmatpush.msra.mxu0 %v279
    %1846 = vmatpush.msra.mxu0 %v278
    %1847 = vmatpush.msra.mxu0 %v277
    %1848 = vmatmul.f32.gmra.mxu0 %v1830
    %v1849 = vpop.f32.mrf.mxu0
    %v1850 = vadd.f32 %v282, %v1849
    %1851 = vdwg.mxu0
    %v1852 = vadd.f32 %v1825, %v1850
    %v1853 = vxor.u32 %v1852, 2147483648
    %v1854 = vmul.f32 %v1853, 1.442695
    %v1855 = vpow.pop %v1854
    %v1856 = vadd.f32 %v1855, 1.0
    %v1857 = vrcp.pop %v1856
    %v1858 = vmul.f32 %v1856, %v1857
    %v1859 = vsub.f32 1.0, %v1858
    %v1860 = vmul.f32 %v1857, %v1859
    %v1861 = vadd.f32 %v1857, %v1860
    %vm1862 = vweird.f32 %v1856
    %vm1863 = vweird.f32 %v1857
    %vm1864 = vmor %vm1862, %vm1863
    %v1865 = vsel %vm1864, %v1857, %v1861
    %v1866 = vand.u32 2147483647, %v1856
    %vm1867 = vcmp.eq.f32.partialorder %v1866, 8.507059e+37
    %v1868 = vand.u32 %v1856, 2147483648
    %v1869 = vor.u32 1.1754944e-38, %v1868
    %v1870 = vsel %vm1867, %v1869, %v1865
    %v1871 = vmul.f32 1.0, %v1870
    %1873 = vrot.lane.b32.xlu0 %v1850, 64
    %v1874 = vpop.permute.xlu0 %1873
    %v1876 = vmul.f32 %v1871, %v1874
    %1878 = vrot.lane.b32.xlu0 %v1876, 64
    %v1879 = vpop.permute.xlu0 %1878
    %v1881 = vadd.f32 %v1825, %v1879
    %v1882 = vtanh.pop %v1881
    %v1883 = vsub.f32 1.0, %v1871
    %1885 = vrot.lane.b32.xlu0 %v1882, 96
    %v1886 = vpop.permute.xlu0 %1885
    %v1888 = vmul.f32 %v1883, %v1886
    %v1889 = vmul.f32 %v1871, %v1563
    %v1890 = vadd.f32 %v1888, %v1889
    %vm1891 = vcmp.ge.f32.partialorder %v1890, 0.0
    %v1892 = vmul.f32 %v1890, 0.01
    %v1893 = vsel %vm1891, %v1890, %v1892
    %1895 = vrot.lane.b32.xlu0 %v1893, 96
    %v1896 = vpop.permute.xlu0 %1895
    %1898 = vrot.lane.b32.xlu0 %v1710, 32
    %v1899 = vpop.permute.xlu0 %1898
    %v1901 = vsel %vm304, %v1896, %v1899
    %v1903 = vsel %vm591, %v1901, 0
    %1905 = vmatpush.msra.mxu0 0.0
    %1906 = vmatpush.msra.mxu0 0.0
    %1907 = vmatpush.msra.mxu0 0.0
    %1908 = vmatpush.msra.mxu0 0.0
    %1909 = vmatpush.msra.mxu0 %v294
    %1910 = vmatpush.msra.mxu0 %v293
    %1911 = vmatpush.msra.mxu0 %v292
    %1912 = vmatpush.msra.mxu0 %v291
    %1913 = vmatpush.msra.mxu0 %v290
    %1914 = vmatpush.msra.mxu0 %v289
    %1915 = vmatpush.msra.mxu0 %v288
    %1916 = vmatpush.msra.mxu0 %v287
    %1917 = vmatpush.msra.mxu0 %v286
    %1918 = vmatpush.msra.mxu0 %v285
    %1919 = vmatpush.msra.mxu0 %v284
    %1920 = vmatpush.msra.mxu0 %v283
    %1921 = vmatmul.f32.gmra.mxu0 %v1903
    %v1922 = vpop.f32.mrf.mxu0
    %v1923 = vadd.f32 %v295, %v1922
    %1924 = vdwg.mxu0
    %vm1925 = vcmp.ge.f32.partialorder %v1923, 0.0
    %v1926 = vmul.f32 %v1923, 0.01
    %v1927 = vsel %vm1925, %v1923, %v1926
    %v1928 = vsel %vm304, %v1896, 0
    %1930 = vmatpush.msra.mxu0 0.0
    %1931 = vmatpush.msra.mxu0 0.0
    %1932 = vmatpush.msra.mxu0 0.0
    %1933 = vmatpush.msra.mxu0 0.0
    %1934 = vmatpush.msra.mxu0 0.0
    %1935 = vmatpush.msra.mxu0 0.0
    %1936 = vmatpush.msra.mxu0 0.0
    %1937 = vmatpush.msra.mxu0 0.0
    %1938 = vmatpush.msra.mxu0 0.0
    %1939 = vmatpush.msra.mxu0 0.0
    %1940 = vmatpush.msra.mxu0 0.0
    %1941 = vmatpush.msra.mxu0 0.0
    %1942 = vmatpush.msra.mxu0 %v299
    %1943 = vmatpush.msra.mxu0 %v298
    %1944 = vmatpush.msra.mxu0 %v297
    %1945 = vmatpush.msra.mxu0 %v296
    %1946 = vmatmul.f32.gmra.mxu0 %v1928
    %v1947 = vpop.f32.mrf.mxu0
    %v1948 = vadd.f32 %v300, %v1947
    %1949 = vdwg.mxu0
    %1950 = vst.msk [vmem:[#allocation23 + $0x4] sm:$0x1] %vm640, %v1948
    %1951 = vst.msk [vmem:[#allocation24 + $0x4] sm:$0x1] %vm642, %v1927
    %1952 = vst.msk [vmem:[#allocation26 + $0x4] sm:$0x1] %vm357, %v1688
    %v1953 = vld [vmem:[#allocation2 + $0x5] sm:$0x1]
    %1955 = vrot.lane.b32.xlu0 %v1798, 96
    %v1956 = vpop.permute.xlu0 %1955
    %v1957 = vsel %vm304, %v1956, 0
    %1959 = vmatpush.msra.mxu0 0.0
    %1960 = vmatpush.msra.mxu0 0.0
    %1961 = vmatpush.msra.mxu0 0.0
    %1962 = vmatpush.msra.mxu0 0.0
    %1963 = vmatpush.msra.mxu0 0.0
    %1964 = vmatpush.msra.mxu0 0.0
    %1965 = vmatpush.msra.mxu0 0.0
    %1966 = vmatpush.msra.mxu0 0.0
    %1967 = vmatpush.msra.mxu0 0.0
    %1968 = vmatpush.msra.mxu0 0.0
    %1969 = vmatpush.msra.mxu0 0.0
    %1970 = vmatpush.msra.mxu0 0.0
    %1971 = vmatpush.msra.mxu0 %v255
    %1972 = vmatpush.msra.mxu0 %v254
    %1973 = vmatpush.msra.mxu0 %v253
    %1974 = vmatpush.msra.mxu0 %v252
    %1975 = vmatmul.f32.gmra.mxu0 %v1957
    %v1976 = vpop.f32.mrf.mxu0
    %v1977 = vadd.f32 0.0, %v1976
    %1978 = vdwg.mxu0
    %v1979 = vperm.slane %v1977, 0
    %v1980 = vadd.f32 %v1979, %v250
    %v1981 = vtanh.pop %v1980
    %v1983 = vsel %vm304, %v1981, 0
    %1985 = vmatpush.xpose.msra.mxu0 0.0
    %1986 = vmatpush.xpose.msra.mxu0 0.0
    %1987 = vmatpush.xpose.msra.mxu0 0.0
    %1988 = vmatpush.xpose.msra.mxu0 0.0
    %1989 = vmatpush.xpose.msra.mxu0 0.0
    %1990 = vmatpush.xpose.msra.mxu0 0.0
    %1991 = vmatpush.xpose.msra.mxu0 0.0
    %1992 = vmatpush.xpose.msra.mxu0 0.0
    %1993 = vmatpush.xpose.msra.mxu0 0.0
    %1994 = vmatpush.xpose.msra.mxu0 0.0
    %1995 = vmatpush.xpose.msra.mxu0 0.0
    %1996 = vmatpush.xpose.msra.mxu0 0.0
    %1997 = vmatpush.xpose.msra.mxu0 0.0
    %1998 = vmatpush.xpose.msra.mxu0 0.0
    %1999 = vmatpush.xpose.msra.mxu0 0.0
    %2000 = vmatpush.xpose.msra.mxu0 %v1983
    %2001 = vmatmul.f32.gmra.mxu0 %v332
    %v2002 = vpop.f32.mrf.mxu0
    %v2003 = vadd.f32 0.0, %v2002
    %2004 = vdwg.mxu0
    %v2005 = vsel %vm357, %v2003, -inf
    %2006 = vmax.xlane.f32.xlu0 %v2005
    %v2007 = vpop.xlane.xlu0 %2006
    %v2008 = vsub.f32 %v2003, %v2007
    %v2009 = vmul.f32 %v2008, 1.442695
    %v2010 = vpow.pop %v2009
    %v2011 = vsel %vm357, %v2010, 0.0
    %2012 = vadd.xlane.f32.xlu0 %v2011
    %v2013 = vpop.xlane.xlu0 %2012
    %v2014 = vrcp.pop %v2013
    %v2015 = vmul.f32 %v2010, %v2014
    %v2017 = vsel %vm369, %v2015, 0
    %2019 = vmatpush.msra.mxu0 0.0
    %2020 = vmatpush.msra.mxu0 0.0
    %2021 = vmatpush.msra.mxu0 0.0
    %2022 = vmatpush.msra.mxu0 0.0
    %2023 = vmatpush.msra.mxu0 0.0
    %2024 = vmatpush.msra.mxu0 0.0
    %2025 = vmatpush.msra.mxu0 0.0
    %2026 = vmatpush.msra.mxu0 0.0
    %2027 = vmatpush.msra.mxu0 0.0
    %2028 = vmatpush.msra.mxu0 0.0
    %2029 = vmatpush.msra.mxu0 0.0
    %2030 = vmatpush.msra.mxu0 0.0
    %2031 = vmatpush.msra.mxu0 0.0
    %2032 = vmatpush.msra.mxu0 0.0
    %2033 = vmatpush.msra.mxu0 0.0
    %2034 = vmatpush.msra.mxu0 %v251
    %2035 = vmatmul.f32.gmra.mxu0 %v2017
    %v2036 = vpop.f32.mrf.mxu0
    %v2037 = vadd.f32 0.0, %v2036
    %2038 = vdwg.mxu0
    %2040 = vrot.lane.b32.xlu0 %v2037, 16
    %v2041 = vpop.permute.xlu0 %2040
    %v2043 = vsel %vm397, %v1953, %v2041
    %v2045 = vsel %vm399, %v2043, 0
    %2047 = vmatpush.msra.mxu0 0.0
    %2048 = vmatpush.msra.mxu0 0.0
    %2049 = vmatpush.msra.mxu0 0.0
    %2050 = vmatpush.msra.mxu0 0.0
    %2051 = vmatpush.msra.mxu0 0.0
    %2052 = vmatpush.msra.mxu0 0.0
    %2053 = vmatpush.msra.mxu0 %v266
    %2054 = vmatpush.msra.mxu0 %v265
    %2055 = vmatpush.msra.mxu0 %v264
    %2056 = vmatpush.msra.mxu0 %v263
    %2057 = vmatpush.msra.mxu0 %v262
    %2058 = vmatpush.msra.mxu0 %v261
    %2059 = vmatpush.msra.mxu0 %v260
    %2060 = vmatpush.msra.mxu0 %v259
    %2061 = vmatpush.msra.mxu0 %v258
    %2062 = vmatpush.msra.mxu0 %v257
    %2063 = vmatmul.f32.gmra.mxu0 %v2045
    %v2064 = vpop.f32.mrf.mxu0
    %v2065 = vadd.f32 %v271, %v2064
    %2066 = vdwg.mxu0
    %2067 = vmatpush.msra.mxu0 0.0
    %2068 = vmatpush.msra.mxu0 0.0
    %2069 = vmatpush.msra.mxu0 0.0
    %2070 = vmatpush.msra.mxu0 0.0
    %2071 = vmatpush.msra.mxu0 0.0
    %2072 = vmatpush.msra.mxu0 0.0
    %2073 = vmatpush.msra.mxu0 0.0
    %2074 = vmatpush.msra.mxu0 0.0
    %2075 = vmatpush.msra.mxu0 0.0
    %2076 = vmatpush.msra.mxu0 0.0
    %2077 = vmatpush.msra.mxu0 0.0
    %2078 = vmatpush.msra.mxu0 0.0
    %2079 = vmatpush.msra.mxu0 %v270
    %2080 = vmatpush.msra.mxu0 %v269
    %2081 = vmatpush.msra.mxu0 %v268
    %2082 = vmatpush.msra.mxu0 %v267
    %2083 = vmatmul.f32.gmra.mxu0 %v1957
    %v2084 = vpop.f32.mrf.mxu0
    %v2085 = vadd.f32 %v272, %v2084
    %2086 = vdwg.mxu0
    %v2087 = vadd.f32 %v2065, %v2085
    %v2088 = vxor.u32 %v2087, 2147483648
    %v2089 = vmul.f32 %v2088, 1.442695
    %v2090 = vpow.pop %v2089
    %v2091 = vadd.f32 %v2090, 1.0
    %v2092 = vrcp.pop %v2091
    %v2093 = vmul.f32 %v2091, %v2092
    %v2094 = vsub.f32 1.0, %v2093
    %v2095 = vmul.f32 %v2092, %v2094
    %v2096 = vadd.f32 %v2092, %v2095
    %vm2097 = vweird.f32 %v2091
    %vm2098 = vweird.f32 %v2092
    %vm2099 = vmor %vm2097, %vm2098
    %v2100 = vsel %vm2099, %v2092, %v2096
    %v2101 = vand.u32 2147483647, %v2091
    %vm2102 = vcmp.eq.f32.partialorder %v2101, 8.507059e+37
    %v2103 = vand.u32 %v2091, 2147483648
    %v2104 = vor.u32 1.1754944e-38, %v2103
    %v2105 = vsel %vm2102, %v2104, %v2100
    %v2106 = vmul.f32 1.0, %v2105
    %2108 = vrot.lane.b32.xlu0 %v2085, 64
    %v2109 = vpop.permute.xlu0 %2108
    %v2111 = vmul.f32 %v2106, %v2109
    %2113 = vrot.lane.b32.xlu0 %v2111, 64
    %v2114 = vpop.permute.xlu0 %2113
    %v2116 = vadd.f32 %v2065, %v2114
    %v2117 = vtanh.pop %v2116
    %v2118 = vsub.f32 1.0, %v2106
    %2120 = vrot.lane.b32.xlu0 %v2117, 96
    %v2121 = vpop.permute.xlu0 %2120
    %v2123 = vmul.f32 %v2118, %v2121
    %v2124 = vmul.f32 %v2106, %v1798
    %v2125 = vadd.f32 %v2123, %v2124
    %vm2126 = vcmp.ge.f32.partialorder %v2125, 0.0
    %v2127 = vmul.f32 %v2125, 0.01
    %v2128 = vsel %vm2126, %v2125, %v2127
    %2130 = vrot.lane.b32.xlu0 %v2128, 96
    %v2131 = vpop.permute.xlu0 %2130
    %v2132 = vsel %vm304, %v2131, 0
    %2134 = vmatpush.msra.mxu0 0.0
    %2135 = vmatpush.msra.mxu0 0.0
    %2136 = vmatpush.msra.mxu0 0.0
    %2137 = vmatpush.msra.mxu0 0.0
    %2138 = vmatpush.msra.mxu0 0.0
    %2139 = vmatpush.msra.mxu0 0.0
    %2140 = vmatpush.msra.mxu0 0.0
    %2141 = vmatpush.msra.mxu0 0.0
    %2142 = vmatpush.msra.mxu0 0.0
    %2143 = vmatpush.msra.mxu0 0.0
    %2144 = vmatpush.msra.mxu0 0.0
    %2145 = vmatpush.msra.mxu0 0.0
    %2146 = vmatpush.msra.mxu0 %v276
    %2147 = vmatpush.msra.mxu0 %v275
    %2148 = vmatpush.msra.mxu0 %v274
    %2149 = vmatpush.msra.mxu0 %v273
    %2150 = vmatmul.f32.gmra.mxu0 %v2132
    %v2151 = vpop.f32.mrf.mxu0
    %v2152 = vadd.f32 %v281, %v2151
    %2153 = vdwg.mxu0
    %2155 = vrot.lane.b32.xlu0 %v1890, 96
    %v2156 = vpop.permute.xlu0 %2155
    %v2157 = vsel %vm304, %v2156, 0
    %2159 = vmatpush.msra.mxu0 0.0
    %2160 = vmatpush.msra.mxu0 0.0
    %2161 = vmatpush.msra.mxu0 0.0
    %2162 = vmatpush.msra.mxu0 0.0
    %2163 = vmatpush.msra.mxu0 0.0
    %2164 = vmatpush.msra.mxu0 0.0
    %2165 = vmatpush.msra.mxu0 0.0
    %2166 = vmatpush.msra.mxu0 0.0
    %2167 = vmatpush.msra.mxu0 0.0
    %2168 = vmatpush.msra.mxu0 0.0
    %2169 = vmatpush.msra.mxu0 0.0
    %2170 = vmatpush.msra.mxu0 0.0
    %2171 = vmatpush.msra.mxu0 %v280
    %2172 = vmatpush.msra.mxu0 %v279
    %2173 = vmatpush.msra.mxu0 %v278
    %2174 = vmatpush.msra.mxu0 %v277
    %2175 = vmatmul.f32.gmra.mxu0 %v2157
    %v2176 = vpop.f32.mrf.mxu0
    %v2177 = vadd.f32 %v282, %v2176
    %2178 = vdwg.mxu0
    %v2179 = vadd.f32 %v2152, %v2177
    %v2180 = vxor.u32 %v2179, 2147483648
    %v2181 = vmul.f32 %v2180, 1.442695
    %v2182 = vpow.pop %v2181
    %v2183 = vadd.f32 %v2182, 1.0
    %v2184 = vrcp.pop %v2183
    %v2185 = vmul.f32 %v2183, %v2184
    %v2186 = vsub.f32 1.0, %v2185
    %v2187 = vmul.f32 %v2184, %v2186
    %v2188 = vadd.f32 %v2184, %v2187
    %vm2189 = vweird.f32 %v2183
    %vm2190 = vweird.f32 %v2184
    %vm2191 = vmor %vm2189, %vm2190
    %v2192 = vsel %vm2191, %v2184, %v2188
    %v2193 = vand.u32 2147483647, %v2183
    %vm2194 = vcmp.eq.f32.partialorder %v2193, 8.507059e+37
    %v2195 = vand.u32 %v2183, 2147483648
    %v2196 = vor.u32 1.1754944e-38, %v2195
    %v2197 = vsel %vm2194, %v2196, %v2192
    %v2198 = vmul.f32 1.0, %v2197
    %2200 = vrot.lane.b32.xlu0 %v2177, 64
    %v2201 = vpop.permute.xlu0 %2200
    %v2203 = vmul.f32 %v2198, %v2201
    %2205 = vrot.lane.b32.xlu0 %v2203, 64
    %v2206 = vpop.permute.xlu0 %2205
    %v2208 = vadd.f32 %v2152, %v2206
    %v2209 = vtanh.pop %v2208
    %v2210 = vsub.f32 1.0, %v2198
    %2212 = vrot.lane.b32.xlu0 %v2209, 96
    %v2213 = vpop.permute.xlu0 %2212
    %v2215 = vmul.f32 %v2210, %v2213
    %v2216 = vmul.f32 %v2198, %v1890
    %v2217 = vadd.f32 %v2215, %v2216
    %vm2218 = vcmp.ge.f32.partialorder %v2217, 0.0
    %v2219 = vmul.f32 %v2217, 0.01
    %v2220 = vsel %vm2218, %v2217, %v2219
    %2222 = vrot.lane.b32.xlu0 %v2220, 96
    %v2223 = vpop.permute.xlu0 %2222
    %2225 = vrot.lane.b32.xlu0 %v2037, 32
    %v2226 = vpop.permute.xlu0 %2225
    %v2228 = vsel %vm304, %v2223, %v2226
    %v2230 = vsel %vm591, %v2228, 0
    %2232 = vmatpush.msra.mxu0 0.0
    %2233 = vmatpush.msra.mxu0 0.0
    %2234 = vmatpush.msra.mxu0 0.0
    %2235 = vmatpush.msra.mxu0 0.0
    %2236 = vmatpush.msra.mxu0 %v294
    %2237 = vmatpush.msra.mxu0 %v293
    %2238 = vmatpush.msra.mxu0 %v292
    %2239 = vmatpush.msra.mxu0 %v291
    %2240 = vmatpush.msra.mxu0 %v290
    %2241 = vmatpush.msra.mxu0 %v289
    %2242 = vmatpush.msra.mxu0 %v288
    %2243 = vmatpush.msra.mxu0 %v287
    %2244 = vmatpush.msra.mxu0 %v286
    %2245 = vmatpush.msra.mxu0 %v285
    %2246 = vmatpush.msra.mxu0 %v284
    %2247 = vmatpush.msra.mxu0 %v283
    %2248 = vmatmul.f32.gmra.mxu0 %v2230
    %v2249 = vpop.f32.mrf.mxu0
    %v2250 = vadd.f32 %v295, %v2249
    %2251 = vdwg.mxu0
    %vm2252 = vcmp.ge.f32.partialorder %v2250, 0.0
    %v2253 = vmul.f32 %v2250, 0.01
    %v2254 = vsel %vm2252, %v2250, %v2253
    %v2255 = vsel %vm304, %v2223, 0
    %2257 = vmatpush.msra.mxu0 0.0
    %2258 = vmatpush.msra.mxu0 0.0
    %2259 = vmatpush.msra.mxu0 0.0
    %2260 = vmatpush.msra.mxu0 0.0
    %2261 = vmatpush.msra.mxu0 0.0
    %2262 = vmatpush.msra.mxu0 0.0
    %2263 = vmatpush.msra.mxu0 0.0
    %2264 = vmatpush.msra.mxu0 0.0
    %2265 = vmatpush.msra.mxu0 0.0
    %2266 = vmatpush.msra.mxu0 0.0
    %2267 = vmatpush.msra.mxu0 0.0
    %2268 = vmatpush.msra.mxu0 0.0
    %2269 = vmatpush.msra.mxu0 %v299
    %2270 = vmatpush.msra.mxu0 %v298
    %2271 = vmatpush.msra.mxu0 %v297
    %2272 = vmatpush.msra.mxu0 %v296
    %2273 = vmatmul.f32.gmra.mxu0 %v2255
    %v2274 = vpop.f32.mrf.mxu0
    %v2275 = vadd.f32 %v300, %v2274
    %2276 = vdwg.mxu0
    %2277 = vst.msk [vmem:[#allocation23 + $0x5] sm:$0x1] %vm640, %v2275
    %2278 = vst.msk [vmem:[#allocation24 + $0x5] sm:$0x1] %vm642, %v2254
    %2279 = vst.msk [vmem:[#allocation26 + $0x5] sm:$0x1] %vm357, %v2015
    %v2280 = vld [vmem:[#allocation2 + $0x6] sm:$0x1]
    %2282 = vrot.lane.b32.xlu0 %v2125, 96
    %v2283 = vpop.permute.xlu0 %2282
    %v2284 = vsel %vm304, %v2283, 0
    %2286 = vmatpush.msra.mxu0 0.0
    %2287 = vmatpush.msra.mxu0 0.0
    %2288 = vmatpush.msra.mxu0 0.0
    %2289 = vmatpush.msra.mxu0 0.0
    %2290 = vmatpush.msra.mxu0 0.0
    %2291 = vmatpush.msra.mxu0 0.0
    %2292 = vmatpush.msra.mxu0 0.0
    %2293 = vmatpush.msra.mxu0 0.0
    %2294 = vmatpush.msra.mxu0 0.0
    %2295 = vmatpush.msra.mxu0 0.0
    %2296 = vmatpush.msra.mxu0 0.0
    %2297 = vmatpush.msra.mxu0 0.0
    %2298 = vmatpush.msra.mxu0 %v255
    %2299 = vmatpush.msra.mxu0 %v254
    %2300 = vmatpush.msra.mxu0 %v253
    %2301 = vmatpush.msra.mxu0 %v252
    %2302 = vmatmul.f32.gmra.mxu0 %v2284
    %v2303 = vpop.f32.mrf.mxu0
    %v2304 = vadd.f32 0.0, %v2303
    %2305 = vdwg.mxu0
    %v2306 = vperm.slane %v2304, 0
    %v2307 = vadd.f32 %v2306, %v250
    %v2308 = vtanh.pop %v2307
    %v2310 = vsel %vm304, %v2308, 0
    %2312 = vmatpush.xpose.msra.mxu0 0.0
    %2313 = vmatpush.xpose.msra.mxu0 0.0
    %2314 = vmatpush.xpose.msra.mxu0 0.0
    %2315 = vmatpush.xpose.msra.mxu0 0.0
    %2316 = vmatpush.xpose.msra.mxu0 0.0
    %2317 = vmatpush.xpose.msra.mxu0 0.0
    %2318 = vmatpush.xpose.msra.mxu0 0.0
    %2319 = vmatpush.xpose.msra.mxu0 0.0
    %2320 = vmatpush.xpose.msra.mxu0 0.0
    %2321 = vmatpush.xpose.msra.mxu0 0.0
    %2322 = vmatpush.xpose.msra.mxu0 0.0
    %2323 = vmatpush.xpose.msra.mxu0 0.0
    %2324 = vmatpush.xpose.msra.mxu0 0.0
    %2325 = vmatpush.xpose.msra.mxu0 0.0
    %2326 = vmatpush.xpose.msra.mxu0 0.0
    %2327 = vmatpush.xpose.msra.mxu0 %v2310
    %2328 = vmatmul.f32.gmra.mxu0 %v332
    %v2329 = vpop.f32.mrf.mxu0
    %v2330 = vadd.f32 0.0, %v2329
    %2331 = vdwg.mxu0
    %v2332 = vsel %vm357, %v2330, -inf
    %2333 = vmax.xlane.f32.xlu0 %v2332
    %v2334 = vpop.xlane.xlu0 %2333
    %v2335 = vsub.f32 %v2330, %v2334
    %v2336 = vmul.f32 %v2335, 1.442695
    %v2337 = vpow.pop %v2336
    %v2338 = vsel %vm357, %v2337, 0.0
    %2339 = vadd.xlane.f32.xlu0 %v2338
    %v2340 = vpop.xlane.xlu0 %2339
    %v2341 = vrcp.pop %v2340
    %v2342 = vmul.f32 %v2337, %v2341
    %v2344 = vsel %vm369, %v2342, 0
    %2346 = vmatpush.msra.mxu0 0.0
    %2347 = vmatpush.msra.mxu0 0.0
    %2348 = vmatpush.msra.mxu0 0.0
    %2349 = vmatpush.msra.mxu0 0.0
    %2350 = vmatpush.msra.mxu0 0.0
    %2351 = vmatpush.msra.mxu0 0.0
    %2352 = vmatpush.msra.mxu0 0.0
    %2353 = vmatpush.msra.mxu0 0.0
    %2354 = vmatpush.msra.mxu0 0.0
    %2355 = vmatpush.msra.mxu0 0.0
    %2356 = vmatpush.msra.mxu0 0.0
    %2357 = vmatpush.msra.mxu0 0.0
    %2358 = vmatpush.msra.mxu0 0.0
    %2359 = vmatpush.msra.mxu0 0.0
    %2360 = vmatpush.msra.mxu0 0.0
    %2361 = vmatpush.msra.mxu0 %v251
    %2362 = vmatmul.f32.gmra.mxu0 %v2344
    %v2363 = vpop.f32.mrf.mxu0
    %v2364 = vadd.f32 0.0, %v2363
    %2365 = vdwg.mxu0
    %2367 = vrot.lane.b32.xlu0 %v2364, 16
    %v2368 = vpop.permute.xlu0 %2367
    %v2370 = vsel %vm397, %v2280, %v2368
    %v2372 = vsel %vm399, %v2370, 0
    %2374 = vmatpush.msra.mxu0 0.0
    %2375 = vmatpush.msra.mxu0 0.0
    %2376 = vmatpush.msra.mxu0 0.0
    %2377 = vmatpush.msra.mxu0 0.0
    %2378 = vmatpush.msra.mxu0 0.0
    %2379 = vmatpush.msra.mxu0 0.0
    %2380 = vmatpush.msra.mxu0 %v266
    %2381 = vmatpush.msra.mxu0 %v265
    %2382 = vmatpush.msra.mxu0 %v264
    %2383 = vmatpush.msra.mxu0 %v263
    %2384 = vmatpush.msra.mxu0 %v262
    %2385 = vmatpush.msra.mxu0 %v261
    %2386 = vmatpush.msra.mxu0 %v260
    %2387 = vmatpush.msra.mxu0 %v259
    %2388 = vmatpush.msra.mxu0 %v258
    %2389 = vmatpush.msra.mxu0 %v257
    %2390 = vmatmul.f32.gmra.mxu0 %v2372
    %v2391 = vpop.f32.mrf.mxu0
    %v2392 = vadd.f32 %v271, %v2391
    %2393 = vdwg.mxu0
    %2394 = vmatpush.msra.mxu0 0.0
    %2395 = vmatpush.msra.mxu0 0.0
    %2396 = vmatpush.msra.mxu0 0.0
    %2397 = vmatpush.msra.mxu0 0.0
    %2398 = vmatpush.msra.mxu0 0.0
    %2399 = vmatpush.msra.mxu0 0.0
    %2400 = vmatpush.msra.mxu0 0.0
    %2401 = vmatpush.msra.mxu0 0.0
    %2402 = vmatpush.msra.mxu0 0.0
    %2403 = vmatpush.msra.mxu0 0.0
    %2404 = vmatpush.msra.mxu0 0.0
    %2405 = vmatpush.msra.mxu0 0.0
    %2406 = vmatpush.msra.mxu0 %v270
    %2407 = vmatpush.msra.mxu0 %v269
    %2408 = vmatpush.msra.mxu0 %v268
    %2409 = vmatpush.msra.mxu0 %v267
    %2410 = vmatmul.f32.gmra.mxu0 %v2284
    %v2411 = vpop.f32.mrf.mxu0
    %v2412 = vadd.f32 %v272, %v2411
    %2413 = vdwg.mxu0
    %v2414 = vadd.f32 %v2392, %v2412
    %v2415 = vxor.u32 %v2414, 2147483648
    %v2416 = vmul.f32 %v2415, 1.442695
    %v2417 = vpow.pop %v2416
    %v2418 = vadd.f32 %v2417, 1.0
    %v2419 = vrcp.pop %v2418
    %v2420 = vmul.f32 %v2418, %v2419
    %v2421 = vsub.f32 1.0, %v2420
    %v2422 = vmul.f32 %v2419, %v2421
    %v2423 = vadd.f32 %v2419, %v2422
    %vm2424 = vweird.f32 %v2418
    %vm2425 = vweird.f32 %v2419
    %vm2426 = vmor %vm2424, %vm2425
    %v2427 = vsel %vm2426, %v2419, %v2423
    %v2428 = vand.u32 2147483647, %v2418
    %vm2429 = vcmp.eq.f32.partialorder %v2428, 8.507059e+37
    %v2430 = vand.u32 %v2418, 2147483648
    %v2431 = vor.u32 1.1754944e-38, %v2430
    %v2432 = vsel %vm2429, %v2431, %v2427
    %v2433 = vmul.f32 1.0, %v2432
    %2435 = vrot.lane.b32.xlu0 %v2412, 64
    %v2436 = vpop.permute.xlu0 %2435
    %v2438 = vmul.f32 %v2433, %v2436
    %2440 = vrot.lane.b32.xlu0 %v2438, 64
    %v2441 = vpop.permute.xlu0 %2440
    %v2443 = vadd.f32 %v2392, %v2441
    %v2444 = vtanh.pop %v2443
    %v2445 = vsub.f32 1.0, %v2433
    %2447 = vrot.lane.b32.xlu0 %v2444, 96
    %v2448 = vpop.permute.xlu0 %2447
    %v2450 = vmul.f32 %v2445, %v2448
    %v2451 = vmul.f32 %v2433, %v2125
    %v2452 = vadd.f32 %v2450, %v2451
    %vm2453 = vcmp.ge.f32.partialorder %v2452, 0.0
    %v2454 = vmul.f32 %v2452, 0.01
    %v2455 = vsel %vm2453, %v2452, %v2454
    %2457 = vrot.lane.b32.xlu0 %v2455, 96
    %v2458 = vpop.permute.xlu0 %2457
    %v2459 = vsel %vm304, %v2458, 0
    %2461 = vmatpush.msra.mxu0 0.0
    %2462 = vmatpush.msra.mxu0 0.0
    %2463 = vmatpush.msra.mxu0 0.0
    %2464 = vmatpush.msra.mxu0 0.0
    %2465 = vmatpush.msra.mxu0 0.0
    %2466 = vmatpush.msra.mxu0 0.0
    %2467 = vmatpush.msra.mxu0 0.0
    %2468 = vmatpush.msra.mxu0 0.0
    %2469 = vmatpush.msra.mxu0 0.0
    %2470 = vmatpush.msra.mxu0 0.0
    %2471 = vmatpush.msra.mxu0 0.0
    %2472 = vmatpush.msra.mxu0 0.0
    %2473 = vmatpush.msra.mxu0 %v276
    %2474 = vmatpush.msra.mxu0 %v275
    %2475 = vmatpush.msra.mxu0 %v274
    %2476 = vmatpush.msra.mxu0 %v273
    %2477 = vmatmul.f32.gmra.mxu0 %v2459
    %v2478 = vpop.f32.mrf.mxu0
    %v2479 = vadd.f32 %v281, %v2478
    %2480 = vdwg.mxu0
    %2482 = vrot.lane.b32.xlu0 %v2217, 96
    %v2483 = vpop.permute.xlu0 %2482
    %v2484 = vsel %vm304, %v2483, 0
    %2486 = vmatpush.msra.mxu0 0.0
    %2487 = vmatpush.msra.mxu0 0.0
    %2488 = vmatpush.msra.mxu0 0.0
    %2489 = vmatpush.msra.mxu0 0.0
    %2490 = vmatpush.msra.mxu0 0.0
    %2491 = vmatpush.msra.mxu0 0.0
    %2492 = vmatpush.msra.mxu0 0.0
    %2493 = vmatpush.msra.mxu0 0.0
    %2494 = vmatpush.msra.mxu0 0.0
    %2495 = vmatpush.msra.mxu0 0.0
    %2496 = vmatpush.msra.mxu0 0.0
    %2497 = vmatpush.msra.mxu0 0.0
    %2498 = vmatpush.msra.mxu0 %v280
    %2499 = vmatpush.msra.mxu0 %v279
    %2500 = vmatpush.msra.mxu0 %v278
    %2501 = vmatpush.msra.mxu0 %v277
    %2502 = vmatmul.f32.gmra.mxu0 %v2484
    %v2503 = vpop.f32.mrf.mxu0
    %v2504 = vadd.f32 %v282, %v2503
    %2505 = vdwg.mxu0
    %v2506 = vadd.f32 %v2479, %v2504
    %v2507 = vxor.u32 %v2506, 2147483648
    %v2508 = vmul.f32 %v2507, 1.442695
    %v2509 = vpow.pop %v2508
    %v2510 = vadd.f32 %v2509, 1.0
    %v2511 = vrcp.pop %v2510
    %v2512 = vmul.f32 %v2510, %v2511
    %v2513 = vsub.f32 1.0, %v2512
    %v2514 = vmul.f32 %v2511, %v2513
    %v2515 = vadd.f32 %v2511, %v2514
    %vm2516 = vweird.f32 %v2510
    %vm2517 = vweird.f32 %v2511
    %vm2518 = vmor %vm2516, %vm2517
    %v2519 = vsel %vm2518, %v2511, %v2515
    %v2520 = vand.u32 2147483647, %v2510
    %vm2521 = vcmp.eq.f32.partialorder %v2520, 8.507059e+37
    %v2522 = vand.u32 %v2510, 2147483648
    %v2523 = vor.u32 1.1754944e-38, %v2522
    %v2524 = vsel %vm2521, %v2523, %v2519
    %v2525 = vmul.f32 1.0, %v2524
    %2527 = vrot.lane.b32.xlu0 %v2504, 64
    %v2528 = vpop.permute.xlu0 %2527
    %v2530 = vmul.f32 %v2525, %v2528
    %2532 = vrot.lane.b32.xlu0 %v2530, 64
    %v2533 = vpop.permute.xlu0 %2532
    %v2535 = vadd.f32 %v2479, %v2533
    %v2536 = vtanh.pop %v2535
    %v2537 = vsub.f32 1.0, %v2525
    %2539 = vrot.lane.b32.xlu0 %v2536, 96
    %v2540 = vpop.permute.xlu0 %2539
    %v2542 = vmul.f32 %v2537, %v2540
    %v2543 = vmul.f32 %v2525, %v2217
    %v2544 = vadd.f32 %v2542, %v2543
    %vm2545 = vcmp.ge.f32.partialorder %v2544, 0.0
    %v2546 = vmul.f32 %v2544, 0.01
    %v2547 = vsel %vm2545, %v2544, %v2546
    %2549 = vrot.lane.b32.xlu0 %v2547, 96
    %v2550 = vpop.permute.xlu0 %2549
    %2552 = vrot.lane.b32.xlu0 %v2364, 32
    %v2553 = vpop.permute.xlu0 %2552
    %v2555 = vsel %vm304, %v2550, %v2553
    %v2557 = vsel %vm591, %v2555, 0
    %2559 = vmatpush.msra.mxu0 0.0
    %2560 = vmatpush.msra.mxu0 0.0
    %2561 = vmatpush.msra.mxu0 0.0
    %2562 = vmatpush.msra.mxu0 0.0
    %2563 = vmatpush.msra.mxu0 %v294
    %2564 = vmatpush.msra.mxu0 %v293
    %2565 = vmatpush.msra.mxu0 %v292
    %2566 = vmatpush.msra.mxu0 %v291
    %2567 = vmatpush.msra.mxu0 %v290
    %2568 = vmatpush.msra.mxu0 %v289
    %2569 = vmatpush.msra.mxu0 %v288
    %2570 = vmatpush.msra.mxu0 %v287
    %2571 = vmatpush.msra.mxu0 %v286
    %2572 = vmatpush.msra.mxu0 %v285
    %2573 = vmatpush.msra.mxu0 %v284
    %2574 = vmatpush.msra.mxu0 %v283
    %2575 = vmatmul.f32.gmra.mxu0 %v2557
    %v2576 = vpop.f32.mrf.mxu0
    %v2577 = vadd.f32 %v295, %v2576
    %2578 = vdwg.mxu0
    %vm2579 = vcmp.ge.f32.partialorder %v2577, 0.0
    %v2580 = vmul.f32 %v2577, 0.01
    %v2581 = vsel %vm2579, %v2577, %v2580
    %v2582 = vsel %vm304, %v2550, 0
    %2584 = vmatpush.msra.mxu0 0.0
    %2585 = vmatpush.msra.mxu0 0.0
    %2586 = vmatpush.msra.mxu0 0.0
    %2587 = vmatpush.msra.mxu0 0.0
    %2588 = vmatpush.msra.mxu0 0.0
    %2589 = vmatpush.msra.mxu0 0.0
    %2590 = vmatpush.msra.mxu0 0.0
    %2591 = vmatpush.msra.mxu0 0.0
    %2592 = vmatpush.msra.mxu0 0.0
    %2593 = vmatpush.msra.mxu0 0.0
    %2594 = vmatpush.msra.mxu0 0.0
    %2595 = vmatpush.msra.mxu0 0.0
    %2596 = vmatpush.msra.mxu0 %v299
    %2597 = vmatpush.msra.mxu0 %v298
    %2598 = vmatpush.msra.mxu0 %v297
    %2599 = vmatpush.msra.mxu0 %v296
    %2600 = vmatmul.f32.gmra.mxu0 %v2582
    %v2601 = vpop.f32.mrf.mxu0
    %v2602 = vadd.f32 %v300, %v2601
    %2603 = vdwg.mxu0
    %2604 = vst.msk [vmem:[#allocation23 + $0x6] sm:$0x1] %vm640, %v2602
    %2605 = vst.msk [vmem:[#allocation24 + $0x6] sm:$0x1] %vm642, %v2581
    %2606 = vst.msk [vmem:[#allocation26 + $0x6] sm:$0x1] %vm357, %v2342
    %2608 = vrot.lane.b32.xlu0 %v2452, 96
    %v2609 = vpop.permute.xlu0 %2608
    %2611 = vst.msk [vmem:[#allocation27] sm:$0x1] %vm642, %v2609
    %2613 = vrot.lane.b32.xlu0 %v2544, 96
    %v2614 = vpop.permute.xlu0 %2613
    %2616 = vst.msk [vmem:[#allocation29] sm:$0x1] %vm642, %v2614
    // Predicated region
    $region130: #{tpu_custom_call.1} parent=1 // pred_check
      _
    $region131: #{tpu_custom_call.1} parent=1 // pred_check_branch
      %2618 = sbr.rel (0) target = $region133
    $region132: #{tpu_custom_call.1} parent=1 // pred_region
      %2620 = vsyncadd [#allocation4], 0
      %s2622 = sshll.u32 [#allocation23], 4
      %s2623 = int_to_ptr.vmem [resolvable:$true] %s2622
      %s2624 = sshll.u32 %s19, 4
      %s2625 = int_to_ptr.hbm [resolvable:$true] %s2624
      %2627 = dma.vmem_to_hbm [thread:$0]  %s2623, 128, %s2625, [#allocation4]
    $region133: #{tpu_custom_call.1} parent=1 // pred_fallthru
      _
    // Predicated region
    $region134: #{tpu_custom_call.1} parent=1 // pred_check
      _
    $region135: #{tpu_custom_call.1} parent=1 // pred_check_branch
      %2629 = sbr.rel (0) target = $region137
    $region136: #{tpu_custom_call.1} parent=1 // pred_region
      %2631 = vsyncadd [#allocation25], 0
      %s2633 = sshll.u32 [#allocation24], 4
      %s2634 = int_to_ptr.vmem [resolvable:$true] %s2633
      %s2635 = sshll.u32 %s20, 4
      %s2636 = int_to_ptr.hbm [resolvable:$true] %s2635
      %2638 = dma.vmem_to_hbm [thread:$0]  %s2634, 128, %s2636, [#allocation25]
    $region137: #{tpu_custom_call.1} parent=1 // pred_fallthru
      _
    // Predicated region
    $region138: #{tpu_custom_call.1} parent=1 // pred_check
      _
    $region139: #{tpu_custom_call.1} parent=1 // pred_check_branch
      %2640 = sbr.rel (0) target = $region141
    $region140: #{tpu_custom_call.1} parent=1 // pred_region
      %2642 = vsyncadd [#allocation25], 0
      %s2644 = sshll.u32 [#allocation26], 4
      %s2645 = int_to_ptr.vmem [resolvable:$true] %s2644
      %s2646 = sshll.u32 %s21, 4
      %s2647 = int_to_ptr.hbm [resolvable:$true] %s2646
      %2649 = dma.vmem_to_hbm [thread:$0]  %s2645, 128, %s2647, [#allocation25]
    $region141: #{tpu_custom_call.1} parent=1 // pred_fallthru
      _
    // Predicated region
    $region142: #{tpu_custom_call.1} parent=1 // pred_check
      _
    $region143: #{tpu_custom_call.1} parent=1 // pred_check_branch
      %2651 = sbr.rel (0) target = $region145
    $region144: #{tpu_custom_call.1} parent=1 // pred_region
      %2653 = vsyncadd [#allocation28], 0
      %s2655 = sshll.u32 [#allocation27], 4
      %s2656 = int_to_ptr.vmem [resolvable:$true] %s2655
      %s2657 = sshll.u32 %s22, 4
      %s2658 = int_to_ptr.hbm [resolvable:$true] %s2657
      %2660 = dma.vmem_to_hbm [thread:$0]  %s2656, 16, %s2658, [#allocation28]
    $region145: #{tpu_custom_call.1} parent=1 // pred_fallthru
      _
    // Predicated region
    $region146: #{tpu_custom_call.1} parent=1 // pred_check
      _
    $region147: #{tpu_custom_call.1} parent=1 // pred_check_branch
      %2662 = sbr.rel (0) target = $region149
    $region148: #{tpu_custom_call.1} parent=1 // pred_region
      %2664 = vsyncadd [#allocation28], 0
      %s2666 = sshll.u32 [#allocation29], 4
      %s2667 = int_to_ptr.vmem [resolvable:$true] %s2666
      %s2668 = sshll.u32 %s23, 4
      %s2669 = int_to_ptr.hbm [resolvable:$true] %s2668
      %2671 = dma.vmem_to_hbm [thread:$0]  %s2667, 16, %s2669, [#allocation28]
    $region149: #{tpu_custom_call.1} parent=1 // pred_fallthru
      _
    // Predicated region
    $region150: #{tpu_custom_call.1} parent=1 // pred_check
      _
    $region151: #{tpu_custom_call.1} parent=1 // pred_check_branch
      %2673 = sbr.rel (0) target = $region153
    $region152: #{tpu_custom_call.1} parent=1 // pred_region
      %2675 = dma.done [#allocation4], 128
    $region153: #{tpu_custom_call.1} parent=1 // pred_fallthru
      _
    // Predicated region
    $region154: #{tpu_custom_call.1} parent=1 // pred_check
      _
    $region155: #{tpu_custom_call.1} parent=1 // pred_check_branch
      %2677 = sbr.rel (0) target = $region157
    $region156: #{tpu_custom_call.1} parent=1 // pred_region
      %2679 = dma.done [#allocation25], 128
    $region157: #{tpu_custom_call.1} parent=1 // pred_fallthru
      _
    // Predicated region
    $region158: #{tpu_custom_call.1} parent=1 // pred_check
      _
    $region159: #{tpu_custom_call.1} parent=1 // pred_check_branch
      %2681 = sbr.rel (0) target = $region161
    $region160: #{tpu_custom_call.1} parent=1 // pred_region
      %2683 = dma.done [#allocation25], 128
    $region161: #{tpu_custom_call.1} parent=1 // pred_fallthru
      _
    // Predicated region
    $region162: #{tpu_custom_call.1} parent=1 // pred_check
      _
    $region163: #{tpu_custom_call.1} parent=1 // pred_check_branch
      %2685 = sbr.rel (0) target = $region165
    $region164: #{tpu_custom_call.1} parent=1 // pred_region
      %2687 = dma.done [#allocation28], 16
    $region165: #{tpu_custom_call.1} parent=1 // pred_fallthru
      _
    // Predicated region
    $region166: #{tpu_custom_call.1} parent=1 // pred_check
      _
    $region167: #{tpu_custom_call.1} parent=1 // pred_check_branch
      %2689 = sbr.rel (0) target = $region169
    $region168: #{tpu_custom_call.1} parent=1 // pred_region
      %2691 = dma.done [#allocation28], 16
    $region169: #{tpu_custom_call.1} parent=1 // pred_fallthru
      _
    %2692 = vsyncpa [#allocation3], 1
    %2693 = vsyncpa [#allocation6], 1
    %2694 = vsyncpa [#allocation9], 1
    %2695 = vsyncpa [#allocation12], 1
    %2696 = vsyncpa [#allocation15], 1
    %2697 = vsyncpa [#allocation18], 1
    %2698 = vsyncpa [#allocation21], 1
    %2699 = vsyncpa [#allocation4], 1
    %2700 = vsyncpa [#allocation25], 1
    %2701 = vsyncpa [#allocation28], 1

</llo_original>
